<compile_context>
chip_gen: v5e
topology: v5e:2x2
jax: 0.10.0
libtpu: 0.0.40
codegen_flags: <defaults>
</compile_context>

<pallas_src>
import jax
import jax.numpy as jnp
from jax.experimental import pallas as pl
from jax.experimental.pallas import tpu as pltpu

_LANES = 128
_SUBLANES = 8
_QUANT = _LANES * _SUBLANES  # 1024-row batch quantum


def _round_up(n: int, m: int) -> int:
    return ((n + m - 1) // m) * m


def logreg_kernel(x_ref, w1_ref, b1_ref, w2_ref, b2_ref, o_ref):
    # ---- Layer 1: MXU matmul (bf16 or f32 inputs), f32 accumulation; bias +
    # ReLU on the VPU.
    h = jnp.dot(x_ref[...], w1_ref[...], preferred_element_type=jnp.float32)
    h = jnp.maximum(h + b1_ref[...], 0.0)                     # (tile_b, H) f32

    # ---- Layer 2 (output width 1): VPU multiply + lane reduce instead of an
    # N=1 MXU matmul.  Split the batch (major) dim so the result lands directly
    # in a lane-dense (rows, 128) layout: the reshape only re-groups sublane
    # tiles (no lane movement), the reduce over H uses the XLU slot, and the
    # sigmoid + store then operate on full 128-lane vregs (unmasked vst).
    rows, lanes = o_ref.shape                                  # (tile_b//128, 128)
    h3 = h.reshape(rows, lanes, h.shape[-1])                   # (rows, 128, H)
    z = jnp.sum(h3 * w2_ref[...], axis=-1)                     # (rows, 128)
    o_ref[...] = jax.nn.sigmoid(z + b2_ref[...])               # EUP exp + recip


def logistic_regression_forward(x, w1, b1, w2_row, b2, *, tile_b=32768,
                                cast_inputs_to_bf16=True):
    """x: (B, input_size); w1: (input_size, hidden); b1: (1, hidden);
       w2_row: (1, hidden); b2: (1, 1)  ->  (B, 1) float32."""
    B, D = x.shape
    H = w1.shape[1]

    if cast_inputs_to_bf16:
        # Bandwidth optimization (halves streamed-x HBM traffic); the MXU takes
        # bf16 natively and all VPU math stays on the f32 accumulator.
        x = x.astype(jnp.bfloat16)
        w1 = w1.astype(jnp.bfloat16)
    x_bytes = jnp.dtype(x.dtype).itemsize

    # Pad the batch only up to the 1024-row quantum (NOT to a tile multiple):
    # a no-op (no HBM copy) whenever B is already 1024-aligned.
    b_pad = _round_up(B, _QUANT)
    if b_pad != B:
        x = jnp.pad(x, ((0, b_pad - B), (0, 0)))

    # ---- Tile selection -----------------------------------------------------
    # Multiple of the quantum, capped by (a) a VMEM budget that fits v7x's
    # 64 MiB VMEM with double-buffered x / out plus the f32 h temporary, and
    # (b) the padded batch.  With >= 2 quanta of batch, cap at ~half the batch
    # so both v7x TensorCores get at least one tile.
    per_row_bytes = 2 * D * x_bytes + H * 4 + 2 * 4
    vmem_budget = 48 * 2**20
    tile_cap = max(_QUANT, (vmem_budget // per_row_bytes) // _QUANT * _QUANT)
    tile_b = _round_up(max(int(tile_b), 1), _QUANT)
    tile_b = min(tile_b, tile_cap, b_pad)
    if b_pad >= 2 * _QUANT:
        tile_b = min(tile_b, max(_QUANT, (b_pad // 2) // _QUANT * _QUANT))

    grid = (pl.cdiv(b_pad, tile_b),)
    out_rows = b_pad // _LANES          # lane-dense output: (out_rows, 128)
    blk_rows = tile_b // _LANES

    # Explicit scoped-VMEM limit: double-buffered x tile + f32 h temporary +
    # double-buffered lane-dense out tile + (tiny) resident params, with 2x
    # headroom.  Keeps large tiles legal on v5e (16 MiB scoped default) without
    # exceeding v7x's 64 MiB physical VMEM.
    vmem_est = (2 * tile_b * D * x_bytes          # x (double-buffered)
                + tile_b * H * 4                  # h temporary (f32)
                + 2 * blk_rows * _LANES * 4       # out (double-buffered)
                + 4 * (D * H + 2 * H + 1) * 4)    # params
    vmem_limit = int(min(96 * 2**20, max(32 * 2**20, 2 * vmem_est)))

    out = pl.pallas_call(
        logreg_kernel,
        out_shape=jax.ShapeDtypeStruct((out_rows, _LANES), jnp.float32),
        grid=grid,
        in_specs=[
            # x: streamed batch tiles (double-buffered by the pipeline).
            pl.BlockSpec((tile_b, D), lambda i: (i, 0)),
            # Parameters: full-shape blocks + constant index map -> resident
            # in VMEM across all grid steps (no per-step re-DMA).
            pl.BlockSpec((D, H), lambda i: (0, 0)),
            pl.BlockSpec((1, H), lambda i: (0, 0)),
            pl.BlockSpec((1, H), lambda i: (0, 0)),
            pl.BlockSpec((1, 1), lambda i: (0, 0)),
        ],
        # Lane-dense output block: 128-wide unmasked stores.
        out_specs=pl.BlockSpec((blk_rows, _LANES), lambda i: (i, 0)),
        compiler_params=pltpu.CompilerParams(
            dimension_semantics=("parallel",),   # batch tiles across TCs (v7x)
            vmem_limit_bytes=vmem_limit,
        ),
    )(x, w1, b1, w2_row, b2)

    # (out_rows, 128) row-major == batch order; slice off quantum padding.
    # Any garbage from a ragged trailing block lands only in rows >= B, which
    # are discarded here (rows are fully independent in this model).
    return out.reshape(-1, 1)[:B]


def reference_forward(x, w1, b1, w2_row, b2):
    h = jnp.maximum(x @ w1 + b1, 0.0)
    return jax.nn.sigmoid(h @ w2_row.T + b2)


if __name__ == "__main__":
    input_size = 16
    hidden_size = 32

    key = jax.random.PRNGKey(0)
    kx, kw1, kb1, kw2, kb2, kx2 = jax.random.split(key, 6)

    # Deterministic parameter init (uniform like PyTorch's default Linear init scale).
    bound1 = 1.0 / (input_size ** 0.5)
    w1 = jax.random.uniform(kw1, (input_size, hidden_size), jnp.float32, -bound1, bound1)
    b1 = jax.random.uniform(kb1, (1, hidden_size), jnp.float32, -bound1, bound1)
    bound2 = 1.0 / (hidden_size ** 0.5)
    w2_row = jax.random.uniform(kw2, (1, hidden_size), jnp.float32, -bound2, bound2)
    b2 = jax.random.uniform(kb2, (1, 1), jnp.float32, -bound2, bound2)

    # --- Test 1: small batch, strict-f32 path, single grid step --------------
    batch = 8
    x = jax.random.normal(kx, (batch, input_size), dtype=jnp.float32)
    y = jax.block_until_ready(
        logistic_regression_forward(x, w1, b1, w2_row, b2,
                                    cast_inputs_to_bf16=False))
    y_ref = reference_forward(x, w1, b1, w2_row, b2)
    assert y.shape == (batch, 1)
    assert jnp.allclose(y, y_ref, atol=1e-5, rtol=1e-5)

    # --- Test 2: larger, non-aligned batch, default bf16 streaming path,
    #             multi-step grid + quantum padding -----------------------------
    batch2 = 2500
    x2 = jax.random.normal(kx2, (batch2, input_size), dtype=jnp.float32)
    y2 = jax.block_until_ready(
        logistic_regression_forward(x2, w1, b1, w2_row, b2))
    # Reference on the same bf16-rounded inputs (kernel accumulates in f32).
    x2_r = x2.astype(jnp.bfloat16).astype(jnp.float32)
    w1_r = w1.astype(jnp.bfloat16).astype(jnp.float32)
    y2_ref = reference_forward(x2_r, w1_r, b1, w2_row, b2)
    assert y2.shape == (batch2, 1)
    assert jnp.allclose(y2, y2_ref, atol=2e-3, rtol=2e-3)

    print("KERNEL_OK")
</pallas_src>

<mosaic_0001>
module attributes {stable_mosaic.version = 11 : i64} {
  func.func @logreg_kernel(%arg0: i32, %arg1: memref<1024x16xf32, #tpu.memory_space<vmem>>, %arg2: memref<16x32xf32, #tpu.memory_space<vmem>>, %arg3: memref<1x32xf32, #tpu.memory_space<vmem>>, %arg4: memref<1x32xf32, #tpu.memory_space<vmem>>, %arg5: memref<1x1xf32, #tpu.memory_space<vmem>>, %arg6: memref<8x128xf32, #tpu.memory_space<vmem>>) attributes {dimension_semantics = [#tpu.dimension_semantics<parallel>], iteration_bounds = array<i64: 1>, scalar_prefetch = 0 : i64, scratch_operands = 0 : i64, tpu.core_type = #tpu.core_type<tc>, window_params = [{transform_indices = @transform_0, window_bounds = array<i64: 1024, 16>}, {pipeline_mode = #tpu.pipeline_mode<synchronous>, transform_indices = @transform_1, window_bounds = array<i64: 16, 32>}, {pipeline_mode = #tpu.pipeline_mode<synchronous>, transform_indices = @transform_2, window_bounds = array<i64: 1, 32>}, {pipeline_mode = #tpu.pipeline_mode<synchronous>, transform_indices = @transform_3, window_bounds = array<i64: 1, 32>}, {pipeline_mode = #tpu.pipeline_mode<synchronous>, transform_indices = @transform_4, window_bounds = array<i64: 1, 1>}, {transform_indices = @transform_5, window_bounds = array<i64: 8, 128>}]} {
    %c0 = arith.constant 0 : index
    %c0_0 = arith.constant 0 : index
    %0 = vector.load %arg1[%c0, %c0_0] : memref<1024x16xf32, #tpu.memory_space<vmem>>, vector<1024x16xf32>
    %c0_1 = arith.constant 0 : index
    %c0_2 = arith.constant 0 : index
    %1 = vector.load %arg2[%c0_1, %c0_2] : memref<16x32xf32, #tpu.memory_space<vmem>>, vector<16x32xf32>
    %cst = arith.constant dense<0.000000e+00> : vector<1024x32xf32>
    %2 = tpu.matmul %0, %1, %cst {dimension_numbers = #tpu.dot_dimension_numbers<[1], [0], [0], [1], [0, 0, 1, 1], [], []>} : vector<1024x16xf32>, vector<16x32xf32>, vector<1024x32xf32> -> vector<1024x32xf32>
    %c0_3 = arith.constant 0 : index
    %c0_4 = arith.constant 0 : index
    %3 = vector.load %arg3[%c0_3, %c0_4] : memref<1x32xf32, #tpu.memory_space<vmem>>, vector<1x32xf32>
    %4 = vector.broadcast %3 : vector<1x32xf32> to vector<1024x32xf32>
    %5 = arith.addf %2, %4 : vector<1024x32xf32>
    %cst_5 = arith.constant 0.000000e+00 : f32
    %6 = vector.broadcast %cst_5 : f32 to vector<1024x32xf32>
    %7 = arith.maximumf %5, %6 : vector<1024x32xf32>
    %8 = vector.shape_cast %7 : vector<1024x32xf32> to vector<8x128x32xf32>
    %c0_6 = arith.constant 0 : index
    %c0_7 = arith.constant 0 : index
    %9 = vector.load %arg4[%c0_6, %c0_7] : memref<1x32xf32, #tpu.memory_space<vmem>>, vector<1x32xf32>
    %10 = vector.shape_cast %9 : vector<1x32xf32> to vector<1x1x32xf32>
    %11 = vector.broadcast %10 : vector<1x1x32xf32> to vector<8x128x32xf32>
    %12 = arith.mulf %8, %11 : vector<8x128x32xf32>
    %cst_8 = arith.constant dense<0.000000e+00> : vector<8x128xf32>
    %13 = vector.multi_reduction <add>, %12, %cst_8 [2] : vector<8x128x32xf32> to vector<8x128xf32>
    %c0_9 = arith.constant 0 : index
    %c0_10 = arith.constant 0 : index
    %14 = vector.load %arg5[%c0_9, %c0_10] : memref<1x1xf32, #tpu.memory_space<vmem>>, vector<1x1xf32>
    %15 = vector.broadcast %14 : vector<1x1xf32> to vector<8x128xf32>
    %16 = arith.addf %13, %15 : vector<8x128xf32>
    %17 = arith.negf %16 : vector<8x128xf32>
    %18 = math.exp %17 : vector<8x128xf32>
    %cst_11 = arith.constant 1.000000e+00 : f32
    %19 = vector.broadcast %cst_11 : f32 to vector<8x128xf32>
    %20 = arith.addf %19, %18 : vector<8x128xf32>
    %21 = arith.divf %19, %20 : vector<8x128xf32>
    %c0_12 = arith.constant 0 : index
    %c0_13 = arith.constant 0 : index
    %22 = vector.load %arg6[%c0_12, %c0_13] : memref<8x128xf32, #tpu.memory_space<vmem>>, vector<8x128xf32>
    tpu.vector_store %arg6[%c0_12, %c0_13], %21 {strides = array<i32>} : memref<8x128xf32, #tpu.memory_space<vmem>>, vector<8x128xf32>,
    return
  }
  func.func @transform_0(%arg0: i32) -> (i32, i32) {
    %c0_i32 = arith.constant 0 : i32
    %c0_i32_0 = arith.constant 0 : i32
    return %arg0, %c0_i32 : i32, i32
  }
  func.func @transform_1(%arg0: i32) -> (i32, i32) {
    %c0_i32 = arith.constant 0 : i32
    %c0_i32_0 = arith.constant 0 : i32
    %c0_i32_1 = arith.constant 0 : i32
    return %c0_i32, %c0_i32_0 : i32, i32
  }
  func.func @transform_2(%arg0: i32) -> (i32, i32) {
    %c0_i32 = arith.constant 0 : i32
    %c0_i32_0 = arith.constant 0 : i32
    %c0_i32_1 = arith.constant 0 : i32
    return %c0_i32, %c0_i32_0 : i32, i32
  }
  func.func @transform_3(%arg0: i32) -> (i32, i32) {
    %c0_i32 = arith.constant 0 : i32
    %c0_i32_0 = arith.constant 0 : i32
    %c0_i32_1 = arith.constant 0 : i32
    return %c0_i32, %c0_i32_0 : i32, i32
  }
  func.func @transform_4(%arg0: i32) -> (i32, i32) {
    %c0_i32 = arith.constant 0 : i32
    %c0_i32_0 = arith.constant 0 : i32
    %c0_i32_1 = arith.constant 0 : i32
    return %c0_i32, %c0_i32_0 : i32, i32
  }
  func.func @transform_5(%arg0: i32) -> (i32, i32) {
    %c0_i32 = arith.constant 0 : i32
    %c0_i32_0 = arith.constant 0 : i32
    return %arg0, %c0_i32 : i32, i32
  }
}

</mosaic_0001>

<llo_original>
// kernel: tpu_custom_call.1
$region0: #{tpu_custom_call.1}
  #allocation0 [shape = 'u32[]', space=smem, size = 0x4, offset = 0x4, fixed_abs, tag = 'smem constant byte address 0x4 - core index']
  #allocation1 [shape = 'u32[72,128]{1,0:T(1,128)}', space=vmem, size = 0x9000, scoped, tag = 'internal scratch']
  #allocation2 [shape = 'f32[1,1]{1,0:T(1,128)S(1)}', space=vmem, size = 0x200, scoped, tag = 'scoped memory for tpu_custom_call.1']
  %s0 = inlined_call_operand.vmem [shape: f32[1024,16], index: 0, kind: input, shape index: {}]
  %s1 = inlined_call_operand.vmem [shape: f32[16,32], index: 1, kind: input, shape index: {}]
  %s2 = inlined_call_operand.vmem [shape: f32[1,32], index: 2, kind: input, shape index: {}]
  %s3 = inlined_call_operand.vmem [shape: f32[1,32], index: 3, kind: input, shape index: {}]
  %s4 = inlined_call_operand.<no memory space> [shape: f32[1,1], index: 4, kind: input, shape index: {}]
  %s5 = inlined_call_operand.hbm [shape: f32[8,128], index: 5, kind: output, shape index: {}]
  %s6 = sld [smem:[#allocation0]]
  $region30: #{tpu_custom_call.1} parent=0
    _
  %s8 = ssub.s32 1, %s6
  %s9 = scalar_select 0, %s8, %s6
  %v10 = vstv %s4
  %11 = vst [vmem:[#allocation2] sm:$0x1] %v10
  $region1: #{tpu_custom_call.1} parent=0
    #allocation3 [shape = 'u8[4096]{0}', space=vmem, size = 0x1000, scoped, tag = 'output window, operand 0, single buffered']
    #allocation4 [shape = 's32[1]{0}', space=sflag, size = 0x4, scoped, tag = 'scoped memory for tpu_custom_call.1']
    %12 = vsyncpa [#allocation4], 0
    // Predicated region
    $region2: #{tpu_custom_call.1} parent=1 // pred_check
      _
    $region3: #{tpu_custom_call.1} parent=1 // pred_check_branch
      %14 = sbr.rel (0) target = $region5
    $region4: #{tpu_custom_call.1} parent=1 // pred_region
      _
    $region5: #{tpu_custom_call.1} parent=1 // pred_fallthru
      _
    // Predicated region
    $region6: #{tpu_custom_call.1} parent=1 // pred_check
      _
    $region7: #{tpu_custom_call.1} parent=1 // pred_check_branch
      %16 = sbr.rel (0) target = $region9
    $region8: #{tpu_custom_call.1} parent=1 // pred_region
      _
    $region9: #{tpu_custom_call.1} parent=1 // pred_fallthru
      _
    // Predicated region
    $region10: #{tpu_custom_call.1} parent=1 // pred_check
      _
    $region11: #{tpu_custom_call.1} parent=1 // pred_check_branch
      %18 = sbr.rel (0) target = $region13
    $region12: #{tpu_custom_call.1} parent=1 // pred_region
      _
    $region13: #{tpu_custom_call.1} parent=1 // pred_fallthru
      _
    // Predicated region
    $region14: #{tpu_custom_call.1} parent=1 // pred_check
      _
    $region15: #{tpu_custom_call.1} parent=1 // pred_check_branch
      %20 = sbr.rel (0) target = $region17
    $region16: #{tpu_custom_call.1} parent=1 // pred_region
      _
    $region17: #{tpu_custom_call.1} parent=1 // pred_fallthru
      _
    // Predicated region
    $region18: #{tpu_custom_call.1} parent=1 // pred_check
      _
    $region19: #{tpu_custom_call.1} parent=1 // pred_check_branch
      %22 = sbr.rel (0) target = $region21
    $region20: #{tpu_custom_call.1} parent=1 // pred_region
      _
    $region21: #{tpu_custom_call.1} parent=1 // pred_fallthru
      _
    %v23 = vld [vmem:[%s0] sm:$0xff]
    %v24 = vld [vmem:[%s0 + $0x8] sm:$0xff]
    %v25 = vld [vmem:[%s0 + $0x10] sm:$0xff]
    %v26 = vld [vmem:[%s0 + $0x18] sm:$0xff]
    %v27 = vld [vmem:[%s0 + $0x20] sm:$0xff]
    %v28 = vld [vmem:[%s0 + $0x28] sm:$0xff]
    %v29 = vld [vmem:[%s0 + $0x30] sm:$0xff]
    %v30 = vld [vmem:[%s0 + $0x38] sm:$0xff]
    %v31 = vld [vmem:[%s0 + $0x40] sm:$0xff]
    %v32 = vld [vmem:[%s0 + $0x48] sm:$0xff]
    %v33 = vld [vmem:[%s0 + $0x50] sm:$0xff]
    %v34 = vld [vmem:[%s0 + $0x58] sm:$0xff]
    %v35 = vld [vmem:[%s0 + $0x60] sm:$0xff]
    %v36 = vld [vmem:[%s0 + $0x68] sm:$0xff]
    %v37 = vld [vmem:[%s0 + $0x70] sm:$0xff]
    %v38 = vld [vmem:[%s0 + $0x78] sm:$0xff]
    %v39 = vld [vmem:[%s0 + $0x80] sm:$0xff]
    %v40 = vld [vmem:[%s0 + $0x88] sm:$0xff]
    %v41 = vld [vmem:[%s0 + $0x90] sm:$0xff]
    %v42 = vld [vmem:[%s0 + $0x98] sm:$0xff]
    %v43 = vld [vmem:[%s0 + $0xa0] sm:$0xff]
    %v44 = vld [vmem:[%s0 + $0xa8] sm:$0xff]
    %v45 = vld [vmem:[%s0 + $0xb0] sm:$0xff]
    %v46 = vld [vmem:[%s0 + $0xb8] sm:$0xff]
    %v47 = vld [vmem:[%s0 + $0xc0] sm:$0xff]
    %v48 = vld [vmem:[%s0 + $0xc8] sm:$0xff]
    %v49 = vld [vmem:[%s0 + $0xd0] sm:$0xff]
    %v50 = vld [vmem:[%s0 + $0xd8] sm:$0xff]
    %v51 = vld [vmem:[%s0 + $0xe0] sm:$0xff]
    %v52 = vld [vmem:[%s0 + $0xe8] sm:$0xff]
    %v53 = vld [vmem:[%s0 + $0xf0] sm:$0xff]
    %v54 = vld [vmem:[%s0 + $0xf8] sm:$0xff]
    %v55 = vld [vmem:[%s0 + $0x100] sm:$0xff]
    %v56 = vld [vmem:[%s0 + $0x108] sm:$0xff]
    %v57 = vld [vmem:[%s0 + $0x110] sm:$0xff]
    %v58 = vld [vmem:[%s0 + $0x118] sm:$0xff]
    %v59 = vld [vmem:[%s0 + $0x120] sm:$0xff]
    %v60 = vld [vmem:[%s0 + $0x128] sm:$0xff]
    %v61 = vld [vmem:[%s0 + $0x130] sm:$0xff]
    %v62 = vld [vmem:[%s0 + $0x138] sm:$0xff]
    %v63 = vld [vmem:[%s0 + $0x140] sm:$0xff]
    %v64 = vld [vmem:[%s0 + $0x148] sm:$0xff]
    %v65 = vld [vmem:[%s0 + $0x150] sm:$0xff]
    %v66 = vld [vmem:[%s0 + $0x158] sm:$0xff]
    %v67 = vld [vmem:[%s0 + $0x160] sm:$0xff]
    %v68 = vld [vmem:[%s0 + $0x168] sm:$0xff]
    %v69 = vld [vmem:[%s0 + $0x170] sm:$0xff]
    %v70 = vld [vmem:[%s0 + $0x178] sm:$0xff]
    %v71 = vld [vmem:[%s0 + $0x180] sm:$0xff]
    %v72 = vld [vmem:[%s0 + $0x188] sm:$0xff]
    %v73 = vld [vmem:[%s0 + $0x190] sm:$0xff]
    %v74 = vld [vmem:[%s0 + $0x198] sm:$0xff]
    %v75 = vld [vmem:[%s0 + $0x1a0] sm:$0xff]
    %v76 = vld [vmem:[%s0 + $0x1a8] sm:$0xff]
    %v77 = vld [vmem:[%s0 + $0x1b0] sm:$0xff]
    %v78 = vld [vmem:[%s0 + $0x1b8] sm:$0xff]
    %v79 = vld [vmem:[%s0 + $0x1c0] sm:$0xff]
    %v80 = vld [vmem:[%s0 + $0x1c8] sm:$0xff]
    %v81 = vld [vmem:[%s0 + $0x1d0] sm:$0xff]
    %v82 = vld [vmem:[%s0 + $0x1d8] sm:$0xff]
    %v83 = vld [vmem:[%s0 + $0x1e0] sm:$0xff]
    %v84 = vld [vmem:[%s0 + $0x1e8] sm:$0xff]
    %v85 = vld [vmem:[%s0 + $0x1f0] sm:$0xff]
    %v86 = vld [vmem:[%s0 + $0x1f8] sm:$0xff]
    %v87 = vld [vmem:[%s0 + $0x200] sm:$0xff]
    %v88 = vld [vmem:[%s0 + $0x208] sm:$0xff]
    %v89 = vld [vmem:[%s0 + $0x210] sm:$0xff]
    %v90 = vld [vmem:[%s0 + $0x218] sm:$0xff]
    %v91 = vld [vmem:[%s0 + $0x220] sm:$0xff]
    %v92 = vld [vmem:[%s0 + $0x228] sm:$0xff]
    %v93 = vld [vmem:[%s0 + $0x230] sm:$0xff]
    %v94 = vld [vmem:[%s0 + $0x238] sm:$0xff]
    %v95 = vld [vmem:[%s0 + $0x240] sm:$0xff]
    %v96 = vld [vmem:[%s0 + $0x248] sm:$0xff]
    %v97 = vld [vmem:[%s0 + $0x250] sm:$0xff]
    %v98 = vld [vmem:[%s0 + $0x258] sm:$0xff]
    %v99 = vld [vmem:[%s0 + $0x260] sm:$0xff]
    %v100 = vld [vmem:[%s0 + $0x268] sm:$0xff]
    %v101 = vld [vmem:[%s0 + $0x270] sm:$0xff]
    %v102 = vld [vmem:[%s0 + $0x278] sm:$0xff]
    %v103 = vld [vmem:[%s0 + $0x280] sm:$0xff]
    %v104 = vld [vmem:[%s0 + $0x288] sm:$0xff]
    %v105 = vld [vmem:[%s0 + $0x290] sm:$0xff]
    %v106 = vld [vmem:[%s0 + $0x298] sm:$0xff]
    %v107 = vld [vmem:[%s0 + $0x2a0] sm:$0xff]
    %v108 = vld [vmem:[%s0 + $0x2a8] sm:$0xff]
    %v109 = vld [vmem:[%s0 + $0x2b0] sm:$0xff]
    %v110 = vld [vmem:[%s0 + $0x2b8] sm:$0xff]
    %v111 = vld [vmem:[%s0 + $0x2c0] sm:$0xff]
    %v112 = vld [vmem:[%s0 + $0x2c8] sm:$0xff]
    %v113 = vld [vmem:[%s0 + $0x2d0] sm:$0xff]
    %v114 = vld [vmem:[%s0 + $0x2d8] sm:$0xff]
    %v115 = vld [vmem:[%s0 + $0x2e0] sm:$0xff]
    %v116 = vld [vmem:[%s0 + $0x2e8] sm:$0xff]
    %v117 = vld [vmem:[%s0 + $0x2f0] sm:$0xff]
    %v118 = vld [vmem:[%s0 + $0x2f8] sm:$0xff]
    %v119 = vld [vmem:[%s0 + $0x300] sm:$0xff]
    %v120 = vld [vmem:[%s0 + $0x308] sm:$0xff]
    %v121 = vld [vmem:[%s0 + $0x310] sm:$0xff]
    %v122 = vld [vmem:[%s0 + $0x318] sm:$0xff]
    %v123 = vld [vmem:[%s0 + $0x320] sm:$0xff]
    %v124 = vld [vmem:[%s0 + $0x328] sm:$0xff]
    %v125 = vld [vmem:[%s0 + $0x330] sm:$0xff]
    %v126 = vld [vmem:[%s0 + $0x338] sm:$0xff]
    %v127 = vld [vmem:[%s0 + $0x340] sm:$0xff]
    %v128 = vld [vmem:[%s0 + $0x348] sm:$0xff]
    %v129 = vld [vmem:[%s0 + $0x350] sm:$0xff]
    %v130 = vld [vmem:[%s0 + $0x358] sm:$0xff]
    %v131 = vld [vmem:[%s0 + $0x360] sm:$0xff]
    %v132 = vld [vmem:[%s0 + $0x368] sm:$0xff]
    %v133 = vld [vmem:[%s0 + $0x370] sm:$0xff]
    %v134 = vld [vmem:[%s0 + $0x378] sm:$0xff]
    %v135 = vld [vmem:[%s0 + $0x380] sm:$0xff]
    %v136 = vld [vmem:[%s0 + $0x388] sm:$0xff]
    %v137 = vld [vmem:[%s0 + $0x390] sm:$0xff]
    %v138 = vld [vmem:[%s0 + $0x398] sm:$0xff]
    %v139 = vld [vmem:[%s0 + $0x3a0] sm:$0xff]
    %v140 = vld [vmem:[%s0 + $0x3a8] sm:$0xff]
    %v141 = vld [vmem:[%s0 + $0x3b0] sm:$0xff]
    %v142 = vld [vmem:[%s0 + $0x3b8] sm:$0xff]
    %v143 = vld [vmem:[%s0 + $0x3c0] sm:$0xff]
    %v144 = vld [vmem:[%s0 + $0x3c8] sm:$0xff]
    %v145 = vld [vmem:[%s0 + $0x3d0] sm:$0xff]
    %v146 = vld [vmem:[%s0 + $0x3d8] sm:$0xff]
    %v147 = vld [vmem:[%s0 + $0x3e0] sm:$0xff]
    %v148 = vld [vmem:[%s0 + $0x3e8] sm:$0xff]
    %v149 = vld [vmem:[%s0 + $0x3f0] sm:$0xff]
    %v150 = vld [vmem:[%s0 + $0x3f8] sm:$0xff]
    %v151 = vld [vmem:[%s1] sm:$0xff]
    %v152 = vld [vmem:[%s1 + $0x8] sm:$0xff]
    %v153 = vld [vmem:[%s2] sm:$0x1]
    %v155 = vperm.slane %v153, 0
    %vm157 = vcmask 130048
    %v159 = vsel %vm157, %v23, 0
    %v162 = vsel %vm157, %v24, 0
    %v165 = vsel %vm157, %v25, 0
    %v168 = vsel %vm157, %v26, 0
    %v171 = vsel %vm157, %v27, 0
    %v174 = vsel %vm157, %v28, 0
    %v177 = vsel %vm157, %v29, 0
    %v180 = vsel %vm157, %v30, 0
    %v183 = vsel %vm157, %v31, 0
    %v186 = vsel %vm157, %v32, 0
    %v189 = vsel %vm157, %v33, 0
    %v192 = vsel %vm157, %v34, 0
    %v195 = vsel %vm157, %v35, 0
    %v198 = vsel %vm157, %v36, 0
    %v201 = vsel %vm157, %v37, 0
    %v204 = vsel %vm157, %v38, 0
    %v207 = vsel %vm157, %v39, 0
    %v210 = vsel %vm157, %v40, 0
    %v213 = vsel %vm157, %v41, 0
    %v216 = vsel %vm157, %v42, 0
    %v219 = vsel %vm157, %v43, 0
    %v222 = vsel %vm157, %v44, 0
    %v225 = vsel %vm157, %v45, 0
    %v228 = vsel %vm157, %v46, 0
    %v231 = vsel %vm157, %v47, 0
    %v234 = vsel %vm157, %v48, 0
    %v237 = vsel %vm157, %v49, 0
    %v240 = vsel %vm157, %v50, 0
    %v243 = vsel %vm157, %v51, 0
    %v246 = vsel %vm157, %v52, 0
    %v249 = vsel %vm157, %v53, 0
    %v252 = vsel %vm157, %v54, 0
    %v255 = vsel %vm157, %v55, 0
    %v258 = vsel %vm157, %v56, 0
    %v261 = vsel %vm157, %v57, 0
    %v264 = vsel %vm157, %v58, 0
    %v267 = vsel %vm157, %v59, 0
    %v270 = vsel %vm157, %v60, 0
    %v273 = vsel %vm157, %v61, 0
    %v276 = vsel %vm157, %v62, 0
    %v279 = vsel %vm157, %v63, 0
    %v282 = vsel %vm157, %v64, 0
    %v285 = vsel %vm157, %v65, 0
    %v288 = vsel %vm157, %v66, 0
    %v291 = vsel %vm157, %v67, 0
    %v294 = vsel %vm157, %v68, 0
    %v297 = vsel %vm157, %v69, 0
    %v300 = vsel %vm157, %v70, 0
    %v303 = vsel %vm157, %v71, 0
    %v306 = vsel %vm157, %v72, 0
    %v309 = vsel %vm157, %v73, 0
    %v312 = vsel %vm157, %v74, 0
    %v315 = vsel %vm157, %v75, 0
    %v318 = vsel %vm157, %v76, 0
    %v321 = vsel %vm157, %v77, 0
    %v324 = vsel %vm157, %v78, 0
    %v327 = vsel %vm157, %v79, 0
    %v330 = vsel %vm157, %v80, 0
    %v333 = vsel %vm157, %v81, 0
    %v336 = vsel %vm157, %v82, 0
    %v339 = vsel %vm157, %v83, 0
    %v342 = vsel %vm157, %v84, 0
    %v345 = vsel %vm157, %v85, 0
    %v348 = vsel %vm157, %v86, 0
    %v351 = vsel %vm157, %v87, 0
    %v354 = vsel %vm157, %v88, 0
    %v357 = vsel %vm157, %v89, 0
    %v360 = vsel %vm157, %v90, 0
    %v363 = vsel %vm157, %v91, 0
    %v366 = vsel %vm157, %v92, 0
    %v369 = vsel %vm157, %v93, 0
    %v372 = vsel %vm157, %v94, 0
    %v375 = vsel %vm157, %v95, 0
    %v378 = vsel %vm157, %v96, 0
    %v381 = vsel %vm157, %v97, 0
    %v384 = vsel %vm157, %v98, 0
    %v387 = vsel %vm157, %v99, 0
    %v390 = vsel %vm157, %v100, 0
    %v393 = vsel %vm157, %v101, 0
    %v396 = vsel %vm157, %v102, 0
    %v399 = vsel %vm157, %v103, 0
    %v402 = vsel %vm157, %v104, 0
    %v405 = vsel %vm157, %v105, 0
    %v408 = vsel %vm157, %v106, 0
    %v411 = vsel %vm157, %v107, 0
    %v414 = vsel %vm157, %v108, 0
    %v417 = vsel %vm157, %v109, 0
    %v420 = vsel %vm157, %v110, 0
    %v423 = vsel %vm157, %v111, 0
    %v426 = vsel %vm157, %v112, 0
    %v429 = vsel %vm157, %v113, 0
    %v432 = vsel %vm157, %v114, 0
    %v435 = vsel %vm157, %v115, 0
    %v438 = vsel %vm157, %v116, 0
    %v441 = vsel %vm157, %v117, 0
    %v444 = vsel %vm157, %v118, 0
    %v447 = vsel %vm157, %v119, 0
    %v450 = vsel %vm157, %v120, 0
    %v453 = vsel %vm157, %v121, 0
    %v456 = vsel %vm157, %v122, 0
    %v459 = vsel %vm157, %v123, 0
    %v462 = vsel %vm157, %v124, 0
    %v465 = vsel %vm157, %v125, 0
    %v468 = vsel %vm157, %v126, 0
    %v471 = vsel %vm157, %v127, 0
    %v474 = vsel %vm157, %v128, 0
    %v477 = vsel %vm157, %v129, 0
    %v480 = vsel %vm157, %v130, 0
    %v483 = vsel %vm157, %v131, 0
    %v486 = vsel %vm157, %v132, 0
    %v489 = vsel %vm157, %v133, 0
    %v492 = vsel %vm157, %v134, 0
    %v495 = vsel %vm157, %v135, 0
    %v498 = vsel %vm157, %v136, 0
    %v501 = vsel %vm157, %v137, 0
    %v504 = vsel %vm157, %v138, 0
    %v507 = vsel %vm157, %v139, 0
    %v510 = vsel %vm157, %v140, 0
    %v513 = vsel %vm157, %v141, 0
    %v516 = vsel %vm157, %v142, 0
    %v519 = vsel %vm157, %v143, 0
    %v522 = vsel %vm157, %v144, 0
    %v525 = vsel %vm157, %v145, 0
    %v528 = vsel %vm157, %v146, 0
    %v531 = vsel %vm157, %v147, 0
    %v534 = vsel %vm157, %v148, 0
    %v537 = vsel %vm157, %v149, 0
    %v540 = vsel %vm157, %v150, 0
    %542 = vmatpush.msra.mxu0 0.0
    %543 = vmatpush.msra.mxu0 0.0
    %544 = vmatpush.msra.mxu0 0.0
    %545 = vmatpush.msra.mxu0 0.0
    %546 = vmatpush.msra.mxu0 0.0
    %547 = vmatpush.msra.mxu0 0.0
    %548 = vmatpush.msra.mxu0 0.0
    %549 = vmatpush.msra.mxu0 0.0
    %550 = vmatpush.msra.mxu0 0.0
    %551 = vmatpush.msra.mxu0 0.0
    %552 = vmatpush.msra.mxu0 0.0
    %553 = vmatpush.msra.mxu0 0.0
    %554 = vmatpush.msra.mxu0 0.0
    %555 = vmatpush.msra.mxu0 0.0
    %556 = vmatpush.msra.mxu0 %v152
    %557 = vmatpush.msra.mxu0 %v151
    %558 = vmatmul.f32.gmra.mxu0 %v159
    %v559 = vpop.f32.mrf.mxu0
    %v560 = vadd.f32 %v155, %v559
    %561 = vmatmul.f32.gmra.mxu0 %v162
    %v562 = vpop.f32.mrf.mxu0
    %v563 = vadd.f32 %v155, %v562
    %564 = vmatmul.f32.gmra.mxu0 %v165
    %v565 = vpop.f32.mrf.mxu0
    %v566 = vadd.f32 %v155, %v565
    %567 = vmatmul.f32.gmra.mxu0 %v168
    %v568 = vpop.f32.mrf.mxu0
    %v569 = vadd.f32 %v155, %v568
    %570 = vmatmul.f32.gmra.mxu0 %v171
    %v571 = vpop.f32.mrf.mxu0
    %v572 = vadd.f32 %v155, %v571
    %573 = vmatmul.f32.gmra.mxu0 %v174
    %v574 = vpop.f32.mrf.mxu0
    %v575 = vadd.f32 %v155, %v574
    %576 = vmatmul.f32.gmra.mxu0 %v177
    %v577 = vpop.f32.mrf.mxu0
    %v578 = vadd.f32 %v155, %v577
    %579 = vmatmul.f32.gmra.mxu0 %v180
    %v580 = vpop.f32.mrf.mxu0
    %v581 = vadd.f32 %v155, %v580
    %582 = vmatmul.f32.gmra.mxu0 %v183
    %v583 = vpop.f32.mrf.mxu0
    %v584 = vadd.f32 %v155, %v583
    %585 = vmatmul.f32.gmra.mxu0 %v186
    %v586 = vpop.f32.mrf.mxu0
    %v587 = vadd.f32 %v155, %v586
    %588 = vmatmul.f32.gmra.mxu0 %v189
    %v589 = vpop.f32.mrf.mxu0
    %v590 = vadd.f32 %v155, %v589
    %591 = vmatmul.f32.gmra.mxu0 %v192
    %v592 = vpop.f32.mrf.mxu0
    %v593 = vadd.f32 %v155, %v592
    %594 = vmatmul.f32.gmra.mxu0 %v195
    %v595 = vpop.f32.mrf.mxu0
    %v596 = vadd.f32 %v155, %v595
    %597 = vmatmul.f32.gmra.mxu0 %v198
    %v598 = vpop.f32.mrf.mxu0
    %v599 = vadd.f32 %v155, %v598
    %600 = vmatmul.f32.gmra.mxu0 %v201
    %v601 = vpop.f32.mrf.mxu0
    %v602 = vadd.f32 %v155, %v601
    %603 = vmatmul.f32.gmra.mxu0 %v204
    %v604 = vpop.f32.mrf.mxu0
    %v605 = vadd.f32 %v155, %v604
    %606 = vmatmul.f32.gmra.mxu0 %v207
    %v607 = vpop.f32.mrf.mxu0
    %v608 = vadd.f32 %v155, %v607
    %609 = vmatmul.f32.gmra.mxu0 %v210
    %v610 = vpop.f32.mrf.mxu0
    %v611 = vadd.f32 %v155, %v610
    %612 = vmatmul.f32.gmra.mxu0 %v213
    %v613 = vpop.f32.mrf.mxu0
    %v614 = vadd.f32 %v155, %v613
    %615 = vmatmul.f32.gmra.mxu0 %v216
    %v616 = vpop.f32.mrf.mxu0
    %v617 = vadd.f32 %v155, %v616
    %618 = vmatmul.f32.gmra.mxu0 %v219
    %v619 = vpop.f32.mrf.mxu0
    %v620 = vadd.f32 %v155, %v619
    %621 = vmatmul.f32.gmra.mxu0 %v222
    %v622 = vpop.f32.mrf.mxu0
    %v623 = vadd.f32 %v155, %v622
    %624 = vmatmul.f32.gmra.mxu0 %v225
    %v625 = vpop.f32.mrf.mxu0
    %v626 = vadd.f32 %v155, %v625
    %627 = vmatmul.f32.gmra.mxu0 %v228
    %v628 = vpop.f32.mrf.mxu0
    %v629 = vadd.f32 %v155, %v628
    %630 = vmatmul.f32.gmra.mxu0 %v231
    %v631 = vpop.f32.mrf.mxu0
    %v632 = vadd.f32 %v155, %v631
    %633 = vmatmul.f32.gmra.mxu0 %v234
    %v634 = vpop.f32.mrf.mxu0
    %v635 = vadd.f32 %v155, %v634
    %636 = vmatmul.f32.gmra.mxu0 %v237
    %v637 = vpop.f32.mrf.mxu0
    %v638 = vadd.f32 %v155, %v637
    %639 = vmatmul.f32.gmra.mxu0 %v240
    %v640 = vpop.f32.mrf.mxu0
    %v641 = vadd.f32 %v155, %v640
    %642 = vmatmul.f32.gmra.mxu0 %v243
    %v643 = vpop.f32.mrf.mxu0
    %v644 = vadd.f32 %v155, %v643
    %645 = vmatmul.f32.gmra.mxu0 %v246
    %v646 = vpop.f32.mrf.mxu0
    %v647 = vadd.f32 %v155, %v646
    %648 = vmatmul.f32.gmra.mxu0 %v249
    %v649 = vpop.f32.mrf.mxu0
    %v650 = vadd.f32 %v155, %v649
    %651 = vmatmul.f32.gmra.mxu0 %v252
    %v652 = vpop.f32.mrf.mxu0
    %v653 = vadd.f32 %v155, %v652
    %654 = vmatmul.f32.gmra.mxu0 %v255
    %v655 = vpop.f32.mrf.mxu0
    %v656 = vadd.f32 %v155, %v655
    %657 = vmatmul.f32.gmra.mxu0 %v258
    %v658 = vpop.f32.mrf.mxu0
    %v659 = vadd.f32 %v155, %v658
    %660 = vmatmul.f32.gmra.mxu0 %v261
    %v661 = vpop.f32.mrf.mxu0
    %v662 = vadd.f32 %v155, %v661
    %663 = vmatmul.f32.gmra.mxu0 %v264
    %v664 = vpop.f32.mrf.mxu0
    %v665 = vadd.f32 %v155, %v664
    %666 = vmatmul.f32.gmra.mxu0 %v267
    %v667 = vpop.f32.mrf.mxu0
    %v668 = vadd.f32 %v155, %v667
    %669 = vmatmul.f32.gmra.mxu0 %v270
    %v670 = vpop.f32.mrf.mxu0
    %v671 = vadd.f32 %v155, %v670
    %672 = vmatmul.f32.gmra.mxu0 %v273
    %v673 = vpop.f32.mrf.mxu0
    %v674 = vadd.f32 %v155, %v673
    %675 = vmatmul.f32.gmra.mxu0 %v276
    %v676 = vpop.f32.mrf.mxu0
    %v677 = vadd.f32 %v155, %v676
    %678 = vmatmul.f32.gmra.mxu0 %v279
    %v679 = vpop.f32.mrf.mxu0
    %v680 = vadd.f32 %v155, %v679
    %681 = vmatmul.f32.gmra.mxu0 %v282
    %v682 = vpop.f32.mrf.mxu0
    %v683 = vadd.f32 %v155, %v682
    %684 = vmatmul.f32.gmra.mxu0 %v285
    %v685 = vpop.f32.mrf.mxu0
    %v686 = vadd.f32 %v155, %v685
    %687 = vmatmul.f32.gmra.mxu0 %v288
    %v688 = vpop.f32.mrf.mxu0
    %v689 = vadd.f32 %v155, %v688
    %690 = vmatmul.f32.gmra.mxu0 %v291
    %v691 = vpop.f32.mrf.mxu0
    %v692 = vadd.f32 %v155, %v691
    %693 = vmatmul.f32.gmra.mxu0 %v294
    %v694 = vpop.f32.mrf.mxu0
    %v695 = vadd.f32 %v155, %v694
    %696 = vmatmul.f32.gmra.mxu0 %v297
    %v697 = vpop.f32.mrf.mxu0
    %v698 = vadd.f32 %v155, %v697
    %699 = vmatmul.f32.gmra.mxu0 %v300
    %v700 = vpop.f32.mrf.mxu0
    %v701 = vadd.f32 %v155, %v700
    %702 = vmatmul.f32.gmra.mxu0 %v303
    %v703 = vpop.f32.mrf.mxu0
    %v704 = vadd.f32 %v155, %v703
    %705 = vmatmul.f32.gmra.mxu0 %v306
    %v706 = vpop.f32.mrf.mxu0
    %v707 = vadd.f32 %v155, %v706
    %708 = vmatmul.f32.gmra.mxu0 %v309
    %v709 = vpop.f32.mrf.mxu0
    %v710 = vadd.f32 %v155, %v709
    %711 = vmatmul.f32.gmra.mxu0 %v312
    %v712 = vpop.f32.mrf.mxu0
    %v713 = vadd.f32 %v155, %v712
    %714 = vmatmul.f32.gmra.mxu0 %v315
    %v715 = vpop.f32.mrf.mxu0
    %v716 = vadd.f32 %v155, %v715
    %717 = vmatmul.f32.gmra.mxu0 %v318
    %v718 = vpop.f32.mrf.mxu0
    %v719 = vadd.f32 %v155, %v718
    %720 = vmatmul.f32.gmra.mxu0 %v321
    %v721 = vpop.f32.mrf.mxu0
    %v722 = vadd.f32 %v155, %v721
    %723 = vmatmul.f32.gmra.mxu0 %v324
    %v724 = vpop.f32.mrf.mxu0
    %v725 = vadd.f32 %v155, %v724
    %726 = vmatmul.f32.gmra.mxu0 %v327
    %v727 = vpop.f32.mrf.mxu0
    %v728 = vadd.f32 %v155, %v727
    %729 = vmatmul.f32.gmra.mxu0 %v330
    %v730 = vpop.f32.mrf.mxu0
    %v731 = vadd.f32 %v155, %v730
    %732 = vmatmul.f32.gmra.mxu0 %v333
    %v733 = vpop.f32.mrf.mxu0
    %v734 = vadd.f32 %v155, %v733
    %735 = vmatmul.f32.gmra.mxu0 %v336
    %v736 = vpop.f32.mrf.mxu0
    %v737 = vadd.f32 %v155, %v736
    %738 = vmatmul.f32.gmra.mxu0 %v339
    %v739 = vpop.f32.mrf.mxu0
    %v740 = vadd.f32 %v155, %v739
    %741 = vmatmul.f32.gmra.mxu0 %v342
    %v742 = vpop.f32.mrf.mxu0
    %v743 = vadd.f32 %v155, %v742
    %744 = vmatmul.f32.gmra.mxu0 %v345
    %v745 = vpop.f32.mrf.mxu0
    %v746 = vadd.f32 %v155, %v745
    %747 = vmatmul.f32.gmra.mxu0 %v348
    %v748 = vpop.f32.mrf.mxu0
    %v749 = vadd.f32 %v155, %v748
    %750 = vmatmul.f32.gmra.mxu0 %v351
    %v751 = vpop.f32.mrf.mxu0
    %v752 = vadd.f32 %v155, %v751
    %753 = vmatmul.f32.gmra.mxu0 %v354
    %v754 = vpop.f32.mrf.mxu0
    %v755 = vadd.f32 %v155, %v754
    %756 = vmatmul.f32.gmra.mxu0 %v357
    %v757 = vpop.f32.mrf.mxu0
    %v758 = vadd.f32 %v155, %v757
    %759 = vmatmul.f32.gmra.mxu0 %v360
    %v760 = vpop.f32.mrf.mxu0
    %v761 = vadd.f32 %v155, %v760
    %762 = vmatmul.f32.gmra.mxu0 %v363
    %v763 = vpop.f32.mrf.mxu0
    %v764 = vadd.f32 %v155, %v763
    %765 = vmatmul.f32.gmra.mxu0 %v366
    %v766 = vpop.f32.mrf.mxu0
    %v767 = vadd.f32 %v155, %v766
    %768 = vmatmul.f32.gmra.mxu0 %v369
    %v769 = vpop.f32.mrf.mxu0
    %v770 = vadd.f32 %v155, %v769
    %771 = vmatmul.f32.gmra.mxu0 %v372
    %v772 = vpop.f32.mrf.mxu0
    %v773 = vadd.f32 %v155, %v772
    %774 = vmatmul.f32.gmra.mxu0 %v375
    %v775 = vpop.f32.mrf.mxu0
    %v776 = vadd.f32 %v155, %v775
    %777 = vmatmul.f32.gmra.mxu0 %v378
    %v778 = vpop.f32.mrf.mxu0
    %v779 = vadd.f32 %v155, %v778
    %780 = vmatmul.f32.gmra.mxu0 %v381
    %v781 = vpop.f32.mrf.mxu0
    %v782 = vadd.f32 %v155, %v781
    %783 = vmatmul.f32.gmra.mxu0 %v384
    %v784 = vpop.f32.mrf.mxu0
    %v785 = vadd.f32 %v155, %v784
    %786 = vmatmul.f32.gmra.mxu0 %v387
    %v787 = vpop.f32.mrf.mxu0
    %v788 = vadd.f32 %v155, %v787
    %789 = vmatmul.f32.gmra.mxu0 %v390
    %v790 = vpop.f32.mrf.mxu0
    %v791 = vadd.f32 %v155, %v790
    %792 = vmatmul.f32.gmra.mxu0 %v393
    %v793 = vpop.f32.mrf.mxu0
    %v794 = vadd.f32 %v155, %v793
    %795 = vmatmul.f32.gmra.mxu0 %v396
    %v796 = vpop.f32.mrf.mxu0
    %v797 = vadd.f32 %v155, %v796
    %798 = vmatmul.f32.gmra.mxu0 %v399
    %v799 = vpop.f32.mrf.mxu0
    %v800 = vadd.f32 %v155, %v799
    %801 = vmatmul.f32.gmra.mxu0 %v402
    %v802 = vpop.f32.mrf.mxu0
    %v803 = vadd.f32 %v155, %v802
    %804 = vmatmul.f32.gmra.mxu0 %v405
    %v805 = vpop.f32.mrf.mxu0
    %v806 = vadd.f32 %v155, %v805
    %807 = vmatmul.f32.gmra.mxu0 %v408
    %v808 = vpop.f32.mrf.mxu0
    %v809 = vadd.f32 %v155, %v808
    %810 = vmatmul.f32.gmra.mxu0 %v411
    %v811 = vpop.f32.mrf.mxu0
    %v812 = vadd.f32 %v155, %v811
    %813 = vmatmul.f32.gmra.mxu0 %v414
    %v814 = vpop.f32.mrf.mxu0
    %v815 = vadd.f32 %v155, %v814
    %816 = vmatmul.f32.gmra.mxu0 %v417
    %v817 = vpop.f32.mrf.mxu0
    %v818 = vadd.f32 %v155, %v817
    %819 = vmatmul.f32.gmra.mxu0 %v420
    %v820 = vpop.f32.mrf.mxu0
    %v821 = vadd.f32 %v155, %v820
    %822 = vmatmul.f32.gmra.mxu0 %v423
    %v823 = vpop.f32.mrf.mxu0
    %v824 = vadd.f32 %v155, %v823
    %825 = vmatmul.f32.gmra.mxu0 %v426
    %v826 = vpop.f32.mrf.mxu0
    %v827 = vadd.f32 %v155, %v826
    %828 = vmatmul.f32.gmra.mxu0 %v429
    %v829 = vpop.f32.mrf.mxu0
    %v830 = vadd.f32 %v155, %v829
    %831 = vmatmul.f32.gmra.mxu0 %v432
    %v832 = vpop.f32.mrf.mxu0
    %v833 = vadd.f32 %v155, %v832
    %834 = vmatmul.f32.gmra.mxu0 %v435
    %v835 = vpop.f32.mrf.mxu0
    %v836 = vadd.f32 %v155, %v835
    %837 = vmatmul.f32.gmra.mxu0 %v438
    %v838 = vpop.f32.mrf.mxu0
    %v839 = vadd.f32 %v155, %v838
    %840 = vmatmul.f32.gmra.mxu0 %v441
    %v841 = vpop.f32.mrf.mxu0
    %v842 = vadd.f32 %v155, %v841
    %843 = vmatmul.f32.gmra.mxu0 %v444
    %v844 = vpop.f32.mrf.mxu0
    %v845 = vadd.f32 %v155, %v844
    %846 = vmatmul.f32.gmra.mxu0 %v447
    %v847 = vpop.f32.mrf.mxu0
    %v848 = vadd.f32 %v155, %v847
    %849 = vmatmul.f32.gmra.mxu0 %v450
    %v850 = vpop.f32.mrf.mxu0
    %v851 = vadd.f32 %v155, %v850
    %852 = vmatmul.f32.gmra.mxu0 %v453
    %v853 = vpop.f32.mrf.mxu0
    %v854 = vadd.f32 %v155, %v853
    %855 = vmatmul.f32.gmra.mxu0 %v456
    %v856 = vpop.f32.mrf.mxu0
    %v857 = vadd.f32 %v155, %v856
    %858 = vmatmul.f32.gmra.mxu0 %v459
    %v859 = vpop.f32.mrf.mxu0
    %v860 = vadd.f32 %v155, %v859
    %861 = vmatmul.f32.gmra.mxu0 %v462
    %v862 = vpop.f32.mrf.mxu0
    %v863 = vadd.f32 %v155, %v862
    %864 = vmatmul.f32.gmra.mxu0 %v465
    %v865 = vpop.f32.mrf.mxu0
    %v866 = vadd.f32 %v155, %v865
    %867 = vmatmul.f32.gmra.mxu0 %v468
    %v868 = vpop.f32.mrf.mxu0
    %v869 = vadd.f32 %v155, %v868
    %870 = vmatmul.f32.gmra.mxu0 %v471
    %v871 = vpop.f32.mrf.mxu0
    %v872 = vadd.f32 %v155, %v871
    %873 = vmatmul.f32.gmra.mxu0 %v474
    %v874 = vpop.f32.mrf.mxu0
    %v875 = vadd.f32 %v155, %v874
    %876 = vmatmul.f32.gmra.mxu0 %v477
    %v877 = vpop.f32.mrf.mxu0
    %v878 = vadd.f32 %v155, %v877
    %879 = vmatmul.f32.gmra.mxu0 %v480
    %v880 = vpop.f32.mrf.mxu0
    %v881 = vadd.f32 %v155, %v880
    %882 = vmatmul.f32.gmra.mxu0 %v483
    %v883 = vpop.f32.mrf.mxu0
    %v884 = vadd.f32 %v155, %v883
    %885 = vmatmul.f32.gmra.mxu0 %v486
    %v886 = vpop.f32.mrf.mxu0
    %v887 = vadd.f32 %v155, %v886
    %888 = vmatmul.f32.gmra.mxu0 %v489
    %v889 = vpop.f32.mrf.mxu0
    %v890 = vadd.f32 %v155, %v889
    %891 = vmatmul.f32.gmra.mxu0 %v492
    %v892 = vpop.f32.mrf.mxu0
    %v893 = vadd.f32 %v155, %v892
    %894 = vmatmul.f32.gmra.mxu0 %v495
    %v895 = vpop.f32.mrf.mxu0
    %v896 = vadd.f32 %v155, %v895
    %897 = vmatmul.f32.gmra.mxu0 %v498
    %v898 = vpop.f32.mrf.mxu0
    %v899 = vadd.f32 %v155, %v898
    %900 = vmatmul.f32.gmra.mxu0 %v501
    %v901 = vpop.f32.mrf.mxu0
    %v902 = vadd.f32 %v155, %v901
    %903 = vmatmul.f32.gmra.mxu0 %v504
    %v904 = vpop.f32.mrf.mxu0
    %v905 = vadd.f32 %v155, %v904
    %906 = vmatmul.f32.gmra.mxu0 %v507
    %v907 = vpop.f32.mrf.mxu0
    %v908 = vadd.f32 %v155, %v907
    %909 = vmatmul.f32.gmra.mxu0 %v510
    %v910 = vpop.f32.mrf.mxu0
    %v911 = vadd.f32 %v155, %v910
    %912 = vmatmul.f32.gmra.mxu0 %v513
    %v913 = vpop.f32.mrf.mxu0
    %v914 = vadd.f32 %v155, %v913
    %915 = vmatmul.f32.gmra.mxu0 %v516
    %v916 = vpop.f32.mrf.mxu0
    %v917 = vadd.f32 %v155, %v916
    %918 = vmatmul.f32.gmra.mxu0 %v519
    %v919 = vpop.f32.mrf.mxu0
    %v920 = vadd.f32 %v155, %v919
    %921 = vmatmul.f32.gmra.mxu0 %v522
    %v922 = vpop.f32.mrf.mxu0
    %v923 = vadd.f32 %v155, %v922
    %924 = vmatmul.f32.gmra.mxu0 %v525
    %v925 = vpop.f32.mrf.mxu0
    %v926 = vadd.f32 %v155, %v925
    %927 = vmatmul.f32.gmra.mxu0 %v528
    %v928 = vpop.f32.mrf.mxu0
    %v929 = vadd.f32 %v155, %v928
    %930 = vmatmul.f32.gmra.mxu0 %v531
    %v931 = vpop.f32.mrf.mxu0
    %v932 = vadd.f32 %v155, %v931
    %933 = vmatmul.f32.gmra.mxu0 %v534
    %v934 = vpop.f32.mrf.mxu0
    %v935 = vadd.f32 %v155, %v934
    %936 = vmatmul.f32.gmra.mxu0 %v537
    %v937 = vpop.f32.mrf.mxu0
    %v938 = vadd.f32 %v155, %v937
    %939 = vmatmul.f32.gmra.mxu0 %v540
    %v940 = vpop.f32.mrf.mxu0
    %v941 = vadd.f32 %v155, %v940
    %942 = vdwg.mxu0
    %v943 = vmax.f32 %v560, 0.0
    %v944 = vmax.f32 %v563, 0.0
    %v945 = vmax.f32 %v566, 0.0
    %v946 = vmax.f32 %v569, 0.0
    %v947 = vmax.f32 %v572, 0.0
    %v948 = vmax.f32 %v575, 0.0
    %v949 = vmax.f32 %v578, 0.0
    %v950 = vmax.f32 %v581, 0.0
    %v951 = vmax.f32 %v584, 0.0
    %v952 = vmax.f32 %v587, 0.0
    %v953 = vmax.f32 %v590, 0.0
    %v954 = vmax.f32 %v593, 0.0
    %v955 = vmax.f32 %v596, 0.0
    %v956 = vmax.f32 %v599, 0.0
    %v957 = vmax.f32 %v602, 0.0
    %v958 = vmax.f32 %v605, 0.0
    %v959 = vmax.f32 %v608, 0.0
    %v960 = vmax.f32 %v611, 0.0
    %v961 = vmax.f32 %v614, 0.0
    %v962 = vmax.f32 %v617, 0.0
    %v963 = vmax.f32 %v620, 0.0
    %v964 = vmax.f32 %v623, 0.0
    %v965 = vmax.f32 %v626, 0.0
    %v966 = vmax.f32 %v629, 0.0
    %v967 = vmax.f32 %v632, 0.0
    %v968 = vmax.f32 %v635, 0.0
    %v969 = vmax.f32 %v638, 0.0
    %v970 = vmax.f32 %v641, 0.0
    %v971 = vmax.f32 %v644, 0.0
    %v972 = vmax.f32 %v647, 0.0
    %v973 = vmax.f32 %v650, 0.0
    %v974 = vmax.f32 %v653, 0.0
    %v975 = vmax.f32 %v656, 0.0
    %v976 = vmax.f32 %v659, 0.0
    %v977 = vmax.f32 %v662, 0.0
    %v978 = vmax.f32 %v665, 0.0
    %v979 = vmax.f32 %v668, 0.0
    %v980 = vmax.f32 %v671, 0.0
    %v981 = vmax.f32 %v674, 0.0
    %v982 = vmax.f32 %v677, 0.0
    %v983 = vmax.f32 %v680, 0.0
    %v984 = vmax.f32 %v683, 0.0
    %v985 = vmax.f32 %v686, 0.0
    %v986 = vmax.f32 %v689, 0.0
    %v987 = vmax.f32 %v692, 0.0
    %v988 = vmax.f32 %v695, 0.0
    %v989 = vmax.f32 %v698, 0.0
    %v990 = vmax.f32 %v701, 0.0
    %v991 = vmax.f32 %v704, 0.0
    %v992 = vmax.f32 %v707, 0.0
    %v993 = vmax.f32 %v710, 0.0
    %v994 = vmax.f32 %v713, 0.0
    %v995 = vmax.f32 %v716, 0.0
    %v996 = vmax.f32 %v719, 0.0
    %v997 = vmax.f32 %v722, 0.0
    %v998 = vmax.f32 %v725, 0.0
    %v999 = vmax.f32 %v728, 0.0
    %v1000 = vmax.f32 %v731, 0.0
    %v1001 = vmax.f32 %v734, 0.0
    %v1002 = vmax.f32 %v737, 0.0
    %v1003 = vmax.f32 %v740, 0.0
    %v1004 = vmax.f32 %v743, 0.0
    %v1005 = vmax.f32 %v746, 0.0
    %v1006 = vmax.f32 %v749, 0.0
    %v1007 = vmax.f32 %v752, 0.0
    %v1008 = vmax.f32 %v755, 0.0
    %v1009 = vmax.f32 %v758, 0.0
    %v1010 = vmax.f32 %v761, 0.0
    %v1011 = vmax.f32 %v764, 0.0
    %v1012 = vmax.f32 %v767, 0.0
    %v1013 = vmax.f32 %v770, 0.0
    %v1014 = vmax.f32 %v773, 0.0
    %v1015 = vmax.f32 %v776, 0.0
    %v1016 = vmax.f32 %v779, 0.0
    %v1017 = vmax.f32 %v782, 0.0
    %v1018 = vmax.f32 %v785, 0.0
    %v1019 = vmax.f32 %v788, 0.0
    %v1020 = vmax.f32 %v791, 0.0
    %v1021 = vmax.f32 %v794, 0.0
    %v1022 = vmax.f32 %v797, 0.0
    %v1023 = vmax.f32 %v800, 0.0
    %v1024 = vmax.f32 %v803, 0.0
    %v1025 = vmax.f32 %v806, 0.0
    %v1026 = vmax.f32 %v809, 0.0
    %v1027 = vmax.f32 %v812, 0.0
    %v1028 = vmax.f32 %v815, 0.0
    %v1029 = vmax.f32 %v818, 0.0
    %v1030 = vmax.f32 %v821, 0.0
    %v1031 = vmax.f32 %v824, 0.0
    %v1032 = vmax.f32 %v827, 0.0
    %v1033 = vmax.f32 %v830, 0.0
    %v1034 = vmax.f32 %v833, 0.0
    %v1035 = vmax.f32 %v836, 0.0
    %v1036 = vmax.f32 %v839, 0.0
    %v1037 = vmax.f32 %v842, 0.0
    %v1038 = vmax.f32 %v845, 0.0
    %v1039 = vmax.f32 %v848, 0.0
    %v1040 = vmax.f32 %v851, 0.0
    %v1041 = vmax.f32 %v854, 0.0
    %v1042 = vmax.f32 %v857, 0.0
    %v1043 = vmax.f32 %v860, 0.0
    %v1044 = vmax.f32 %v863, 0.0
    %v1045 = vmax.f32 %v866, 0.0
    %v1046 = vmax.f32 %v869, 0.0
    %v1047 = vmax.f32 %v872, 0.0
    %v1048 = vmax.f32 %v875, 0.0
    %v1049 = vmax.f32 %v878, 0.0
    %v1050 = vmax.f32 %v881, 0.0
    %v1051 = vmax.f32 %v884, 0.0
    %v1052 = vmax.f32 %v887, 0.0
    %v1053 = vmax.f32 %v890, 0.0
    %v1054 = vmax.f32 %v893, 0.0
    %v1055 = vmax.f32 %v896, 0.0
    %v1056 = vmax.f32 %v899, 0.0
    %v1057 = vmax.f32 %v902, 0.0
    %v1058 = vmax.f32 %v905, 0.0
    %v1059 = vmax.f32 %v908, 0.0
    %v1060 = vmax.f32 %v911, 0.0
    %v1061 = vmax.f32 %v914, 0.0
    %v1062 = vmax.f32 %v917, 0.0
    %v1063 = vmax.f32 %v920, 0.0
    %v1064 = vmax.f32 %v923, 0.0
    %v1065 = vmax.f32 %v926, 0.0
    %v1066 = vmax.f32 %v929, 0.0
    %v1067 = vmax.f32 %v932, 0.0
    %v1068 = vmax.f32 %v935, 0.0
    %v1069 = vmax.f32 %v938, 0.0
    %v1070 = vmax.f32 %v941, 0.0
    %v1071 = vld [vmem:[%s3] sm:$0x1]
    %v1073 = vperm.slane %v1071, 0
    %v1075 = vmul.f32 %v943, %v1073
    %v1076 = vmul.f32 %v944, %v1073
    %v1077 = vmul.f32 %v945, %v1073
    %v1078 = vmul.f32 %v946, %v1073
    %v1079 = vmul.f32 %v947, %v1073
    %v1080 = vmul.f32 %v948, %v1073
    %v1081 = vmul.f32 %v949, %v1073
    %v1082 = vmul.f32 %v950, %v1073
    %v1083 = vmul.f32 %v951, %v1073
    %v1084 = vmul.f32 %v952, %v1073
    %v1085 = vmul.f32 %v953, %v1073
    %v1086 = vmul.f32 %v954, %v1073
    %v1087 = vmul.f32 %v955, %v1073
    %v1088 = vmul.f32 %v956, %v1073
    %v1089 = vmul.f32 %v957, %v1073
    %v1090 = vmul.f32 %v958, %v1073
    %v1091 = vmul.f32 %v959, %v1073
    %v1092 = vmul.f32 %v960, %v1073
    %v1093 = vmul.f32 %v961, %v1073
    %v1094 = vmul.f32 %v962, %v1073
    %v1095 = vmul.f32 %v963, %v1073
    %v1096 = vmul.f32 %v964, %v1073
    %v1097 = vmul.f32 %v965, %v1073
    %v1098 = vmul.f32 %v966, %v1073
    %v1099 = vmul.f32 %v967, %v1073
    %v1100 = vmul.f32 %v968, %v1073
    %v1101 = vmul.f32 %v969, %v1073
    %v1102 = vmul.f32 %v970, %v1073
    %v1103 = vmul.f32 %v971, %v1073
    %v1104 = vmul.f32 %v972, %v1073
    %v1105 = vmul.f32 %v973, %v1073
    %v1106 = vmul.f32 %v974, %v1073
    %v1107 = vmul.f32 %v975, %v1073
    %v1108 = vmul.f32 %v976, %v1073
    %v1109 = vmul.f32 %v977, %v1073
    %v1110 = vmul.f32 %v978, %v1073
    %v1111 = vmul.f32 %v979, %v1073
    %v1112 = vmul.f32 %v980, %v1073
    %v1113 = vmul.f32 %v981, %v1073
    %v1114 = vmul.f32 %v982, %v1073
    %v1115 = vmul.f32 %v983, %v1073
    %v1116 = vmul.f32 %v984, %v1073
    %v1117 = vmul.f32 %v985, %v1073
    %v1118 = vmul.f32 %v986, %v1073
    %v1119 = vmul.f32 %v987, %v1073
    %v1120 = vmul.f32 %v988, %v1073
    %v1121 = vmul.f32 %v989, %v1073
    %v1122 = vmul.f32 %v990, %v1073
    %v1123 = vmul.f32 %v991, %v1073
    %v1124 = vmul.f32 %v992, %v1073
    %v1125 = vmul.f32 %v993, %v1073
    %v1126 = vmul.f32 %v994, %v1073
    %v1127 = vmul.f32 %v995, %v1073
    %v1128 = vmul.f32 %v996, %v1073
    %v1129 = vmul.f32 %v997, %v1073
    %v1130 = vmul.f32 %v998, %v1073
    %v1131 = vmul.f32 %v999, %v1073
    %v1132 = vmul.f32 %v1000, %v1073
    %v1133 = vmul.f32 %v1001, %v1073
    %v1134 = vmul.f32 %v1002, %v1073
    %v1135 = vmul.f32 %v1003, %v1073
    %v1136 = vmul.f32 %v1004, %v1073
    %v1137 = vmul.f32 %v1005, %v1073
    %v1138 = vmul.f32 %v1006, %v1073
    %v1139 = vmul.f32 %v1007, %v1073
    %v1140 = vmul.f32 %v1008, %v1073
    %v1141 = vmul.f32 %v1009, %v1073
    %v1142 = vmul.f32 %v1010, %v1073
    %v1143 = vmul.f32 %v1011, %v1073
    %v1144 = vmul.f32 %v1012, %v1073
    %v1145 = vmul.f32 %v1013, %v1073
    %v1146 = vmul.f32 %v1014, %v1073
    %v1147 = vmul.f32 %v1015, %v1073
    %v1148 = vmul.f32 %v1016, %v1073
    %v1149 = vmul.f32 %v1017, %v1073
    %v1150 = vmul.f32 %v1018, %v1073
    %v1151 = vmul.f32 %v1019, %v1073
    %v1152 = vmul.f32 %v1020, %v1073
    %v1153 = vmul.f32 %v1021, %v1073
    %v1154 = vmul.f32 %v1022, %v1073
    %v1155 = vmul.f32 %v1023, %v1073
    %v1156 = vmul.f32 %v1024, %v1073
    %v1157 = vmul.f32 %v1025, %v1073
    %v1158 = vmul.f32 %v1026, %v1073
    %v1159 = vmul.f32 %v1027, %v1073
    %v1160 = vmul.f32 %v1028, %v1073
    %v1161 = vmul.f32 %v1029, %v1073
    %v1162 = vmul.f32 %v1030, %v1073
    %v1163 = vmul.f32 %v1031, %v1073
    %v1164 = vmul.f32 %v1032, %v1073
    %v1165 = vmul.f32 %v1033, %v1073
    %v1166 = vmul.f32 %v1034, %v1073
    %v1167 = vmul.f32 %v1035, %v1073
    %v1168 = vmul.f32 %v1036, %v1073
    %v1169 = vmul.f32 %v1037, %v1073
    %v1170 = vmul.f32 %v1038, %v1073
    %v1171 = vmul.f32 %v1039, %v1073
    %v1172 = vmul.f32 %v1040, %v1073
    %v1173 = vmul.f32 %v1041, %v1073
    %v1174 = vmul.f32 %v1042, %v1073
    %v1175 = vmul.f32 %v1043, %v1073
    %v1176 = vmul.f32 %v1044, %v1073
    %v1177 = vmul.f32 %v1045, %v1073
    %v1178 = vmul.f32 %v1046, %v1073
    %v1179 = vmul.f32 %v1047, %v1073
    %v1180 = vmul.f32 %v1048, %v1073
    %v1181 = vmul.f32 %v1049, %v1073
    %v1182 = vmul.f32 %v1050, %v1073
    %v1183 = vmul.f32 %v1051, %v1073
    %v1184 = vmul.f32 %v1052, %v1073
    %v1185 = vmul.f32 %v1053, %v1073
    %v1186 = vmul.f32 %v1054, %v1073
    %v1187 = vmul.f32 %v1055, %v1073
    %v1188 = vmul.f32 %v1056, %v1073
    %v1189 = vmul.f32 %v1057, %v1073
    %v1190 = vmul.f32 %v1058, %v1073
    %v1191 = vmul.f32 %v1059, %v1073
    %v1192 = vmul.f32 %v1060, %v1073
    %v1193 = vmul.f32 %v1061, %v1073
    %v1194 = vmul.f32 %v1062, %v1073
    %v1195 = vmul.f32 %v1063, %v1073
    %v1196 = vmul.f32 %v1064, %v1073
    %v1197 = vmul.f32 %v1065, %v1073
    %v1198 = vmul.f32 %v1066, %v1073
    %v1199 = vmul.f32 %v1067, %v1073
    %v1200 = vmul.f32 %v1068, %v1073
    %v1201 = vmul.f32 %v1069, %v1073
    %v1202 = vmul.f32 %v1070, %v1073
    %vm1203 = vcmask 261120
    %v1204 = vsel %vm1203, %v1075, 0.0
    %1205 = vadd.xlane.f32.xlu0 %v1204
    %v1206 = vpop.xlane.xlu0 %1205
    %v1207 = vsel %vm1203, %v1076, 0.0
    %1208 = vadd.xlane.f32.xlu0 %v1207
    %v1209 = vpop.xlane.xlu0 %1208
    %v1210 = vsel %vm1203, %v1077, 0.0
    %1211 = vadd.xlane.f32.xlu0 %v1210
    %v1212 = vpop.xlane.xlu0 %1211
    %v1213 = vsel %vm1203, %v1078, 0.0
    %1214 = vadd.xlane.f32.xlu0 %v1213
    %v1215 = vpop.xlane.xlu0 %1214
    %v1216 = vsel %vm1203, %v1079, 0.0
    %1217 = vadd.xlane.f32.xlu0 %v1216
    %v1218 = vpop.xlane.xlu0 %1217
    %v1219 = vsel %vm1203, %v1080, 0.0
    %1220 = vadd.xlane.f32.xlu0 %v1219
    %v1221 = vpop.xlane.xlu0 %1220
    %v1222 = vsel %vm1203, %v1081, 0.0
    %1223 = vadd.xlane.f32.xlu0 %v1222
    %v1224 = vpop.xlane.xlu0 %1223
    %v1225 = vsel %vm1203, %v1082, 0.0
    %1226 = vadd.xlane.f32.xlu0 %v1225
    %v1227 = vpop.xlane.xlu0 %1226
    %v1228 = vsel %vm1203, %v1083, 0.0
    %1229 = vadd.xlane.f32.xlu0 %v1228
    %v1230 = vpop.xlane.xlu0 %1229
    %v1231 = vsel %vm1203, %v1084, 0.0
    %1232 = vadd.xlane.f32.xlu0 %v1231
    %v1233 = vpop.xlane.xlu0 %1232
    %v1234 = vsel %vm1203, %v1085, 0.0
    %1235 = vadd.xlane.f32.xlu0 %v1234
    %v1236 = vpop.xlane.xlu0 %1235
    %v1237 = vsel %vm1203, %v1086, 0.0
    %1238 = vadd.xlane.f32.xlu0 %v1237
    %v1239 = vpop.xlane.xlu0 %1238
    %v1240 = vsel %vm1203, %v1087, 0.0
    %1241 = vadd.xlane.f32.xlu0 %v1240
    %v1242 = vpop.xlane.xlu0 %1241
    %v1243 = vsel %vm1203, %v1088, 0.0
    %1244 = vadd.xlane.f32.xlu0 %v1243
    %v1245 = vpop.xlane.xlu0 %1244
    %v1246 = vsel %vm1203, %v1089, 0.0
    %1247 = vadd.xlane.f32.xlu0 %v1246
    %v1248 = vpop.xlane.xlu0 %1247
    %v1249 = vsel %vm1203, %v1090, 0.0
    %1250 = vadd.xlane.f32.xlu0 %v1249
    %v1251 = vpop.xlane.xlu0 %1250
    %v1252 = vsel %vm1203, %v1091, 0.0
    %1253 = vadd.xlane.f32.xlu0 %v1252
    %v1254 = vpop.xlane.xlu0 %1253
    %v1255 = vsel %vm1203, %v1092, 0.0
    %1256 = vadd.xlane.f32.xlu0 %v1255
    %v1257 = vpop.xlane.xlu0 %1256
    %v1258 = vsel %vm1203, %v1093, 0.0
    %1259 = vadd.xlane.f32.xlu0 %v1258
    %v1260 = vpop.xlane.xlu0 %1259
    %v1261 = vsel %vm1203, %v1094, 0.0
    %1262 = vadd.xlane.f32.xlu0 %v1261
    %v1263 = vpop.xlane.xlu0 %1262
    %v1264 = vsel %vm1203, %v1095, 0.0
    %1265 = vadd.xlane.f32.xlu0 %v1264
    %v1266 = vpop.xlane.xlu0 %1265
    %v1267 = vsel %vm1203, %v1096, 0.0
    %1268 = vadd.xlane.f32.xlu0 %v1267
    %v1269 = vpop.xlane.xlu0 %1268
    %v1270 = vsel %vm1203, %v1097, 0.0
    %1271 = vadd.xlane.f32.xlu0 %v1270
    %v1272 = vpop.xlane.xlu0 %1271
    %v1273 = vsel %vm1203, %v1098, 0.0
    %1274 = vadd.xlane.f32.xlu0 %v1273
    %v1275 = vpop.xlane.xlu0 %1274
    %v1276 = vsel %vm1203, %v1099, 0.0
    %1277 = vadd.xlane.f32.xlu0 %v1276
    %v1278 = vpop.xlane.xlu0 %1277
    %v1279 = vsel %vm1203, %v1100, 0.0
    %1280 = vadd.xlane.f32.xlu0 %v1279
    %v1281 = vpop.xlane.xlu0 %1280
    %v1282 = vsel %vm1203, %v1101, 0.0
    %1283 = vadd.xlane.f32.xlu0 %v1282
    %v1284 = vpop.xlane.xlu0 %1283
    %v1285 = vsel %vm1203, %v1102, 0.0
    %1286 = vadd.xlane.f32.xlu0 %v1285
    %v1287 = vpop.xlane.xlu0 %1286
    %v1288 = vsel %vm1203, %v1103, 0.0
    %1289 = vadd.xlane.f32.xlu0 %v1288
    %v1290 = vpop.xlane.xlu0 %1289
    %v1291 = vsel %vm1203, %v1104, 0.0
    %1292 = vadd.xlane.f32.xlu0 %v1291
    %v1293 = vpop.xlane.xlu0 %1292
    %v1294 = vsel %vm1203, %v1105, 0.0
    %1295 = vadd.xlane.f32.xlu0 %v1294
    %v1296 = vpop.xlane.xlu0 %1295
    %v1297 = vsel %vm1203, %v1106, 0.0
    %1298 = vadd.xlane.f32.xlu0 %v1297
    %v1299 = vpop.xlane.xlu0 %1298
    %v1300 = vsel %vm1203, %v1107, 0.0
    %1301 = vadd.xlane.f32.xlu0 %v1300
    %v1302 = vpop.xlane.xlu0 %1301
    %v1303 = vsel %vm1203, %v1108, 0.0
    %1304 = vadd.xlane.f32.xlu0 %v1303
    %v1305 = vpop.xlane.xlu0 %1304
    %v1306 = vsel %vm1203, %v1109, 0.0
    %1307 = vadd.xlane.f32.xlu0 %v1306
    %v1308 = vpop.xlane.xlu0 %1307
    %v1309 = vsel %vm1203, %v1110, 0.0
    %1310 = vadd.xlane.f32.xlu0 %v1309
    %v1311 = vpop.xlane.xlu0 %1310
    %v1312 = vsel %vm1203, %v1111, 0.0
    %1313 = vadd.xlane.f32.xlu0 %v1312
    %v1314 = vpop.xlane.xlu0 %1313
    %v1315 = vsel %vm1203, %v1112, 0.0
    %1316 = vadd.xlane.f32.xlu0 %v1315
    %v1317 = vpop.xlane.xlu0 %1316
    %v1318 = vsel %vm1203, %v1113, 0.0
    %1319 = vadd.xlane.f32.xlu0 %v1318
    %v1320 = vpop.xlane.xlu0 %1319
    %v1321 = vsel %vm1203, %v1114, 0.0
    %1322 = vadd.xlane.f32.xlu0 %v1321
    %v1323 = vpop.xlane.xlu0 %1322
    %v1324 = vsel %vm1203, %v1115, 0.0
    %1325 = vadd.xlane.f32.xlu0 %v1324
    %v1326 = vpop.xlane.xlu0 %1325
    %v1327 = vsel %vm1203, %v1116, 0.0
    %1328 = vadd.xlane.f32.xlu0 %v1327
    %v1329 = vpop.xlane.xlu0 %1328
    %v1330 = vsel %vm1203, %v1117, 0.0
    %1331 = vadd.xlane.f32.xlu0 %v1330
    %v1332 = vpop.xlane.xlu0 %1331
    %v1333 = vsel %vm1203, %v1118, 0.0
    %1334 = vadd.xlane.f32.xlu0 %v1333
    %v1335 = vpop.xlane.xlu0 %1334
    %v1336 = vsel %vm1203, %v1119, 0.0
    %1337 = vadd.xlane.f32.xlu0 %v1336
    %v1338 = vpop.xlane.xlu0 %1337
    %v1339 = vsel %vm1203, %v1120, 0.0
    %1340 = vadd.xlane.f32.xlu0 %v1339
    %v1341 = vpop.xlane.xlu0 %1340
    %v1342 = vsel %vm1203, %v1121, 0.0
    %1343 = vadd.xlane.f32.xlu0 %v1342
    %v1344 = vpop.xlane.xlu0 %1343
    %v1345 = vsel %vm1203, %v1122, 0.0
    %1346 = vadd.xlane.f32.xlu0 %v1345
    %v1347 = vpop.xlane.xlu0 %1346
    %v1348 = vsel %vm1203, %v1123, 0.0
    %1349 = vadd.xlane.f32.xlu0 %v1348
    %v1350 = vpop.xlane.xlu0 %1349
    %v1351 = vsel %vm1203, %v1124, 0.0
    %1352 = vadd.xlane.f32.xlu0 %v1351
    %v1353 = vpop.xlane.xlu0 %1352
    %v1354 = vsel %vm1203, %v1125, 0.0
    %1355 = vadd.xlane.f32.xlu0 %v1354
    %v1356 = vpop.xlane.xlu0 %1355
    %v1357 = vsel %vm1203, %v1126, 0.0
    %1358 = vadd.xlane.f32.xlu0 %v1357
    %v1359 = vpop.xlane.xlu0 %1358
    %v1360 = vsel %vm1203, %v1127, 0.0
    %1361 = vadd.xlane.f32.xlu0 %v1360
    %v1362 = vpop.xlane.xlu0 %1361
    %v1363 = vsel %vm1203, %v1128, 0.0
    %1364 = vadd.xlane.f32.xlu0 %v1363
    %v1365 = vpop.xlane.xlu0 %1364
    %v1366 = vsel %vm1203, %v1129, 0.0
    %1367 = vadd.xlane.f32.xlu0 %v1366
    %v1368 = vpop.xlane.xlu0 %1367
    %v1369 = vsel %vm1203, %v1130, 0.0
    %1370 = vadd.xlane.f32.xlu0 %v1369
    %v1371 = vpop.xlane.xlu0 %1370
    %v1372 = vsel %vm1203, %v1131, 0.0
    %1373 = vadd.xlane.f32.xlu0 %v1372
    %v1374 = vpop.xlane.xlu0 %1373
    %v1375 = vsel %vm1203, %v1132, 0.0
    %1376 = vadd.xlane.f32.xlu0 %v1375
    %v1377 = vpop.xlane.xlu0 %1376
    %v1378 = vsel %vm1203, %v1133, 0.0
    %1379 = vadd.xlane.f32.xlu0 %v1378
    %v1380 = vpop.xlane.xlu0 %1379
    %v1381 = vsel %vm1203, %v1134, 0.0
    %1382 = vadd.xlane.f32.xlu0 %v1381
    %v1383 = vpop.xlane.xlu0 %1382
    %v1384 = vsel %vm1203, %v1135, 0.0
    %1385 = vadd.xlane.f32.xlu0 %v1384
    %v1386 = vpop.xlane.xlu0 %1385
    %v1387 = vsel %vm1203, %v1136, 0.0
    %1388 = vadd.xlane.f32.xlu0 %v1387
    %v1389 = vpop.xlane.xlu0 %1388
    %v1390 = vsel %vm1203, %v1137, 0.0
    %1391 = vadd.xlane.f32.xlu0 %v1390
    %v1392 = vpop.xlane.xlu0 %1391
    %v1393 = vsel %vm1203, %v1138, 0.0
    %1394 = vadd.xlane.f32.xlu0 %v1393
    %v1395 = vpop.xlane.xlu0 %1394
    %v1396 = vsel %vm1203, %v1139, 0.0
    %1397 = vadd.xlane.f32.xlu0 %v1396
    %v1398 = vpop.xlane.xlu0 %1397
    %v1399 = vsel %vm1203, %v1140, 0.0
    %1400 = vadd.xlane.f32.xlu0 %v1399
    %v1401 = vpop.xlane.xlu0 %1400
    %v1402 = vsel %vm1203, %v1141, 0.0
    %1403 = vadd.xlane.f32.xlu0 %v1402
    %v1404 = vpop.xlane.xlu0 %1403
    %v1405 = vsel %vm1203, %v1142, 0.0
    %1406 = vadd.xlane.f32.xlu0 %v1405
    %v1407 = vpop.xlane.xlu0 %1406
    %v1408 = vsel %vm1203, %v1143, 0.0
    %1409 = vadd.xlane.f32.xlu0 %v1408
    %v1410 = vpop.xlane.xlu0 %1409
    %v1411 = vsel %vm1203, %v1144, 0.0
    %1412 = vadd.xlane.f32.xlu0 %v1411
    %v1413 = vpop.xlane.xlu0 %1412
    %v1414 = vsel %vm1203, %v1145, 0.0
    %1415 = vadd.xlane.f32.xlu0 %v1414
    %v1416 = vpop.xlane.xlu0 %1415
    %v1417 = vsel %vm1203, %v1146, 0.0
    %1418 = vadd.xlane.f32.xlu0 %v1417
    %v1419 = vpop.xlane.xlu0 %1418
    %v1420 = vsel %vm1203, %v1147, 0.0
    %1421 = vadd.xlane.f32.xlu0 %v1420
    %v1422 = vpop.xlane.xlu0 %1421
    %v1423 = vsel %vm1203, %v1148, 0.0
    %1424 = vadd.xlane.f32.xlu0 %v1423
    %v1425 = vpop.xlane.xlu0 %1424
    %v1426 = vsel %vm1203, %v1149, 0.0
    %1427 = vadd.xlane.f32.xlu0 %v1426
    %v1428 = vpop.xlane.xlu0 %1427
    %v1429 = vsel %vm1203, %v1150, 0.0
    %1430 = vadd.xlane.f32.xlu0 %v1429
    %v1431 = vpop.xlane.xlu0 %1430
    %v1432 = vsel %vm1203, %v1151, 0.0
    %1433 = vadd.xlane.f32.xlu0 %v1432
    %v1434 = vpop.xlane.xlu0 %1433
    %v1435 = vsel %vm1203, %v1152, 0.0
    %1436 = vadd.xlane.f32.xlu0 %v1435
    %v1437 = vpop.xlane.xlu0 %1436
    %v1438 = vsel %vm1203, %v1153, 0.0
    %1439 = vadd.xlane.f32.xlu0 %v1438
    %v1440 = vpop.xlane.xlu0 %1439
    %v1441 = vsel %vm1203, %v1154, 0.0
    %1442 = vadd.xlane.f32.xlu0 %v1441
    %v1443 = vpop.xlane.xlu0 %1442
    %v1444 = vsel %vm1203, %v1155, 0.0
    %1445 = vadd.xlane.f32.xlu0 %v1444
    %v1446 = vpop.xlane.xlu0 %1445
    %v1447 = vsel %vm1203, %v1156, 0.0
    %1448 = vadd.xlane.f32.xlu0 %v1447
    %v1449 = vpop.xlane.xlu0 %1448
    %v1450 = vsel %vm1203, %v1157, 0.0
    %1451 = vadd.xlane.f32.xlu0 %v1450
    %v1452 = vpop.xlane.xlu0 %1451
    %v1453 = vsel %vm1203, %v1158, 0.0
    %1454 = vadd.xlane.f32.xlu0 %v1453
    %v1455 = vpop.xlane.xlu0 %1454
    %v1456 = vsel %vm1203, %v1159, 0.0
    %1457 = vadd.xlane.f32.xlu0 %v1456
    %v1458 = vpop.xlane.xlu0 %1457
    %v1459 = vsel %vm1203, %v1160, 0.0
    %1460 = vadd.xlane.f32.xlu0 %v1459
    %v1461 = vpop.xlane.xlu0 %1460
    %v1462 = vsel %vm1203, %v1161, 0.0
    %1463 = vadd.xlane.f32.xlu0 %v1462
    %v1464 = vpop.xlane.xlu0 %1463
    %v1465 = vsel %vm1203, %v1162, 0.0
    %1466 = vadd.xlane.f32.xlu0 %v1465
    %v1467 = vpop.xlane.xlu0 %1466
    %v1468 = vsel %vm1203, %v1163, 0.0
    %1469 = vadd.xlane.f32.xlu0 %v1468
    %v1470 = vpop.xlane.xlu0 %1469
    %v1471 = vsel %vm1203, %v1164, 0.0
    %1472 = vadd.xlane.f32.xlu0 %v1471
    %v1473 = vpop.xlane.xlu0 %1472
    %v1474 = vsel %vm1203, %v1165, 0.0
    %1475 = vadd.xlane.f32.xlu0 %v1474
    %v1476 = vpop.xlane.xlu0 %1475
    %v1477 = vsel %vm1203, %v1166, 0.0
    %1478 = vadd.xlane.f32.xlu0 %v1477
    %v1479 = vpop.xlane.xlu0 %1478
    %v1480 = vsel %vm1203, %v1167, 0.0
    %1481 = vadd.xlane.f32.xlu0 %v1480
    %v1482 = vpop.xlane.xlu0 %1481
    %v1483 = vsel %vm1203, %v1168, 0.0
    %1484 = vadd.xlane.f32.xlu0 %v1483
    %v1485 = vpop.xlane.xlu0 %1484
    %v1486 = vsel %vm1203, %v1169, 0.0
    %1487 = vadd.xlane.f32.xlu0 %v1486
    %v1488 = vpop.xlane.xlu0 %1487
    %v1489 = vsel %vm1203, %v1170, 0.0
    %1490 = vadd.xlane.f32.xlu0 %v1489
    %v1491 = vpop.xlane.xlu0 %1490
    %v1492 = vsel %vm1203, %v1171, 0.0
    %1493 = vadd.xlane.f32.xlu0 %v1492
    %v1494 = vpop.xlane.xlu0 %1493
    %v1495 = vsel %vm1203, %v1172, 0.0
    %1496 = vadd.xlane.f32.xlu0 %v1495
    %v1497 = vpop.xlane.xlu0 %1496
    %v1498 = vsel %vm1203, %v1173, 0.0
    %1499 = vadd.xlane.f32.xlu0 %v1498
    %v1500 = vpop.xlane.xlu0 %1499
    %v1501 = vsel %vm1203, %v1174, 0.0
    %1502 = vadd.xlane.f32.xlu0 %v1501
    %v1503 = vpop.xlane.xlu0 %1502
    %v1504 = vsel %vm1203, %v1175, 0.0
    %1505 = vadd.xlane.f32.xlu0 %v1504
    %v1506 = vpop.xlane.xlu0 %1505
    %v1507 = vsel %vm1203, %v1176, 0.0
    %1508 = vadd.xlane.f32.xlu0 %v1507
    %v1509 = vpop.xlane.xlu0 %1508
    %v1510 = vsel %vm1203, %v1177, 0.0
    %1511 = vadd.xlane.f32.xlu0 %v1510
    %v1512 = vpop.xlane.xlu0 %1511
    %v1513 = vsel %vm1203, %v1178, 0.0
    %1514 = vadd.xlane.f32.xlu0 %v1513
    %v1515 = vpop.xlane.xlu0 %1514
    %v1516 = vsel %vm1203, %v1179, 0.0
    %1517 = vadd.xlane.f32.xlu0 %v1516
    %v1518 = vpop.xlane.xlu0 %1517
    %v1519 = vsel %vm1203, %v1180, 0.0
    %1520 = vadd.xlane.f32.xlu0 %v1519
    %v1521 = vpop.xlane.xlu0 %1520
    %v1522 = vsel %vm1203, %v1181, 0.0
    %1523 = vadd.xlane.f32.xlu0 %v1522
    %v1524 = vpop.xlane.xlu0 %1523
    %v1525 = vsel %vm1203, %v1182, 0.0
    %1526 = vadd.xlane.f32.xlu0 %v1525
    %v1527 = vpop.xlane.xlu0 %1526
    %v1528 = vsel %vm1203, %v1183, 0.0
    %1529 = vadd.xlane.f32.xlu0 %v1528
    %v1530 = vpop.xlane.xlu0 %1529
    %v1531 = vsel %vm1203, %v1184, 0.0
    %1532 = vadd.xlane.f32.xlu0 %v1531
    %v1533 = vpop.xlane.xlu0 %1532
    %v1534 = vsel %vm1203, %v1185, 0.0
    %1535 = vadd.xlane.f32.xlu0 %v1534
    %v1536 = vpop.xlane.xlu0 %1535
    %v1537 = vsel %vm1203, %v1186, 0.0
    %1538 = vadd.xlane.f32.xlu0 %v1537
    %v1539 = vpop.xlane.xlu0 %1538
    %v1540 = vsel %vm1203, %v1187, 0.0
    %1541 = vadd.xlane.f32.xlu0 %v1540
    %v1542 = vpop.xlane.xlu0 %1541
    %v1543 = vsel %vm1203, %v1188, 0.0
    %1544 = vadd.xlane.f32.xlu0 %v1543
    %v1545 = vpop.xlane.xlu0 %1544
    %v1546 = vsel %vm1203, %v1189, 0.0
    %1547 = vadd.xlane.f32.xlu0 %v1546
    %v1548 = vpop.xlane.xlu0 %1547
    %v1549 = vsel %vm1203, %v1190, 0.0
    %1550 = vadd.xlane.f32.xlu0 %v1549
    %v1551 = vpop.xlane.xlu0 %1550
    %v1552 = vsel %vm1203, %v1191, 0.0
    %1553 = vadd.xlane.f32.xlu0 %v1552
    %v1554 = vpop.xlane.xlu0 %1553
    %v1555 = vsel %vm1203, %v1192, 0.0
    %1556 = vadd.xlane.f32.xlu0 %v1555
    %v1557 = vpop.xlane.xlu0 %1556
    %v1558 = vsel %vm1203, %v1193, 0.0
    %1559 = vadd.xlane.f32.xlu0 %v1558
    %v1560 = vpop.xlane.xlu0 %1559
    %v1561 = vsel %vm1203, %v1194, 0.0
    %1562 = vadd.xlane.f32.xlu0 %v1561
    %v1563 = vpop.xlane.xlu0 %1562
    %v1564 = vsel %vm1203, %v1195, 0.0
    %1565 = vadd.xlane.f32.xlu0 %v1564
    %v1566 = vpop.xlane.xlu0 %1565
    %v1567 = vsel %vm1203, %v1196, 0.0
    %1568 = vadd.xlane.f32.xlu0 %v1567
    %v1569 = vpop.xlane.xlu0 %1568
    %v1570 = vsel %vm1203, %v1197, 0.0
    %1571 = vadd.xlane.f32.xlu0 %v1570
    %v1572 = vpop.xlane.xlu0 %1571
    %v1573 = vsel %vm1203, %v1198, 0.0
    %1574 = vadd.xlane.f32.xlu0 %v1573
    %v1575 = vpop.xlane.xlu0 %1574
    %v1576 = vsel %vm1203, %v1199, 0.0
    %1577 = vadd.xlane.f32.xlu0 %v1576
    %v1578 = vpop.xlane.xlu0 %1577
    %v1579 = vsel %vm1203, %v1200, 0.0
    %1580 = vadd.xlane.f32.xlu0 %v1579
    %v1581 = vpop.xlane.xlu0 %1580
    %v1582 = vsel %vm1203, %v1201, 0.0
    %1583 = vadd.xlane.f32.xlu0 %v1582
    %v1584 = vpop.xlane.xlu0 %1583
    %v1585 = vsel %vm1203, %v1202, 0.0
    %1586 = vadd.xlane.f32.xlu0 %v1585
    %v1587 = vpop.xlane.xlu0 %1586
    %v1588 = vld [vmem:[#allocation2] sm:$0x1]
    %v1590 = vperm.slane %v1588, 0
    %1591 = vset.pattern.permute.xlu0 0
    %1592 = vperm.xlu0 %1591, %v1590
    %v1593 = vpop.permute.xlu0 %1592
    %v1595 = vadd.f32 %v1206, %v1593
    %v1596 = vadd.f32 %v1209, %v1593
    %v1597 = vadd.f32 %v1212, %v1593
    %v1598 = vadd.f32 %v1215, %v1593
    %v1599 = vadd.f32 %v1218, %v1593
    %v1600 = vadd.f32 %v1221, %v1593
    %v1601 = vadd.f32 %v1224, %v1593
    %v1602 = vadd.f32 %v1227, %v1593
    %v1603 = vadd.f32 %v1230, %v1593
    %v1604 = vadd.f32 %v1233, %v1593
    %v1605 = vadd.f32 %v1236, %v1593
    %v1606 = vadd.f32 %v1239, %v1593
    %v1607 = vadd.f32 %v1242, %v1593
    %v1608 = vadd.f32 %v1245, %v1593
    %v1609 = vadd.f32 %v1248, %v1593
    %v1610 = vadd.f32 %v1251, %v1593
    %v1611 = vadd.f32 %v1254, %v1593
    %v1612 = vadd.f32 %v1257, %v1593
    %v1613 = vadd.f32 %v1260, %v1593
    %v1614 = vadd.f32 %v1263, %v1593
    %v1615 = vadd.f32 %v1266, %v1593
    %v1616 = vadd.f32 %v1269, %v1593
    %v1617 = vadd.f32 %v1272, %v1593
    %v1618 = vadd.f32 %v1275, %v1593
    %v1619 = vadd.f32 %v1278, %v1593
    %v1620 = vadd.f32 %v1281, %v1593
    %v1621 = vadd.f32 %v1284, %v1593
    %v1622 = vadd.f32 %v1287, %v1593
    %v1623 = vadd.f32 %v1290, %v1593
    %v1624 = vadd.f32 %v1293, %v1593
    %v1625 = vadd.f32 %v1296, %v1593
    %v1626 = vadd.f32 %v1299, %v1593
    %v1627 = vadd.f32 %v1302, %v1593
    %v1628 = vadd.f32 %v1305, %v1593
    %v1629 = vadd.f32 %v1308, %v1593
    %v1630 = vadd.f32 %v1311, %v1593
    %v1631 = vadd.f32 %v1314, %v1593
    %v1632 = vadd.f32 %v1317, %v1593
    %v1633 = vadd.f32 %v1320, %v1593
    %v1634 = vadd.f32 %v1323, %v1593
    %v1635 = vadd.f32 %v1326, %v1593
    %v1636 = vadd.f32 %v1329, %v1593
    %v1637 = vadd.f32 %v1332, %v1593
    %v1638 = vadd.f32 %v1335, %v1593
    %v1639 = vadd.f32 %v1338, %v1593
    %v1640 = vadd.f32 %v1341, %v1593
    %v1641 = vadd.f32 %v1344, %v1593
    %v1642 = vadd.f32 %v1347, %v1593
    %v1643 = vadd.f32 %v1350, %v1593
    %v1644 = vadd.f32 %v1353, %v1593
    %v1645 = vadd.f32 %v1356, %v1593
    %v1646 = vadd.f32 %v1359, %v1593
    %v1647 = vadd.f32 %v1362, %v1593
    %v1648 = vadd.f32 %v1365, %v1593
    %v1649 = vadd.f32 %v1368, %v1593
    %v1650 = vadd.f32 %v1371, %v1593
    %v1651 = vadd.f32 %v1374, %v1593
    %v1652 = vadd.f32 %v1377, %v1593
    %v1653 = vadd.f32 %v1380, %v1593
    %v1654 = vadd.f32 %v1383, %v1593
    %v1655 = vadd.f32 %v1386, %v1593
    %v1656 = vadd.f32 %v1389, %v1593
    %v1657 = vadd.f32 %v1392, %v1593
    %v1658 = vadd.f32 %v1395, %v1593
    %v1659 = vadd.f32 %v1398, %v1593
    %v1660 = vadd.f32 %v1401, %v1593
    %v1661 = vadd.f32 %v1404, %v1593
    %v1662 = vadd.f32 %v1407, %v1593
    %v1663 = vadd.f32 %v1410, %v1593
    %v1664 = vadd.f32 %v1413, %v1593
    %v1665 = vadd.f32 %v1416, %v1593
    %v1666 = vadd.f32 %v1419, %v1593
    %v1667 = vadd.f32 %v1422, %v1593
    %v1668 = vadd.f32 %v1425, %v1593
    %v1669 = vadd.f32 %v1428, %v1593
    %v1670 = vadd.f32 %v1431, %v1593
    %v1671 = vadd.f32 %v1434, %v1593
    %v1672 = vadd.f32 %v1437, %v1593
    %v1673 = vadd.f32 %v1440, %v1593
    %v1674 = vadd.f32 %v1443, %v1593
    %v1675 = vadd.f32 %v1446, %v1593
    %v1676 = vadd.f32 %v1449, %v1593
    %v1677 = vadd.f32 %v1452, %v1593
    %v1678 = vadd.f32 %v1455, %v1593
    %v1679 = vadd.f32 %v1458, %v1593
    %v1680 = vadd.f32 %v1461, %v1593
    %v1681 = vadd.f32 %v1464, %v1593
    %v1682 = vadd.f32 %v1467, %v1593
    %v1683 = vadd.f32 %v1470, %v1593
    %v1684 = vadd.f32 %v1473, %v1593
    %v1685 = vadd.f32 %v1476, %v1593
    %v1686 = vadd.f32 %v1479, %v1593
    %v1687 = vadd.f32 %v1482, %v1593
    %v1688 = vadd.f32 %v1485, %v1593
    %v1689 = vadd.f32 %v1488, %v1593
    %v1690 = vadd.f32 %v1491, %v1593
    %v1691 = vadd.f32 %v1494, %v1593
    %v1692 = vadd.f32 %v1497, %v1593
    %v1693 = vadd.f32 %v1500, %v1593
    %v1694 = vadd.f32 %v1503, %v1593
    %v1695 = vadd.f32 %v1506, %v1593
    %v1696 = vadd.f32 %v1509, %v1593
    %v1697 = vadd.f32 %v1512, %v1593
    %v1698 = vadd.f32 %v1515, %v1593
    %v1699 = vadd.f32 %v1518, %v1593
    %v1700 = vadd.f32 %v1521, %v1593
    %v1701 = vadd.f32 %v1524, %v1593
    %v1702 = vadd.f32 %v1527, %v1593
    %v1703 = vadd.f32 %v1530, %v1593
    %v1704 = vadd.f32 %v1533, %v1593
    %v1705 = vadd.f32 %v1536, %v1593
    %v1706 = vadd.f32 %v1539, %v1593
    %v1707 = vadd.f32 %v1542, %v1593
    %v1708 = vadd.f32 %v1545, %v1593
    %v1709 = vadd.f32 %v1548, %v1593
    %v1710 = vadd.f32 %v1551, %v1593
    %v1711 = vadd.f32 %v1554, %v1593
    %v1712 = vadd.f32 %v1557, %v1593
    %v1713 = vadd.f32 %v1560, %v1593
    %v1714 = vadd.f32 %v1563, %v1593
    %v1715 = vadd.f32 %v1566, %v1593
    %v1716 = vadd.f32 %v1569, %v1593
    %v1717 = vadd.f32 %v1572, %v1593
    %v1718 = vadd.f32 %v1575, %v1593
    %v1719 = vadd.f32 %v1578, %v1593
    %v1720 = vadd.f32 %v1581, %v1593
    %v1721 = vadd.f32 %v1584, %v1593
    %v1722 = vadd.f32 %v1587, %v1593
    %v1723 = vxor.u32 %v1595, 2147483648
    %v1724 = vxor.u32 %v1596, 2147483648
    %v1725 = vxor.u32 %v1597, 2147483648
    %v1726 = vxor.u32 %v1598, 2147483648
    %v1727 = vxor.u32 %v1599, 2147483648
    %v1728 = vxor.u32 %v1600, 2147483648
    %v1729 = vxor.u32 %v1601, 2147483648
    %v1730 = vxor.u32 %v1602, 2147483648
    %v1731 = vxor.u32 %v1603, 2147483648
    %v1732 = vxor.u32 %v1604, 2147483648
    %v1733 = vxor.u32 %v1605, 2147483648
    %v1734 = vxor.u32 %v1606, 2147483648
    %v1735 = vxor.u32 %v1607, 2147483648
    %v1736 = vxor.u32 %v1608, 2147483648
    %v1737 = vxor.u32 %v1609, 2147483648
    %v1738 = vxor.u32 %v1610, 2147483648
    %v1739 = vxor.u32 %v1611, 2147483648
    %v1740 = vxor.u32 %v1612, 2147483648
    %v1741 = vxor.u32 %v1613, 2147483648
    %v1742 = vxor.u32 %v1614, 2147483648
    %v1743 = vxor.u32 %v1615, 2147483648
    %v1744 = vxor.u32 %v1616, 2147483648
    %v1745 = vxor.u32 %v1617, 2147483648
    %v1746 = vxor.u32 %v1618, 2147483648
    %v1747 = vxor.u32 %v1619, 2147483648
    %v1748 = vxor.u32 %v1620, 2147483648
    %v1749 = vxor.u32 %v1621, 2147483648
    %v1750 = vxor.u32 %v1622, 2147483648
    %v1751 = vxor.u32 %v1623, 2147483648
    %v1752 = vxor.u32 %v1624, 2147483648
    %v1753 = vxor.u32 %v1625, 2147483648
    %v1754 = vxor.u32 %v1626, 2147483648
    %v1755 = vxor.u32 %v1627, 2147483648
    %v1756 = vxor.u32 %v1628, 2147483648
    %v1757 = vxor.u32 %v1629, 2147483648
    %v1758 = vxor.u32 %v1630, 2147483648
    %v1759 = vxor.u32 %v1631, 2147483648
    %v1760 = vxor.u32 %v1632, 2147483648
    %v1761 = vxor.u32 %v1633, 2147483648
    %v1762 = vxor.u32 %v1634, 2147483648
    %v1763 = vxor.u32 %v1635, 2147483648
    %v1764 = vxor.u32 %v1636, 2147483648
    %v1765 = vxor.u32 %v1637, 2147483648
    %v1766 = vxor.u32 %v1638, 2147483648
    %v1767 = vxor.u32 %v1639, 2147483648
    %v1768 = vxor.u32 %v1640, 2147483648
    %v1769 = vxor.u32 %v1641, 2147483648
    %v1770 = vxor.u32 %v1642, 2147483648
    %v1771 = vxor.u32 %v1643, 2147483648
    %v1772 = vxor.u32 %v1644, 2147483648
    %v1773 = vxor.u32 %v1645, 2147483648
    %v1774 = vxor.u32 %v1646, 2147483648
    %v1775 = vxor.u32 %v1647, 2147483648
    %v1776 = vxor.u32 %v1648, 2147483648
    %v1777 = vxor.u32 %v1649, 2147483648
    %v1778 = vxor.u32 %v1650, 2147483648
    %v1779 = vxor.u32 %v1651, 2147483648
    %v1780 = vxor.u32 %v1652, 2147483648
    %v1781 = vxor.u32 %v1653, 2147483648
    %v1782 = vxor.u32 %v1654, 2147483648
    %v1783 = vxor.u32 %v1655, 2147483648
    %v1784 = vxor.u32 %v1656, 2147483648
    %v1785 = vxor.u32 %v1657, 2147483648
    %v1786 = vxor.u32 %v1658, 2147483648
    %v1787 = vxor.u32 %v1659, 2147483648
    %v1788 = vxor.u32 %v1660, 2147483648
    %v1789 = vxor.u32 %v1661, 2147483648
    %v1790 = vxor.u32 %v1662, 2147483648
    %v1791 = vxor.u32 %v1663, 2147483648
    %v1792 = vxor.u32 %v1664, 2147483648
    %v1793 = vxor.u32 %v1665, 2147483648
    %v1794 = vxor.u32 %v1666, 2147483648
    %v1795 = vxor.u32 %v1667, 2147483648
    %v1796 = vxor.u32 %v1668, 2147483648
    %v1797 = vxor.u32 %v1669, 2147483648
    %v1798 = vxor.u32 %v1670, 2147483648
    %v1799 = vxor.u32 %v1671, 2147483648
    %v1800 = vxor.u32 %v1672, 2147483648
    %v1801 = vxor.u32 %v1673, 2147483648
    %v1802 = vxor.u32 %v1674, 2147483648
    %v1803 = vxor.u32 %v1675, 2147483648
    %v1804 = vxor.u32 %v1676, 2147483648
    %v1805 = vxor.u32 %v1677, 2147483648
    %v1806 = vxor.u32 %v1678, 2147483648
    %v1807 = vxor.u32 %v1679, 2147483648
    %v1808 = vxor.u32 %v1680, 2147483648
    %v1809 = vxor.u32 %v1681, 2147483648
    %v1810 = vxor.u32 %v1682, 2147483648
    %v1811 = vxor.u32 %v1683, 2147483648
    %v1812 = vxor.u32 %v1684, 2147483648
    %v1813 = vxor.u32 %v1685, 2147483648
    %v1814 = vxor.u32 %v1686, 2147483648
    %v1815 = vxor.u32 %v1687, 2147483648
    %v1816 = vxor.u32 %v1688, 2147483648
    %v1817 = vxor.u32 %v1689, 2147483648
    %v1818 = vxor.u32 %v1690, 2147483648
    %v1819 = vxor.u32 %v1691, 2147483648
    %v1820 = vxor.u32 %v1692, 2147483648
    %v1821 = vxor.u32 %v1693, 2147483648
    %v1822 = vxor.u32 %v1694, 2147483648
    %v1823 = vxor.u32 %v1695, 2147483648
    %v1824 = vxor.u32 %v1696, 2147483648
    %v1825 = vxor.u32 %v1697, 2147483648
    %v1826 = vxor.u32 %v1698, 2147483648
    %v1827 = vxor.u32 %v1699, 2147483648
    %v1828 = vxor.u32 %v1700, 2147483648
    %v1829 = vxor.u32 %v1701, 2147483648
    %v1830 = vxor.u32 %v1702, 2147483648
    %v1831 = vxor.u32 %v1703, 2147483648
    %v1832 = vxor.u32 %v1704, 2147483648
    %v1833 = vxor.u32 %v1705, 2147483648
    %v1834 = vxor.u32 %v1706, 2147483648
    %v1835 = vxor.u32 %v1707, 2147483648
    %v1836 = vxor.u32 %v1708, 2147483648
    %v1837 = vxor.u32 %v1709, 2147483648
    %v1838 = vxor.u32 %v1710, 2147483648
    %v1839 = vxor.u32 %v1711, 2147483648
    %v1840 = vxor.u32 %v1712, 2147483648
    %v1841 = vxor.u32 %v1713, 2147483648
    %v1842 = vxor.u32 %v1714, 2147483648
    %v1843 = vxor.u32 %v1715, 2147483648
    %v1844 = vxor.u32 %v1716, 2147483648
    %v1845 = vxor.u32 %v1717, 2147483648
    %v1846 = vxor.u32 %v1718, 2147483648
    %v1847 = vxor.u32 %v1719, 2147483648
    %v1848 = vxor.u32 %v1720, 2147483648
    %v1849 = vxor.u32 %v1721, 2147483648
    %v1850 = vxor.u32 %v1722, 2147483648
    %v1851 = vmul.f32 %v1723, 1.442695
    %v1852 = vpow.pop %v1851
    %v1853 = vmul.f32 %v1724, 1.442695
    %v1854 = vpow.pop %v1853
    %v1855 = vmul.f32 %v1725, 1.442695
    %v1856 = vpow.pop %v1855
    %v1857 = vmul.f32 %v1726, 1.442695
    %v1858 = vpow.pop %v1857
    %v1859 = vmul.f32 %v1727, 1.442695
    %v1860 = vpow.pop %v1859
    %v1861 = vmul.f32 %v1728, 1.442695
    %v1862 = vpow.pop %v1861
    %v1863 = vmul.f32 %v1729, 1.442695
    %v1864 = vpow.pop %v1863
    %v1865 = vmul.f32 %v1730, 1.442695
    %v1866 = vpow.pop %v1865
    %v1867 = vmul.f32 %v1731, 1.442695
    %v1868 = vpow.pop %v1867
    %v1869 = vmul.f32 %v1732, 1.442695
    %v1870 = vpow.pop %v1869
    %v1871 = vmul.f32 %v1733, 1.442695
    %v1872 = vpow.pop %v1871
    %v1873 = vmul.f32 %v1734, 1.442695
    %v1874 = vpow.pop %v1873
    %v1875 = vmul.f32 %v1735, 1.442695
    %v1876 = vpow.pop %v1875
    %v1877 = vmul.f32 %v1736, 1.442695
    %v1878 = vpow.pop %v1877
    %v1879 = vmul.f32 %v1737, 1.442695
    %v1880 = vpow.pop %v1879
    %v1881 = vmul.f32 %v1738, 1.442695
    %v1882 = vpow.pop %v1881
    %v1883 = vmul.f32 %v1739, 1.442695
    %v1884 = vpow.pop %v1883
    %v1885 = vmul.f32 %v1740, 1.442695
    %v1886 = vpow.pop %v1885
    %v1887 = vmul.f32 %v1741, 1.442695
    %v1888 = vpow.pop %v1887
    %v1889 = vmul.f32 %v1742, 1.442695
    %v1890 = vpow.pop %v1889
    %v1891 = vmul.f32 %v1743, 1.442695
    %v1892 = vpow.pop %v1891
    %v1893 = vmul.f32 %v1744, 1.442695
    %v1894 = vpow.pop %v1893
    %v1895 = vmul.f32 %v1745, 1.442695
    %v1896 = vpow.pop %v1895
    %v1897 = vmul.f32 %v1746, 1.442695
    %v1898 = vpow.pop %v1897
    %v1899 = vmul.f32 %v1747, 1.442695
    %v1900 = vpow.pop %v1899
    %v1901 = vmul.f32 %v1748, 1.442695
    %v1902 = vpow.pop %v1901
    %v1903 = vmul.f32 %v1749, 1.442695
    %v1904 = vpow.pop %v1903
    %v1905 = vmul.f32 %v1750, 1.442695
    %v1906 = vpow.pop %v1905
    %v1907 = vmul.f32 %v1751, 1.442695
    %v1908 = vpow.pop %v1907
    %v1909 = vmul.f32 %v1752, 1.442695
    %v1910 = vpow.pop %v1909
    %v1911 = vmul.f32 %v1753, 1.442695
    %v1912 = vpow.pop %v1911
    %v1913 = vmul.f32 %v1754, 1.442695
    %v1914 = vpow.pop %v1913
    %v1915 = vmul.f32 %v1755, 1.442695
    %v1916 = vpow.pop %v1915
    %v1917 = vmul.f32 %v1756, 1.442695
    %v1918 = vpow.pop %v1917
    %v1919 = vmul.f32 %v1757, 1.442695
    %v1920 = vpow.pop %v1919
    %v1921 = vmul.f32 %v1758, 1.442695
    %v1922 = vpow.pop %v1921
    %v1923 = vmul.f32 %v1759, 1.442695
    %v1924 = vpow.pop %v1923
    %v1925 = vmul.f32 %v1760, 1.442695
    %v1926 = vpow.pop %v1925
    %v1927 = vmul.f32 %v1761, 1.442695
    %v1928 = vpow.pop %v1927
    %v1929 = vmul.f32 %v1762, 1.442695
    %v1930 = vpow.pop %v1929
    %v1931 = vmul.f32 %v1763, 1.442695
    %v1932 = vpow.pop %v1931
    %v1933 = vmul.f32 %v1764, 1.442695
    %v1934 = vpow.pop %v1933
    %v1935 = vmul.f32 %v1765, 1.442695
    %v1936 = vpow.pop %v1935
    %v1937 = vmul.f32 %v1766, 1.442695
    %v1938 = vpow.pop %v1937
    %v1939 = vmul.f32 %v1767, 1.442695
    %v1940 = vpow.pop %v1939
    %v1941 = vmul.f32 %v1768, 1.442695
    %v1942 = vpow.pop %v1941
    %v1943 = vmul.f32 %v1769, 1.442695
    %v1944 = vpow.pop %v1943
    %v1945 = vmul.f32 %v1770, 1.442695
    %v1946 = vpow.pop %v1945
    %v1947 = vmul.f32 %v1771, 1.442695
    %v1948 = vpow.pop %v1947
    %v1949 = vmul.f32 %v1772, 1.442695
    %v1950 = vpow.pop %v1949
    %v1951 = vmul.f32 %v1773, 1.442695
    %v1952 = vpow.pop %v1951
    %v1953 = vmul.f32 %v1774, 1.442695
    %v1954 = vpow.pop %v1953
    %v1955 = vmul.f32 %v1775, 1.442695
    %v1956 = vpow.pop %v1955
    %v1957 = vmul.f32 %v1776, 1.442695
    %v1958 = vpow.pop %v1957
    %v1959 = vmul.f32 %v1777, 1.442695
    %v1960 = vpow.pop %v1959
    %v1961 = vmul.f32 %v1778, 1.442695
    %v1962 = vpow.pop %v1961
    %v1963 = vmul.f32 %v1779, 1.442695
    %v1964 = vpow.pop %v1963
    %v1965 = vmul.f32 %v1780, 1.442695
    %v1966 = vpow.pop %v1965
    %v1967 = vmul.f32 %v1781, 1.442695
    %v1968 = vpow.pop %v1967
    %v1969 = vmul.f32 %v1782, 1.442695
    %v1970 = vpow.pop %v1969
    %v1971 = vmul.f32 %v1783, 1.442695
    %v1972 = vpow.pop %v1971
    %v1973 = vmul.f32 %v1784, 1.442695
    %v1974 = vpow.pop %v1973
    %v1975 = vmul.f32 %v1785, 1.442695
    %v1976 = vpow.pop %v1975
    %v1977 = vmul.f32 %v1786, 1.442695
    %v1978 = vpow.pop %v1977
    %v1979 = vmul.f32 %v1787, 1.442695
    %v1980 = vpow.pop %v1979
    %v1981 = vmul.f32 %v1788, 1.442695
    %v1982 = vpow.pop %v1981
    %v1983 = vmul.f32 %v1789, 1.442695
    %v1984 = vpow.pop %v1983
    %v1985 = vmul.f32 %v1790, 1.442695
    %v1986 = vpow.pop %v1985
    %v1987 = vmul.f32 %v1791, 1.442695
    %v1988 = vpow.pop %v1987
    %v1989 = vmul.f32 %v1792, 1.442695
    %v1990 = vpow.pop %v1989
    %v1991 = vmul.f32 %v1793, 1.442695
    %v1992 = vpow.pop %v1991
    %v1993 = vmul.f32 %v1794, 1.442695
    %v1994 = vpow.pop %v1993
    %v1995 = vmul.f32 %v1795, 1.442695
    %v1996 = vpow.pop %v1995
    %v1997 = vmul.f32 %v1796, 1.442695
    %v1998 = vpow.pop %v1997
    %v1999 = vmul.f32 %v1797, 1.442695
    %v2000 = vpow.pop %v1999
    %v2001 = vmul.f32 %v1798, 1.442695
    %v2002 = vpow.pop %v2001
    %v2003 = vmul.f32 %v1799, 1.442695
    %v2004 = vpow.pop %v2003
    %v2005 = vmul.f32 %v1800, 1.442695
    %v2006 = vpow.pop %v2005
    %v2007 = vmul.f32 %v1801, 1.442695
    %v2008 = vpow.pop %v2007
    %v2009 = vmul.f32 %v1802, 1.442695
    %v2010 = vpow.pop %v2009
    %v2011 = vmul.f32 %v1803, 1.442695
    %v2012 = vpow.pop %v2011
    %v2013 = vmul.f32 %v1804, 1.442695
    %v2014 = vpow.pop %v2013
    %v2015 = vmul.f32 %v1805, 1.442695
    %v2016 = vpow.pop %v2015
    %v2017 = vmul.f32 %v1806, 1.442695
    %v2018 = vpow.pop %v2017
    %v2019 = vmul.f32 %v1807, 1.442695
    %v2020 = vpow.pop %v2019
    %v2021 = vmul.f32 %v1808, 1.442695
    %v2022 = vpow.pop %v2021
    %v2023 = vmul.f32 %v1809, 1.442695
    %v2024 = vpow.pop %v2023
    %v2025 = vmul.f32 %v1810, 1.442695
    %v2026 = vpow.pop %v2025
    %v2027 = vmul.f32 %v1811, 1.442695
    %v2028 = vpow.pop %v2027
    %v2029 = vmul.f32 %v1812, 1.442695
    %v2030 = vpow.pop %v2029
    %v2031 = vmul.f32 %v1813, 1.442695
    %v2032 = vpow.pop %v2031
    %v2033 = vmul.f32 %v1814, 1.442695
    %v2034 = vpow.pop %v2033
    %v2035 = vmul.f32 %v1815, 1.442695
    %v2036 = vpow.pop %v2035
    %v2037 = vmul.f32 %v1816, 1.442695
    %v2038 = vpow.pop %v2037
    %v2039 = vmul.f32 %v1817, 1.442695
    %v2040 = vpow.pop %v2039
    %v2041 = vmul.f32 %v1818, 1.442695
    %v2042 = vpow.pop %v2041
    %v2043 = vmul.f32 %v1819, 1.442695
    %v2044 = vpow.pop %v2043
    %v2045 = vmul.f32 %v1820, 1.442695
    %v2046 = vpow.pop %v2045
    %v2047 = vmul.f32 %v1821, 1.442695
    %v2048 = vpow.pop %v2047
    %v2049 = vmul.f32 %v1822, 1.442695
    %v2050 = vpow.pop %v2049
    %v2051 = vmul.f32 %v1823, 1.442695
    %v2052 = vpow.pop %v2051
    %v2053 = vmul.f32 %v1824, 1.442695
    %v2054 = vpow.pop %v2053
    %v2055 = vmul.f32 %v1825, 1.442695
    %v2056 = vpow.pop %v2055
    %v2057 = vmul.f32 %v1826, 1.442695
    %v2058 = vpow.pop %v2057
    %v2059 = vmul.f32 %v1827, 1.442695
    %v2060 = vpow.pop %v2059
    %v2061 = vmul.f32 %v1828, 1.442695
    %v2062 = vpow.pop %v2061
    %v2063 = vmul.f32 %v1829, 1.442695
    %v2064 = vpow.pop %v2063
    %v2065 = vmul.f32 %v1830, 1.442695
    %v2066 = vpow.pop %v2065
    %v2067 = vmul.f32 %v1831, 1.442695
    %v2068 = vpow.pop %v2067
    %v2069 = vmul.f32 %v1832, 1.442695
    %v2070 = vpow.pop %v2069
    %v2071 = vmul.f32 %v1833, 1.442695
    %v2072 = vpow.pop %v2071
    %v2073 = vmul.f32 %v1834, 1.442695
    %v2074 = vpow.pop %v2073
    %v2075 = vmul.f32 %v1835, 1.442695
    %v2076 = vpow.pop %v2075
    %v2077 = vmul.f32 %v1836, 1.442695
    %v2078 = vpow.pop %v2077
    %v2079 = vmul.f32 %v1837, 1.442695
    %v2080 = vpow.pop %v2079
    %v2081 = vmul.f32 %v1838, 1.442695
    %v2082 = vpow.pop %v2081
    %v2083 = vmul.f32 %v1839, 1.442695
    %v2084 = vpow.pop %v2083
    %v2085 = vmul.f32 %v1840, 1.442695
    %v2086 = vpow.pop %v2085
    %v2087 = vmul.f32 %v1841, 1.442695
    %v2088 = vpow.pop %v2087
    %v2089 = vmul.f32 %v1842, 1.442695
    %v2090 = vpow.pop %v2089
    %v2091 = vmul.f32 %v1843, 1.442695
    %v2092 = vpow.pop %v2091
    %v2093 = vmul.f32 %v1844, 1.442695
    %v2094 = vpow.pop %v2093
    %v2095 = vmul.f32 %v1845, 1.442695
    %v2096 = vpow.pop %v2095
    %v2097 = vmul.f32 %v1846, 1.442695
    %v2098 = vpow.pop %v2097
    %v2099 = vmul.f32 %v1847, 1.442695
    %v2100 = vpow.pop %v2099
    %v2101 = vmul.f32 %v1848, 1.442695
    %v2102 = vpow.pop %v2101
    %v2103 = vmul.f32 %v1849, 1.442695
    %v2104 = vpow.pop %v2103
    %v2105 = vmul.f32 %v1850, 1.442695
    %v2106 = vpow.pop %v2105
    %v2107 = vadd.f32 %v1852, 1.0
    %v2108 = vadd.f32 %v1854, 1.0
    %v2109 = vadd.f32 %v1856, 1.0
    %v2110 = vadd.f32 %v1858, 1.0
    %v2111 = vadd.f32 %v1860, 1.0
    %v2112 = vadd.f32 %v1862, 1.0
    %v2113 = vadd.f32 %v1864, 1.0
    %v2114 = vadd.f32 %v1866, 1.0
    %v2115 = vadd.f32 %v1868, 1.0
    %v2116 = vadd.f32 %v1870, 1.0
    %v2117 = vadd.f32 %v1872, 1.0
    %v2118 = vadd.f32 %v1874, 1.0
    %v2119 = vadd.f32 %v1876, 1.0
    %v2120 = vadd.f32 %v1878, 1.0
    %v2121 = vadd.f32 %v1880, 1.0
    %v2122 = vadd.f32 %v1882, 1.0
    %v2123 = vadd.f32 %v1884, 1.0
    %v2124 = vadd.f32 %v1886, 1.0
    %v2125 = vadd.f32 %v1888, 1.0
    %v2126 = vadd.f32 %v1890, 1.0
    %v2127 = vadd.f32 %v1892, 1.0
    %v2128 = vadd.f32 %v1894, 1.0
    %v2129 = vadd.f32 %v1896, 1.0
    %v2130 = vadd.f32 %v1898, 1.0
    %v2131 = vadd.f32 %v1900, 1.0
    %v2132 = vadd.f32 %v1902, 1.0
    %v2133 = vadd.f32 %v1904, 1.0
    %v2134 = vadd.f32 %v1906, 1.0
    %v2135 = vadd.f32 %v1908, 1.0
    %v2136 = vadd.f32 %v1910, 1.0
    %v2137 = vadd.f32 %v1912, 1.0
    %v2138 = vadd.f32 %v1914, 1.0
    %v2139 = vadd.f32 %v1916, 1.0
    %v2140 = vadd.f32 %v1918, 1.0
    %v2141 = vadd.f32 %v1920, 1.0
    %v2142 = vadd.f32 %v1922, 1.0
    %v2143 = vadd.f32 %v1924, 1.0
    %v2144 = vadd.f32 %v1926, 1.0
    %v2145 = vadd.f32 %v1928, 1.0
    %v2146 = vadd.f32 %v1930, 1.0
    %v2147 = vadd.f32 %v1932, 1.0
    %v2148 = vadd.f32 %v1934, 1.0
    %v2149 = vadd.f32 %v1936, 1.0
    %v2150 = vadd.f32 %v1938, 1.0
    %v2151 = vadd.f32 %v1940, 1.0
    %v2152 = vadd.f32 %v1942, 1.0
    %v2153 = vadd.f32 %v1944, 1.0
    %v2154 = vadd.f32 %v1946, 1.0
    %v2155 = vadd.f32 %v1948, 1.0
    %v2156 = vadd.f32 %v1950, 1.0
    %v2157 = vadd.f32 %v1952, 1.0
    %v2158 = vadd.f32 %v1954, 1.0
    %v2159 = vadd.f32 %v1956, 1.0
    %v2160 = vadd.f32 %v1958, 1.0
    %v2161 = vadd.f32 %v1960, 1.0
    %v2162 = vadd.f32 %v1962, 1.0
    %v2163 = vadd.f32 %v1964, 1.0
    %v2164 = vadd.f32 %v1966, 1.0
    %v2165 = vadd.f32 %v1968, 1.0
    %v2166 = vadd.f32 %v1970, 1.0
    %v2167 = vadd.f32 %v1972, 1.0
    %v2168 = vadd.f32 %v1974, 1.0
    %v2169 = vadd.f32 %v1976, 1.0
    %v2170 = vadd.f32 %v1978, 1.0
    %v2171 = vadd.f32 %v1980, 1.0
    %v2172 = vadd.f32 %v1982, 1.0
    %v2173 = vadd.f32 %v1984, 1.0
    %v2174 = vadd.f32 %v1986, 1.0
    %v2175 = vadd.f32 %v1988, 1.0
    %v2176 = vadd.f32 %v1990, 1.0
    %v2177 = vadd.f32 %v1992, 1.0
    %v2178 = vadd.f32 %v1994, 1.0
    %v2179 = vadd.f32 %v1996, 1.0
    %v2180 = vadd.f32 %v1998, 1.0
    %v2181 = vadd.f32 %v2000, 1.0
    %v2182 = vadd.f32 %v2002, 1.0
    %v2183 = vadd.f32 %v2004, 1.0
    %v2184 = vadd.f32 %v2006, 1.0
    %v2185 = vadd.f32 %v2008, 1.0
    %v2186 = vadd.f32 %v2010, 1.0
    %v2187 = vadd.f32 %v2012, 1.0
    %v2188 = vadd.f32 %v2014, 1.0
    %v2189 = vadd.f32 %v2016, 1.0
    %v2190 = vadd.f32 %v2018, 1.0
    %v2191 = vadd.f32 %v2020, 1.0
    %v2192 = vadd.f32 %v2022, 1.0
    %v2193 = vadd.f32 %v2024, 1.0
    %v2194 = vadd.f32 %v2026, 1.0
    %v2195 = vadd.f32 %v2028, 1.0
    %v2196 = vadd.f32 %v2030, 1.0
    %v2197 = vadd.f32 %v2032, 1.0
    %v2198 = vadd.f32 %v2034, 1.0
    %v2199 = vadd.f32 %v2036, 1.0
    %v2200 = vadd.f32 %v2038, 1.0
    %v2201 = vadd.f32 %v2040, 1.0
    %v2202 = vadd.f32 %v2042, 1.0
    %v2203 = vadd.f32 %v2044, 1.0
    %v2204 = vadd.f32 %v2046, 1.0
    %v2205 = vadd.f32 %v2048, 1.0
    %v2206 = vadd.f32 %v2050, 1.0
    %v2207 = vadd.f32 %v2052, 1.0
    %v2208 = vadd.f32 %v2054, 1.0
    %v2209 = vadd.f32 %v2056, 1.0
    %v2210 = vadd.f32 %v2058, 1.0
    %v2211 = vadd.f32 %v2060, 1.0
    %v2212 = vadd.f32 %v2062, 1.0
    %v2213 = vadd.f32 %v2064, 1.0
    %v2214 = vadd.f32 %v2066, 1.0
    %v2215 = vadd.f32 %v2068, 1.0
    %v2216 = vadd.f32 %v2070, 1.0
    %v2217 = vadd.f32 %v2072, 1.0
    %v2218 = vadd.f32 %v2074, 1.0
    %v2219 = vadd.f32 %v2076, 1.0
    %v2220 = vadd.f32 %v2078, 1.0
    %v2221 = vadd.f32 %v2080, 1.0
    %v2222 = vadd.f32 %v2082, 1.0
    %v2223 = vadd.f32 %v2084, 1.0
    %v2224 = vadd.f32 %v2086, 1.0
    %v2225 = vadd.f32 %v2088, 1.0
    %v2226 = vadd.f32 %v2090, 1.0
    %v2227 = vadd.f32 %v2092, 1.0
    %v2228 = vadd.f32 %v2094, 1.0
    %v2229 = vadd.f32 %v2096, 1.0
    %v2230 = vadd.f32 %v2098, 1.0
    %v2231 = vadd.f32 %v2100, 1.0
    %v2232 = vadd.f32 %v2102, 1.0
    %v2233 = vadd.f32 %v2104, 1.0
    %v2234 = vadd.f32 %v2106, 1.0
    %v2235 = vrcp.pop %v2107
    %v2236 = vmul.f32 %v2107, %v2235
    %v2237 = vsub.f32 1.0, %v2236
    %v2238 = vmul.f32 %v2235, %v2237
    %v2239 = vadd.f32 %v2235, %v2238
    %vm2240 = vweird.f32 %v2107
    %vm2241 = vweird.f32 %v2235
    %vm2242 = vmor %vm2240, %vm2241
    %v2243 = vsel %vm2242, %v2235, %v2239
    %v2244 = vand.u32 2147483647, %v2107
    %vm2245 = vcmp.eq.f32.partialorder %v2244, 8.507059e+37
    %v2246 = vand.u32 %v2107, 2147483648
    %v2247 = vor.u32 1.1754944e-38, %v2246
    %v2248 = vsel %vm2245, %v2247, %v2243
    %v2249 = vmul.f32 1.0, %v2248
    %v2250 = vrcp.pop %v2108
    %v2251 = vmul.f32 %v2108, %v2250
    %v2252 = vsub.f32 1.0, %v2251
    %v2253 = vmul.f32 %v2250, %v2252
    %v2254 = vadd.f32 %v2250, %v2253
    %vm2255 = vweird.f32 %v2108
    %vm2256 = vweird.f32 %v2250
    %vm2257 = vmor %vm2255, %vm2256
    %v2258 = vsel %vm2257, %v2250, %v2254
    %v2259 = vand.u32 2147483647, %v2108
    %vm2260 = vcmp.eq.f32.partialorder %v2259, 8.507059e+37
    %v2261 = vand.u32 %v2108, 2147483648
    %v2262 = vor.u32 1.1754944e-38, %v2261
    %v2263 = vsel %vm2260, %v2262, %v2258
    %v2264 = vmul.f32 1.0, %v2263
    %v2265 = vrcp.pop %v2109
    %v2266 = vmul.f32 %v2109, %v2265
    %v2267 = vsub.f32 1.0, %v2266
    %v2268 = vmul.f32 %v2265, %v2267
    %v2269 = vadd.f32 %v2265, %v2268
    %vm2270 = vweird.f32 %v2109
    %vm2271 = vweird.f32 %v2265
    %vm2272 = vmor %vm2270, %vm2271
    %v2273 = vsel %vm2272, %v2265, %v2269
    %v2274 = vand.u32 2147483647, %v2109
    %vm2275 = vcmp.eq.f32.partialorder %v2274, 8.507059e+37
    %v2276 = vand.u32 %v2109, 2147483648
    %v2277 = vor.u32 1.1754944e-38, %v2276
    %v2278 = vsel %vm2275, %v2277, %v2273
    %v2279 = vmul.f32 1.0, %v2278
    %v2280 = vrcp.pop %v2110
    %v2281 = vmul.f32 %v2110, %v2280
    %v2282 = vsub.f32 1.0, %v2281
    %v2283 = vmul.f32 %v2280, %v2282
    %v2284 = vadd.f32 %v2280, %v2283
    %vm2285 = vweird.f32 %v2110
    %vm2286 = vweird.f32 %v2280
    %vm2287 = vmor %vm2285, %vm2286
    %v2288 = vsel %vm2287, %v2280, %v2284
    %v2289 = vand.u32 2147483647, %v2110
    %vm2290 = vcmp.eq.f32.partialorder %v2289, 8.507059e+37
    %v2291 = vand.u32 %v2110, 2147483648
    %v2292 = vor.u32 1.1754944e-38, %v2291
    %v2293 = vsel %vm2290, %v2292, %v2288
    %v2294 = vmul.f32 1.0, %v2293
    %v2295 = vrcp.pop %v2111
    %v2296 = vmul.f32 %v2111, %v2295
    %v2297 = vsub.f32 1.0, %v2296
    %v2298 = vmul.f32 %v2295, %v2297
    %v2299 = vadd.f32 %v2295, %v2298
    %vm2300 = vweird.f32 %v2111
    %vm2301 = vweird.f32 %v2295
    %vm2302 = vmor %vm2300, %vm2301
    %v2303 = vsel %vm2302, %v2295, %v2299
    %v2304 = vand.u32 2147483647, %v2111
    %vm2305 = vcmp.eq.f32.partialorder %v2304, 8.507059e+37
    %v2306 = vand.u32 %v2111, 2147483648
    %v2307 = vor.u32 1.1754944e-38, %v2306
    %v2308 = vsel %vm2305, %v2307, %v2303
    %v2309 = vmul.f32 1.0, %v2308
    %v2310 = vrcp.pop %v2112
    %v2311 = vmul.f32 %v2112, %v2310
    %v2312 = vsub.f32 1.0, %v2311
    %v2313 = vmul.f32 %v2310, %v2312
    %v2314 = vadd.f32 %v2310, %v2313
    %vm2315 = vweird.f32 %v2112
    %vm2316 = vweird.f32 %v2310
    %vm2317 = vmor %vm2315, %vm2316
    %v2318 = vsel %vm2317, %v2310, %v2314
    %v2319 = vand.u32 2147483647, %v2112
    %vm2320 = vcmp.eq.f32.partialorder %v2319, 8.507059e+37
    %v2321 = vand.u32 %v2112, 2147483648
    %v2322 = vor.u32 1.1754944e-38, %v2321
    %v2323 = vsel %vm2320, %v2322, %v2318
    %v2324 = vmul.f32 1.0, %v2323
    %v2325 = vrcp.pop %v2113
    %v2326 = vmul.f32 %v2113, %v2325
    %v2327 = vsub.f32 1.0, %v2326
    %v2328 = vmul.f32 %v2325, %v2327
    %v2329 = vadd.f32 %v2325, %v2328
    %vm2330 = vweird.f32 %v2113
    %vm2331 = vweird.f32 %v2325
    %vm2332 = vmor %vm2330, %vm2331
    %v2333 = vsel %vm2332, %v2325, %v2329
    %v2334 = vand.u32 2147483647, %v2113
    %vm2335 = vcmp.eq.f32.partialorder %v2334, 8.507059e+37
    %v2336 = vand.u32 %v2113, 2147483648
    %v2337 = vor.u32 1.1754944e-38, %v2336
    %v2338 = vsel %vm2335, %v2337, %v2333
    %v2339 = vmul.f32 1.0, %v2338
    %v2340 = vrcp.pop %v2114
    %v2341 = vmul.f32 %v2114, %v2340
    %v2342 = vsub.f32 1.0, %v2341
    %v2343 = vmul.f32 %v2340, %v2342
    %v2344 = vadd.f32 %v2340, %v2343
    %vm2345 = vweird.f32 %v2114
    %vm2346 = vweird.f32 %v2340
    %vm2347 = vmor %vm2345, %vm2346
    %v2348 = vsel %vm2347, %v2340, %v2344
    %v2349 = vand.u32 2147483647, %v2114
    %vm2350 = vcmp.eq.f32.partialorder %v2349, 8.507059e+37
    %v2351 = vand.u32 %v2114, 2147483648
    %v2352 = vor.u32 1.1754944e-38, %v2351
    %v2353 = vsel %vm2350, %v2352, %v2348
    %v2354 = vmul.f32 1.0, %v2353
    %v2355 = vrcp.pop %v2115
    %v2356 = vmul.f32 %v2115, %v2355
    %v2357 = vsub.f32 1.0, %v2356
    %v2358 = vmul.f32 %v2355, %v2357
    %v2359 = vadd.f32 %v2355, %v2358
    %vm2360 = vweird.f32 %v2115
    %vm2361 = vweird.f32 %v2355
    %vm2362 = vmor %vm2360, %vm2361
    %v2363 = vsel %vm2362, %v2355, %v2359
    %v2364 = vand.u32 2147483647, %v2115
    %vm2365 = vcmp.eq.f32.partialorder %v2364, 8.507059e+37
    %v2366 = vand.u32 %v2115, 2147483648
    %v2367 = vor.u32 1.1754944e-38, %v2366
    %v2368 = vsel %vm2365, %v2367, %v2363
    %v2369 = vmul.f32 1.0, %v2368
    %v2370 = vrcp.pop %v2116
    %v2371 = vmul.f32 %v2116, %v2370
    %v2372 = vsub.f32 1.0, %v2371
    %v2373 = vmul.f32 %v2370, %v2372
    %v2374 = vadd.f32 %v2370, %v2373
    %vm2375 = vweird.f32 %v2116
    %vm2376 = vweird.f32 %v2370
    %vm2377 = vmor %vm2375, %vm2376
    %v2378 = vsel %vm2377, %v2370, %v2374
    %v2379 = vand.u32 2147483647, %v2116
    %vm2380 = vcmp.eq.f32.partialorder %v2379, 8.507059e+37
    %v2381 = vand.u32 %v2116, 2147483648
    %v2382 = vor.u32 1.1754944e-38, %v2381
    %v2383 = vsel %vm2380, %v2382, %v2378
    %v2384 = vmul.f32 1.0, %v2383
    %v2385 = vrcp.pop %v2117
    %v2386 = vmul.f32 %v2117, %v2385
    %v2387 = vsub.f32 1.0, %v2386
    %v2388 = vmul.f32 %v2385, %v2387
    %v2389 = vadd.f32 %v2385, %v2388
    %vm2390 = vweird.f32 %v2117
    %vm2391 = vweird.f32 %v2385
    %vm2392 = vmor %vm2390, %vm2391
    %v2393 = vsel %vm2392, %v2385, %v2389
    %v2394 = vand.u32 2147483647, %v2117
    %vm2395 = vcmp.eq.f32.partialorder %v2394, 8.507059e+37
    %v2396 = vand.u32 %v2117, 2147483648
    %v2397 = vor.u32 1.1754944e-38, %v2396
    %v2398 = vsel %vm2395, %v2397, %v2393
    %v2399 = vmul.f32 1.0, %v2398
    %v2400 = vrcp.pop %v2118
    %v2401 = vmul.f32 %v2118, %v2400
    %v2402 = vsub.f32 1.0, %v2401
    %v2403 = vmul.f32 %v2400, %v2402
    %v2404 = vadd.f32 %v2400, %v2403
    %vm2405 = vweird.f32 %v2118
    %vm2406 = vweird.f32 %v2400
    %vm2407 = vmor %vm2405, %vm2406
    %v2408 = vsel %vm2407, %v2400, %v2404
    %v2409 = vand.u32 2147483647, %v2118
    %vm2410 = vcmp.eq.f32.partialorder %v2409, 8.507059e+37
    %v2411 = vand.u32 %v2118, 2147483648
    %v2412 = vor.u32 1.1754944e-38, %v2411
    %v2413 = vsel %vm2410, %v2412, %v2408
    %v2414 = vmul.f32 1.0, %v2413
    %v2415 = vrcp.pop %v2119
    %v2416 = vmul.f32 %v2119, %v2415
    %v2417 = vsub.f32 1.0, %v2416
    %v2418 = vmul.f32 %v2415, %v2417
    %v2419 = vadd.f32 %v2415, %v2418
    %vm2420 = vweird.f32 %v2119
    %vm2421 = vweird.f32 %v2415
    %vm2422 = vmor %vm2420, %vm2421
    %v2423 = vsel %vm2422, %v2415, %v2419
    %v2424 = vand.u32 2147483647, %v2119
    %vm2425 = vcmp.eq.f32.partialorder %v2424, 8.507059e+37
    %v2426 = vand.u32 %v2119, 2147483648
    %v2427 = vor.u32 1.1754944e-38, %v2426
    %v2428 = vsel %vm2425, %v2427, %v2423
    %v2429 = vmul.f32 1.0, %v2428
    %v2430 = vrcp.pop %v2120
    %v2431 = vmul.f32 %v2120, %v2430
    %v2432 = vsub.f32 1.0, %v2431
    %v2433 = vmul.f32 %v2430, %v2432
    %v2434 = vadd.f32 %v2430, %v2433
    %vm2435 = vweird.f32 %v2120
    %vm2436 = vweird.f32 %v2430
    %vm2437 = vmor %vm2435, %vm2436
    %v2438 = vsel %vm2437, %v2430, %v2434
    %v2439 = vand.u32 2147483647, %v2120
    %vm2440 = vcmp.eq.f32.partialorder %v2439, 8.507059e+37
    %v2441 = vand.u32 %v2120, 2147483648
    %v2442 = vor.u32 1.1754944e-38, %v2441
    %v2443 = vsel %vm2440, %v2442, %v2438
    %v2444 = vmul.f32 1.0, %v2443
    %v2445 = vrcp.pop %v2121
    %v2446 = vmul.f32 %v2121, %v2445
    %v2447 = vsub.f32 1.0, %v2446
    %v2448 = vmul.f32 %v2445, %v2447
    %v2449 = vadd.f32 %v2445, %v2448
    %vm2450 = vweird.f32 %v2121
    %vm2451 = vweird.f32 %v2445
    %vm2452 = vmor %vm2450, %vm2451
    %v2453 = vsel %vm2452, %v2445, %v2449
    %v2454 = vand.u32 2147483647, %v2121
    %vm2455 = vcmp.eq.f32.partialorder %v2454, 8.507059e+37
    %v2456 = vand.u32 %v2121, 2147483648
    %v2457 = vor.u32 1.1754944e-38, %v2456
    %v2458 = vsel %vm2455, %v2457, %v2453
    %v2459 = vmul.f32 1.0, %v2458
    %v2460 = vrcp.pop %v2122
    %v2461 = vmul.f32 %v2122, %v2460
    %v2462 = vsub.f32 1.0, %v2461
    %v2463 = vmul.f32 %v2460, %v2462
    %v2464 = vadd.f32 %v2460, %v2463
    %vm2465 = vweird.f32 %v2122
    %vm2466 = vweird.f32 %v2460
    %vm2467 = vmor %vm2465, %vm2466
    %v2468 = vsel %vm2467, %v2460, %v2464
    %v2469 = vand.u32 2147483647, %v2122
    %vm2470 = vcmp.eq.f32.partialorder %v2469, 8.507059e+37
    %v2471 = vand.u32 %v2122, 2147483648
    %v2472 = vor.u32 1.1754944e-38, %v2471
    %v2473 = vsel %vm2470, %v2472, %v2468
    %v2474 = vmul.f32 1.0, %v2473
    %v2475 = vrcp.pop %v2123
    %v2476 = vmul.f32 %v2123, %v2475
    %v2477 = vsub.f32 1.0, %v2476
    %v2478 = vmul.f32 %v2475, %v2477
    %v2479 = vadd.f32 %v2475, %v2478
    %vm2480 = vweird.f32 %v2123
    %vm2481 = vweird.f32 %v2475
    %vm2482 = vmor %vm2480, %vm2481
    %v2483 = vsel %vm2482, %v2475, %v2479
    %v2484 = vand.u32 2147483647, %v2123
    %vm2485 = vcmp.eq.f32.partialorder %v2484, 8.507059e+37
    %v2486 = vand.u32 %v2123, 2147483648
    %v2487 = vor.u32 1.1754944e-38, %v2486
    %v2488 = vsel %vm2485, %v2487, %v2483
    %v2489 = vmul.f32 1.0, %v2488
    %v2490 = vrcp.pop %v2124
    %v2491 = vmul.f32 %v2124, %v2490
    %v2492 = vsub.f32 1.0, %v2491
    %v2493 = vmul.f32 %v2490, %v2492
    %v2494 = vadd.f32 %v2490, %v2493
    %vm2495 = vweird.f32 %v2124
    %vm2496 = vweird.f32 %v2490
    %vm2497 = vmor %vm2495, %vm2496
    %v2498 = vsel %vm2497, %v2490, %v2494
    %v2499 = vand.u32 2147483647, %v2124
    %vm2500 = vcmp.eq.f32.partialorder %v2499, 8.507059e+37
    %v2501 = vand.u32 %v2124, 2147483648
    %v2502 = vor.u32 1.1754944e-38, %v2501
    %v2503 = vsel %vm2500, %v2502, %v2498
    %v2504 = vmul.f32 1.0, %v2503
    %v2505 = vrcp.pop %v2125
    %v2506 = vmul.f32 %v2125, %v2505
    %v2507 = vsub.f32 1.0, %v2506
    %v2508 = vmul.f32 %v2505, %v2507
    %v2509 = vadd.f32 %v2505, %v2508
    %vm2510 = vweird.f32 %v2125
    %vm2511 = vweird.f32 %v2505
    %vm2512 = vmor %vm2510, %vm2511
    %v2513 = vsel %vm2512, %v2505, %v2509
    %v2514 = vand.u32 2147483647, %v2125
    %vm2515 = vcmp.eq.f32.partialorder %v2514, 8.507059e+37
    %v2516 = vand.u32 %v2125, 2147483648
    %v2517 = vor.u32 1.1754944e-38, %v2516
    %v2518 = vsel %vm2515, %v2517, %v2513
    %v2519 = vmul.f32 1.0, %v2518
    %v2520 = vrcp.pop %v2126
    %v2521 = vmul.f32 %v2126, %v2520
    %v2522 = vsub.f32 1.0, %v2521
    %v2523 = vmul.f32 %v2520, %v2522
    %v2524 = vadd.f32 %v2520, %v2523
    %vm2525 = vweird.f32 %v2126
    %vm2526 = vweird.f32 %v2520
    %vm2527 = vmor %vm2525, %vm2526
    %v2528 = vsel %vm2527, %v2520, %v2524
    %v2529 = vand.u32 2147483647, %v2126
    %vm2530 = vcmp.eq.f32.partialorder %v2529, 8.507059e+37
    %v2531 = vand.u32 %v2126, 2147483648
    %v2532 = vor.u32 1.1754944e-38, %v2531
    %v2533 = vsel %vm2530, %v2532, %v2528
    %v2534 = vmul.f32 1.0, %v2533
    %v2535 = vrcp.pop %v2127
    %v2536 = vmul.f32 %v2127, %v2535
    %v2537 = vsub.f32 1.0, %v2536
    %v2538 = vmul.f32 %v2535, %v2537
    %v2539 = vadd.f32 %v2535, %v2538
    %vm2540 = vweird.f32 %v2127
    %vm2541 = vweird.f32 %v2535
    %vm2542 = vmor %vm2540, %vm2541
    %v2543 = vsel %vm2542, %v2535, %v2539
    %v2544 = vand.u32 2147483647, %v2127
    %vm2545 = vcmp.eq.f32.partialorder %v2544, 8.507059e+37
    %v2546 = vand.u32 %v2127, 2147483648
    %v2547 = vor.u32 1.1754944e-38, %v2546
    %v2548 = vsel %vm2545, %v2547, %v2543
    %v2549 = vmul.f32 1.0, %v2548
    %v2550 = vrcp.pop %v2128
    %v2551 = vmul.f32 %v2128, %v2550
    %v2552 = vsub.f32 1.0, %v2551
    %v2553 = vmul.f32 %v2550, %v2552
    %v2554 = vadd.f32 %v2550, %v2553
    %vm2555 = vweird.f32 %v2128
    %vm2556 = vweird.f32 %v2550
    %vm2557 = vmor %vm2555, %vm2556
    %v2558 = vsel %vm2557, %v2550, %v2554
    %v2559 = vand.u32 2147483647, %v2128
    %vm2560 = vcmp.eq.f32.partialorder %v2559, 8.507059e+37
    %v2561 = vand.u32 %v2128, 2147483648
    %v2562 = vor.u32 1.1754944e-38, %v2561
    %v2563 = vsel %vm2560, %v2562, %v2558
    %v2564 = vmul.f32 1.0, %v2563
    %v2565 = vrcp.pop %v2129
    %v2566 = vmul.f32 %v2129, %v2565
    %v2567 = vsub.f32 1.0, %v2566
    %v2568 = vmul.f32 %v2565, %v2567
    %v2569 = vadd.f32 %v2565, %v2568
    %vm2570 = vweird.f32 %v2129
    %vm2571 = vweird.f32 %v2565
    %vm2572 = vmor %vm2570, %vm2571
    %v2573 = vsel %vm2572, %v2565, %v2569
    %v2574 = vand.u32 2147483647, %v2129
    %vm2575 = vcmp.eq.f32.partialorder %v2574, 8.507059e+37
    %v2576 = vand.u32 %v2129, 2147483648
    %v2577 = vor.u32 1.1754944e-38, %v2576
    %v2578 = vsel %vm2575, %v2577, %v2573
    %v2579 = vmul.f32 1.0, %v2578
    %v2580 = vrcp.pop %v2130
    %v2581 = vmul.f32 %v2130, %v2580
    %v2582 = vsub.f32 1.0, %v2581
    %v2583 = vmul.f32 %v2580, %v2582
    %v2584 = vadd.f32 %v2580, %v2583
    %vm2585 = vweird.f32 %v2130
    %vm2586 = vweird.f32 %v2580
    %vm2587 = vmor %vm2585, %vm2586
    %v2588 = vsel %vm2587, %v2580, %v2584
    %v2589 = vand.u32 2147483647, %v2130
    %vm2590 = vcmp.eq.f32.partialorder %v2589, 8.507059e+37
    %v2591 = vand.u32 %v2130, 2147483648
    %v2592 = vor.u32 1.1754944e-38, %v2591
    %v2593 = vsel %vm2590, %v2592, %v2588
    %v2594 = vmul.f32 1.0, %v2593
    %v2595 = vrcp.pop %v2131
    %v2596 = vmul.f32 %v2131, %v2595
    %v2597 = vsub.f32 1.0, %v2596
    %v2598 = vmul.f32 %v2595, %v2597
    %v2599 = vadd.f32 %v2595, %v2598
    %vm2600 = vweird.f32 %v2131
    %vm2601 = vweird.f32 %v2595
    %vm2602 = vmor %vm2600, %vm2601
    %v2603 = vsel %vm2602, %v2595, %v2599
    %v2604 = vand.u32 2147483647, %v2131
    %vm2605 = vcmp.eq.f32.partialorder %v2604, 8.507059e+37
    %v2606 = vand.u32 %v2131, 2147483648
    %v2607 = vor.u32 1.1754944e-38, %v2606
    %v2608 = vsel %vm2605, %v2607, %v2603
    %v2609 = vmul.f32 1.0, %v2608
    %v2610 = vrcp.pop %v2132
    %v2611 = vmul.f32 %v2132, %v2610
    %v2612 = vsub.f32 1.0, %v2611
    %v2613 = vmul.f32 %v2610, %v2612
    %v2614 = vadd.f32 %v2610, %v2613
    %vm2615 = vweird.f32 %v2132
    %vm2616 = vweird.f32 %v2610
    %vm2617 = vmor %vm2615, %vm2616
    %v2618 = vsel %vm2617, %v2610, %v2614
    %v2619 = vand.u32 2147483647, %v2132
    %vm2620 = vcmp.eq.f32.partialorder %v2619, 8.507059e+37
    %v2621 = vand.u32 %v2132, 2147483648
    %v2622 = vor.u32 1.1754944e-38, %v2621
    %v2623 = vsel %vm2620, %v2622, %v2618
    %v2624 = vmul.f32 1.0, %v2623
    %v2625 = vrcp.pop %v2133
    %v2626 = vmul.f32 %v2133, %v2625
    %v2627 = vsub.f32 1.0, %v2626
    %v2628 = vmul.f32 %v2625, %v2627
    %v2629 = vadd.f32 %v2625, %v2628
    %vm2630 = vweird.f32 %v2133
    %vm2631 = vweird.f32 %v2625
    %vm2632 = vmor %vm2630, %vm2631
    %v2633 = vsel %vm2632, %v2625, %v2629
    %v2634 = vand.u32 2147483647, %v2133
    %vm2635 = vcmp.eq.f32.partialorder %v2634, 8.507059e+37
    %v2636 = vand.u32 %v2133, 2147483648
    %v2637 = vor.u32 1.1754944e-38, %v2636
    %v2638 = vsel %vm2635, %v2637, %v2633
    %v2639 = vmul.f32 1.0, %v2638
    %v2640 = vrcp.pop %v2134
    %v2641 = vmul.f32 %v2134, %v2640
    %v2642 = vsub.f32 1.0, %v2641
    %v2643 = vmul.f32 %v2640, %v2642
    %v2644 = vadd.f32 %v2640, %v2643
    %vm2645 = vweird.f32 %v2134
    %vm2646 = vweird.f32 %v2640
    %vm2647 = vmor %vm2645, %vm2646
    %v2648 = vsel %vm2647, %v2640, %v2644
    %v2649 = vand.u32 2147483647, %v2134
    %vm2650 = vcmp.eq.f32.partialorder %v2649, 8.507059e+37
    %v2651 = vand.u32 %v2134, 2147483648
    %v2652 = vor.u32 1.1754944e-38, %v2651
    %v2653 = vsel %vm2650, %v2652, %v2648
    %v2654 = vmul.f32 1.0, %v2653
    %v2655 = vrcp.pop %v2135
    %v2656 = vmul.f32 %v2135, %v2655
    %v2657 = vsub.f32 1.0, %v2656
    %v2658 = vmul.f32 %v2655, %v2657
    %v2659 = vadd.f32 %v2655, %v2658
    %vm2660 = vweird.f32 %v2135
    %vm2661 = vweird.f32 %v2655
    %vm2662 = vmor %vm2660, %vm2661
    %v2663 = vsel %vm2662, %v2655, %v2659
    %v2664 = vand.u32 2147483647, %v2135
    %vm2665 = vcmp.eq.f32.partialorder %v2664, 8.507059e+37
    %v2666 = vand.u32 %v2135, 2147483648
    %v2667 = vor.u32 1.1754944e-38, %v2666
    %v2668 = vsel %vm2665, %v2667, %v2663
    %v2669 = vmul.f32 1.0, %v2668
    %v2670 = vrcp.pop %v2136
    %v2671 = vmul.f32 %v2136, %v2670
    %v2672 = vsub.f32 1.0, %v2671
    %v2673 = vmul.f32 %v2670, %v2672
    %v2674 = vadd.f32 %v2670, %v2673
    %vm2675 = vweird.f32 %v2136
    %vm2676 = vweird.f32 %v2670
    %vm2677 = vmor %vm2675, %vm2676
    %v2678 = vsel %vm2677, %v2670, %v2674
    %v2679 = vand.u32 2147483647, %v2136
    %vm2680 = vcmp.eq.f32.partialorder %v2679, 8.507059e+37
    %v2681 = vand.u32 %v2136, 2147483648
    %v2682 = vor.u32 1.1754944e-38, %v2681
    %v2683 = vsel %vm2680, %v2682, %v2678
    %v2684 = vmul.f32 1.0, %v2683
    %v2685 = vrcp.pop %v2137
    %v2686 = vmul.f32 %v2137, %v2685
    %v2687 = vsub.f32 1.0, %v2686
    %v2688 = vmul.f32 %v2685, %v2687
    %v2689 = vadd.f32 %v2685, %v2688
    %vm2690 = vweird.f32 %v2137
    %vm2691 = vweird.f32 %v2685
    %vm2692 = vmor %vm2690, %vm2691
    %v2693 = vsel %vm2692, %v2685, %v2689
    %v2694 = vand.u32 2147483647, %v2137
    %vm2695 = vcmp.eq.f32.partialorder %v2694, 8.507059e+37
    %v2696 = vand.u32 %v2137, 2147483648
    %v2697 = vor.u32 1.1754944e-38, %v2696
    %v2698 = vsel %vm2695, %v2697, %v2693
    %v2699 = vmul.f32 1.0, %v2698
    %v2700 = vrcp.pop %v2138
    %v2701 = vmul.f32 %v2138, %v2700
    %v2702 = vsub.f32 1.0, %v2701
    %v2703 = vmul.f32 %v2700, %v2702
    %v2704 = vadd.f32 %v2700, %v2703
    %vm2705 = vweird.f32 %v2138
    %vm2706 = vweird.f32 %v2700
    %vm2707 = vmor %vm2705, %vm2706
    %v2708 = vsel %vm2707, %v2700, %v2704
    %v2709 = vand.u32 2147483647, %v2138
    %vm2710 = vcmp.eq.f32.partialorder %v2709, 8.507059e+37
    %v2711 = vand.u32 %v2138, 2147483648
    %v2712 = vor.u32 1.1754944e-38, %v2711
    %v2713 = vsel %vm2710, %v2712, %v2708
    %v2714 = vmul.f32 1.0, %v2713
    %v2715 = vrcp.pop %v2139
    %v2716 = vmul.f32 %v2139, %v2715
    %v2717 = vsub.f32 1.0, %v2716
    %v2718 = vmul.f32 %v2715, %v2717
    %v2719 = vadd.f32 %v2715, %v2718
    %vm2720 = vweird.f32 %v2139
    %vm2721 = vweird.f32 %v2715
    %vm2722 = vmor %vm2720, %vm2721
    %v2723 = vsel %vm2722, %v2715, %v2719
    %v2724 = vand.u32 2147483647, %v2139
    %vm2725 = vcmp.eq.f32.partialorder %v2724, 8.507059e+37
    %v2726 = vand.u32 %v2139, 2147483648
    %v2727 = vor.u32 1.1754944e-38, %v2726
    %v2728 = vsel %vm2725, %v2727, %v2723
    %v2729 = vmul.f32 1.0, %v2728
    %v2730 = vrcp.pop %v2140
    %v2731 = vmul.f32 %v2140, %v2730
    %v2732 = vsub.f32 1.0, %v2731
    %v2733 = vmul.f32 %v2730, %v2732
    %v2734 = vadd.f32 %v2730, %v2733
    %vm2735 = vweird.f32 %v2140
    %vm2736 = vweird.f32 %v2730
    %vm2737 = vmor %vm2735, %vm2736
    %v2738 = vsel %vm2737, %v2730, %v2734
    %v2739 = vand.u32 2147483647, %v2140
    %vm2740 = vcmp.eq.f32.partialorder %v2739, 8.507059e+37
    %v2741 = vand.u32 %v2140, 2147483648
    %v2742 = vor.u32 1.1754944e-38, %v2741
    %v2743 = vsel %vm2740, %v2742, %v2738
    %v2744 = vmul.f32 1.0, %v2743
    %v2745 = vrcp.pop %v2141
    %v2746 = vmul.f32 %v2141, %v2745
    %v2747 = vsub.f32 1.0, %v2746
    %v2748 = vmul.f32 %v2745, %v2747
    %v2749 = vadd.f32 %v2745, %v2748
    %vm2750 = vweird.f32 %v2141
    %vm2751 = vweird.f32 %v2745
    %vm2752 = vmor %vm2750, %vm2751
    %v2753 = vsel %vm2752, %v2745, %v2749
    %v2754 = vand.u32 2147483647, %v2141
    %vm2755 = vcmp.eq.f32.partialorder %v2754, 8.507059e+37
    %v2756 = vand.u32 %v2141, 2147483648
    %v2757 = vor.u32 1.1754944e-38, %v2756
    %v2758 = vsel %vm2755, %v2757, %v2753
    %v2759 = vmul.f32 1.0, %v2758
    %v2760 = vrcp.pop %v2142
    %v2761 = vmul.f32 %v2142, %v2760
    %v2762 = vsub.f32 1.0, %v2761
    %v2763 = vmul.f32 %v2760, %v2762
    %v2764 = vadd.f32 %v2760, %v2763
    %vm2765 = vweird.f32 %v2142
    %vm2766 = vweird.f32 %v2760
    %vm2767 = vmor %vm2765, %vm2766
    %v2768 = vsel %vm2767, %v2760, %v2764
    %v2769 = vand.u32 2147483647, %v2142
    %vm2770 = vcmp.eq.f32.partialorder %v2769, 8.507059e+37
    %v2771 = vand.u32 %v2142, 2147483648
    %v2772 = vor.u32 1.1754944e-38, %v2771
    %v2773 = vsel %vm2770, %v2772, %v2768
    %v2774 = vmul.f32 1.0, %v2773
    %v2775 = vrcp.pop %v2143
    %v2776 = vmul.f32 %v2143, %v2775
    %v2777 = vsub.f32 1.0, %v2776
    %v2778 = vmul.f32 %v2775, %v2777
    %v2779 = vadd.f32 %v2775, %v2778
    %vm2780 = vweird.f32 %v2143
    %vm2781 = vweird.f32 %v2775
    %vm2782 = vmor %vm2780, %vm2781
    %v2783 = vsel %vm2782, %v2775, %v2779
    %v2784 = vand.u32 2147483647, %v2143
    %vm2785 = vcmp.eq.f32.partialorder %v2784, 8.507059e+37
    %v2786 = vand.u32 %v2143, 2147483648
    %v2787 = vor.u32 1.1754944e-38, %v2786
    %v2788 = vsel %vm2785, %v2787, %v2783
    %v2789 = vmul.f32 1.0, %v2788
    %v2790 = vrcp.pop %v2144
    %v2791 = vmul.f32 %v2144, %v2790
    %v2792 = vsub.f32 1.0, %v2791
    %v2793 = vmul.f32 %v2790, %v2792
    %v2794 = vadd.f32 %v2790, %v2793
    %vm2795 = vweird.f32 %v2144
    %vm2796 = vweird.f32 %v2790
    %vm2797 = vmor %vm2795, %vm2796
    %v2798 = vsel %vm2797, %v2790, %v2794
    %v2799 = vand.u32 2147483647, %v2144
    %vm2800 = vcmp.eq.f32.partialorder %v2799, 8.507059e+37
    %v2801 = vand.u32 %v2144, 2147483648
    %v2802 = vor.u32 1.1754944e-38, %v2801
    %v2803 = vsel %vm2800, %v2802, %v2798
    %v2804 = vmul.f32 1.0, %v2803
    %v2805 = vrcp.pop %v2145
    %v2806 = vmul.f32 %v2145, %v2805
    %v2807 = vsub.f32 1.0, %v2806
    %v2808 = vmul.f32 %v2805, %v2807
    %v2809 = vadd.f32 %v2805, %v2808
    %vm2810 = vweird.f32 %v2145
    %vm2811 = vweird.f32 %v2805
    %vm2812 = vmor %vm2810, %vm2811
    %v2813 = vsel %vm2812, %v2805, %v2809
    %v2814 = vand.u32 2147483647, %v2145
    %vm2815 = vcmp.eq.f32.partialorder %v2814, 8.507059e+37
    %v2816 = vand.u32 %v2145, 2147483648
    %v2817 = vor.u32 1.1754944e-38, %v2816
    %v2818 = vsel %vm2815, %v2817, %v2813
    %v2819 = vmul.f32 1.0, %v2818
    %v2820 = vrcp.pop %v2146
    %v2821 = vmul.f32 %v2146, %v2820
    %v2822 = vsub.f32 1.0, %v2821
    %v2823 = vmul.f32 %v2820, %v2822
    %v2824 = vadd.f32 %v2820, %v2823
    %vm2825 = vweird.f32 %v2146
    %vm2826 = vweird.f32 %v2820
    %vm2827 = vmor %vm2825, %vm2826
    %v2828 = vsel %vm2827, %v2820, %v2824
    %v2829 = vand.u32 2147483647, %v2146
    %vm2830 = vcmp.eq.f32.partialorder %v2829, 8.507059e+37
    %v2831 = vand.u32 %v2146, 2147483648
    %v2832 = vor.u32 1.1754944e-38, %v2831
    %v2833 = vsel %vm2830, %v2832, %v2828
    %v2834 = vmul.f32 1.0, %v2833
    %v2835 = vrcp.pop %v2147
    %v2836 = vmul.f32 %v2147, %v2835
    %v2837 = vsub.f32 1.0, %v2836
    %v2838 = vmul.f32 %v2835, %v2837
    %v2839 = vadd.f32 %v2835, %v2838
    %vm2840 = vweird.f32 %v2147
    %vm2841 = vweird.f32 %v2835
    %vm2842 = vmor %vm2840, %vm2841
    %v2843 = vsel %vm2842, %v2835, %v2839
    %v2844 = vand.u32 2147483647, %v2147
    %vm2845 = vcmp.eq.f32.partialorder %v2844, 8.507059e+37
    %v2846 = vand.u32 %v2147, 2147483648
    %v2847 = vor.u32 1.1754944e-38, %v2846
    %v2848 = vsel %vm2845, %v2847, %v2843
    %v2849 = vmul.f32 1.0, %v2848
    %v2850 = vrcp.pop %v2148
    %v2851 = vmul.f32 %v2148, %v2850
    %v2852 = vsub.f32 1.0, %v2851
    %v2853 = vmul.f32 %v2850, %v2852
    %v2854 = vadd.f32 %v2850, %v2853
    %vm2855 = vweird.f32 %v2148
    %vm2856 = vweird.f32 %v2850
    %vm2857 = vmor %vm2855, %vm2856
    %v2858 = vsel %vm2857, %v2850, %v2854
    %v2859 = vand.u32 2147483647, %v2148
    %vm2860 = vcmp.eq.f32.partialorder %v2859, 8.507059e+37
    %v2861 = vand.u32 %v2148, 2147483648
    %v2862 = vor.u32 1.1754944e-38, %v2861
    %v2863 = vsel %vm2860, %v2862, %v2858
    %v2864 = vmul.f32 1.0, %v2863
    %v2865 = vrcp.pop %v2149
    %v2866 = vmul.f32 %v2149, %v2865
    %v2867 = vsub.f32 1.0, %v2866
    %v2868 = vmul.f32 %v2865, %v2867
    %v2869 = vadd.f32 %v2865, %v2868
    %vm2870 = vweird.f32 %v2149
    %vm2871 = vweird.f32 %v2865
    %vm2872 = vmor %vm2870, %vm2871
    %v2873 = vsel %vm2872, %v2865, %v2869
    %v2874 = vand.u32 2147483647, %v2149
    %vm2875 = vcmp.eq.f32.partialorder %v2874, 8.507059e+37
    %v2876 = vand.u32 %v2149, 2147483648
    %v2877 = vor.u32 1.1754944e-38, %v2876
    %v2878 = vsel %vm2875, %v2877, %v2873
    %v2879 = vmul.f32 1.0, %v2878
    %v2880 = vrcp.pop %v2150
    %v2881 = vmul.f32 %v2150, %v2880
    %v2882 = vsub.f32 1.0, %v2881
    %v2883 = vmul.f32 %v2880, %v2882
    %v2884 = vadd.f32 %v2880, %v2883
    %vm2885 = vweird.f32 %v2150
    %vm2886 = vweird.f32 %v2880
    %vm2887 = vmor %vm2885, %vm2886
    %v2888 = vsel %vm2887, %v2880, %v2884
    %v2889 = vand.u32 2147483647, %v2150
    %vm2890 = vcmp.eq.f32.partialorder %v2889, 8.507059e+37
    %v2891 = vand.u32 %v2150, 2147483648
    %v2892 = vor.u32 1.1754944e-38, %v2891
    %v2893 = vsel %vm2890, %v2892, %v2888
    %v2894 = vmul.f32 1.0, %v2893
    %v2895 = vrcp.pop %v2151
    %v2896 = vmul.f32 %v2151, %v2895
    %v2897 = vsub.f32 1.0, %v2896
    %v2898 = vmul.f32 %v2895, %v2897
    %v2899 = vadd.f32 %v2895, %v2898
    %vm2900 = vweird.f32 %v2151
    %vm2901 = vweird.f32 %v2895
    %vm2902 = vmor %vm2900, %vm2901
    %v2903 = vsel %vm2902, %v2895, %v2899
    %v2904 = vand.u32 2147483647, %v2151
    %vm2905 = vcmp.eq.f32.partialorder %v2904, 8.507059e+37
    %v2906 = vand.u32 %v2151, 2147483648
    %v2907 = vor.u32 1.1754944e-38, %v2906
    %v2908 = vsel %vm2905, %v2907, %v2903
    %v2909 = vmul.f32 1.0, %v2908
    %v2910 = vrcp.pop %v2152
    %v2911 = vmul.f32 %v2152, %v2910
    %v2912 = vsub.f32 1.0, %v2911
    %v2913 = vmul.f32 %v2910, %v2912
    %v2914 = vadd.f32 %v2910, %v2913
    %vm2915 = vweird.f32 %v2152
    %vm2916 = vweird.f32 %v2910
    %vm2917 = vmor %vm2915, %vm2916
    %v2918 = vsel %vm2917, %v2910, %v2914
    %v2919 = vand.u32 2147483647, %v2152
    %vm2920 = vcmp.eq.f32.partialorder %v2919, 8.507059e+37
    %v2921 = vand.u32 %v2152, 2147483648
    %v2922 = vor.u32 1.1754944e-38, %v2921
    %v2923 = vsel %vm2920, %v2922, %v2918
    %v2924 = vmul.f32 1.0, %v2923
    %v2925 = vrcp.pop %v2153
    %v2926 = vmul.f32 %v2153, %v2925
    %v2927 = vsub.f32 1.0, %v2926
    %v2928 = vmul.f32 %v2925, %v2927
    %v2929 = vadd.f32 %v2925, %v2928
    %vm2930 = vweird.f32 %v2153
    %vm2931 = vweird.f32 %v2925
    %vm2932 = vmor %vm2930, %vm2931
    %v2933 = vsel %vm2932, %v2925, %v2929
    %v2934 = vand.u32 2147483647, %v2153
    %vm2935 = vcmp.eq.f32.partialorder %v2934, 8.507059e+37
    %v2936 = vand.u32 %v2153, 2147483648
    %v2937 = vor.u32 1.1754944e-38, %v2936
    %v2938 = vsel %vm2935, %v2937, %v2933
    %v2939 = vmul.f32 1.0, %v2938
    %v2940 = vrcp.pop %v2154
    %v2941 = vmul.f32 %v2154, %v2940
    %v2942 = vsub.f32 1.0, %v2941
    %v2943 = vmul.f32 %v2940, %v2942
    %v2944 = vadd.f32 %v2940, %v2943
    %vm2945 = vweird.f32 %v2154
    %vm2946 = vweird.f32 %v2940
    %vm2947 = vmor %vm2945, %vm2946
    %v2948 = vsel %vm2947, %v2940, %v2944
    %v2949 = vand.u32 2147483647, %v2154
    %vm2950 = vcmp.eq.f32.partialorder %v2949, 8.507059e+37
    %v2951 = vand.u32 %v2154, 2147483648
    %v2952 = vor.u32 1.1754944e-38, %v2951
    %v2953 = vsel %vm2950, %v2952, %v2948
    %v2954 = vmul.f32 1.0, %v2953
    %v2955 = vrcp.pop %v2155
    %v2956 = vmul.f32 %v2155, %v2955
    %v2957 = vsub.f32 1.0, %v2956
    %v2958 = vmul.f32 %v2955, %v2957
    %v2959 = vadd.f32 %v2955, %v2958
    %vm2960 = vweird.f32 %v2155
    %vm2961 = vweird.f32 %v2955
    %vm2962 = vmor %vm2960, %vm2961
    %v2963 = vsel %vm2962, %v2955, %v2959
    %v2964 = vand.u32 2147483647, %v2155
    %vm2965 = vcmp.eq.f32.partialorder %v2964, 8.507059e+37
    %v2966 = vand.u32 %v2155, 2147483648
    %v2967 = vor.u32 1.1754944e-38, %v2966
    %v2968 = vsel %vm2965, %v2967, %v2963
    %v2969 = vmul.f32 1.0, %v2968
    %v2970 = vrcp.pop %v2156
    %v2971 = vmul.f32 %v2156, %v2970
    %v2972 = vsub.f32 1.0, %v2971
    %v2973 = vmul.f32 %v2970, %v2972
    %v2974 = vadd.f32 %v2970, %v2973
    %vm2975 = vweird.f32 %v2156
    %vm2976 = vweird.f32 %v2970
    %vm2977 = vmor %vm2975, %vm2976
    %v2978 = vsel %vm2977, %v2970, %v2974
    %v2979 = vand.u32 2147483647, %v2156
    %vm2980 = vcmp.eq.f32.partialorder %v2979, 8.507059e+37
    %v2981 = vand.u32 %v2156, 2147483648
    %v2982 = vor.u32 1.1754944e-38, %v2981
    %v2983 = vsel %vm2980, %v2982, %v2978
    %v2984 = vmul.f32 1.0, %v2983
    %v2985 = vrcp.pop %v2157
    %v2986 = vmul.f32 %v2157, %v2985
    %v2987 = vsub.f32 1.0, %v2986
    %v2988 = vmul.f32 %v2985, %v2987
    %v2989 = vadd.f32 %v2985, %v2988
    %vm2990 = vweird.f32 %v2157
    %vm2991 = vweird.f32 %v2985
    %vm2992 = vmor %vm2990, %vm2991
    %v2993 = vsel %vm2992, %v2985, %v2989
    %v2994 = vand.u32 2147483647, %v2157
    %vm2995 = vcmp.eq.f32.partialorder %v2994, 8.507059e+37
    %v2996 = vand.u32 %v2157, 2147483648
    %v2997 = vor.u32 1.1754944e-38, %v2996
    %v2998 = vsel %vm2995, %v2997, %v2993
    %v2999 = vmul.f32 1.0, %v2998
    %v3000 = vrcp.pop %v2158
    %v3001 = vmul.f32 %v2158, %v3000
    %v3002 = vsub.f32 1.0, %v3001
    %v3003 = vmul.f32 %v3000, %v3002
    %v3004 = vadd.f32 %v3000, %v3003
    %vm3005 = vweird.f32 %v2158
    %vm3006 = vweird.f32 %v3000
    %vm3007 = vmor %vm3005, %vm3006
    %v3008 = vsel %vm3007, %v3000, %v3004
    %v3009 = vand.u32 2147483647, %v2158
    %vm3010 = vcmp.eq.f32.partialorder %v3009, 8.507059e+37
    %v3011 = vand.u32 %v2158, 2147483648
    %v3012 = vor.u32 1.1754944e-38, %v3011
    %v3013 = vsel %vm3010, %v3012, %v3008
    %v3014 = vmul.f32 1.0, %v3013
    %v3015 = vrcp.pop %v2159
    %v3016 = vmul.f32 %v2159, %v3015
    %v3017 = vsub.f32 1.0, %v3016
    %v3018 = vmul.f32 %v3015, %v3017
    %v3019 = vadd.f32 %v3015, %v3018
    %vm3020 = vweird.f32 %v2159
    %vm3021 = vweird.f32 %v3015
    %vm3022 = vmor %vm3020, %vm3021
    %v3023 = vsel %vm3022, %v3015, %v3019
    %v3024 = vand.u32 2147483647, %v2159
    %vm3025 = vcmp.eq.f32.partialorder %v3024, 8.507059e+37
    %v3026 = vand.u32 %v2159, 2147483648
    %v3027 = vor.u32 1.1754944e-38, %v3026
    %v3028 = vsel %vm3025, %v3027, %v3023
    %v3029 = vmul.f32 1.0, %v3028
    %v3030 = vrcp.pop %v2160
    %v3031 = vmul.f32 %v2160, %v3030
    %v3032 = vsub.f32 1.0, %v3031
    %v3033 = vmul.f32 %v3030, %v3032
    %v3034 = vadd.f32 %v3030, %v3033
    %vm3035 = vweird.f32 %v2160
    %vm3036 = vweird.f32 %v3030
    %vm3037 = vmor %vm3035, %vm3036
    %v3038 = vsel %vm3037, %v3030, %v3034
    %v3039 = vand.u32 2147483647, %v2160
    %vm3040 = vcmp.eq.f32.partialorder %v3039, 8.507059e+37
    %v3041 = vand.u32 %v2160, 2147483648
    %v3042 = vor.u32 1.1754944e-38, %v3041
    %v3043 = vsel %vm3040, %v3042, %v3038
    %v3044 = vmul.f32 1.0, %v3043
    %v3045 = vrcp.pop %v2161
    %v3046 = vmul.f32 %v2161, %v3045
    %v3047 = vsub.f32 1.0, %v3046
    %v3048 = vmul.f32 %v3045, %v3047
    %v3049 = vadd.f32 %v3045, %v3048
    %vm3050 = vweird.f32 %v2161
    %vm3051 = vweird.f32 %v3045
    %vm3052 = vmor %vm3050, %vm3051
    %v3053 = vsel %vm3052, %v3045, %v3049
    %v3054 = vand.u32 2147483647, %v2161
    %vm3055 = vcmp.eq.f32.partialorder %v3054, 8.507059e+37
    %v3056 = vand.u32 %v2161, 2147483648
    %v3057 = vor.u32 1.1754944e-38, %v3056
    %v3058 = vsel %vm3055, %v3057, %v3053
    %v3059 = vmul.f32 1.0, %v3058
    %v3060 = vrcp.pop %v2162
    %v3061 = vmul.f32 %v2162, %v3060
    %v3062 = vsub.f32 1.0, %v3061
    %v3063 = vmul.f32 %v3060, %v3062
    %v3064 = vadd.f32 %v3060, %v3063
    %vm3065 = vweird.f32 %v2162
    %vm3066 = vweird.f32 %v3060
    %vm3067 = vmor %vm3065, %vm3066
    %v3068 = vsel %vm3067, %v3060, %v3064
    %v3069 = vand.u32 2147483647, %v2162
    %vm3070 = vcmp.eq.f32.partialorder %v3069, 8.507059e+37
    %v3071 = vand.u32 %v2162, 2147483648
    %v3072 = vor.u32 1.1754944e-38, %v3071
    %v3073 = vsel %vm3070, %v3072, %v3068
    %v3074 = vmul.f32 1.0, %v3073
    %v3075 = vrcp.pop %v2163
    %v3076 = vmul.f32 %v2163, %v3075
    %v3077 = vsub.f32 1.0, %v3076
    %v3078 = vmul.f32 %v3075, %v3077
    %v3079 = vadd.f32 %v3075, %v3078
    %vm3080 = vweird.f32 %v2163
    %vm3081 = vweird.f32 %v3075
    %vm3082 = vmor %vm3080, %vm3081
    %v3083 = vsel %vm3082, %v3075, %v3079
    %v3084 = vand.u32 2147483647, %v2163
    %vm3085 = vcmp.eq.f32.partialorder %v3084, 8.507059e+37
    %v3086 = vand.u32 %v2163, 2147483648
    %v3087 = vor.u32 1.1754944e-38, %v3086
    %v3088 = vsel %vm3085, %v3087, %v3083
    %v3089 = vmul.f32 1.0, %v3088
    %v3090 = vrcp.pop %v2164
    %v3091 = vmul.f32 %v2164, %v3090
    %v3092 = vsub.f32 1.0, %v3091
    %v3093 = vmul.f32 %v3090, %v3092
    %v3094 = vadd.f32 %v3090, %v3093
    %vm3095 = vweird.f32 %v2164
    %vm3096 = vweird.f32 %v3090
    %vm3097 = vmor %vm3095, %vm3096
    %v3098 = vsel %vm3097, %v3090, %v3094
    %v3099 = vand.u32 2147483647, %v2164
    %vm3100 = vcmp.eq.f32.partialorder %v3099, 8.507059e+37
    %v3101 = vand.u32 %v2164, 2147483648
    %v3102 = vor.u32 1.1754944e-38, %v3101
    %v3103 = vsel %vm3100, %v3102, %v3098
    %v3104 = vmul.f32 1.0, %v3103
    %v3105 = vrcp.pop %v2165
    %v3106 = vmul.f32 %v2165, %v3105
    %v3107 = vsub.f32 1.0, %v3106
    %v3108 = vmul.f32 %v3105, %v3107
    %v3109 = vadd.f32 %v3105, %v3108
    %vm3110 = vweird.f32 %v2165
    %vm3111 = vweird.f32 %v3105
    %vm3112 = vmor %vm3110, %vm3111
    %v3113 = vsel %vm3112, %v3105, %v3109
    %v3114 = vand.u32 2147483647, %v2165
    %vm3115 = vcmp.eq.f32.partialorder %v3114, 8.507059e+37
    %v3116 = vand.u32 %v2165, 2147483648
    %v3117 = vor.u32 1.1754944e-38, %v3116
    %v3118 = vsel %vm3115, %v3117, %v3113
    %v3119 = vmul.f32 1.0, %v3118
    %v3120 = vrcp.pop %v2166
    %v3121 = vmul.f32 %v2166, %v3120
    %v3122 = vsub.f32 1.0, %v3121
    %v3123 = vmul.f32 %v3120, %v3122
    %v3124 = vadd.f32 %v3120, %v3123
    %vm3125 = vweird.f32 %v2166
    %vm3126 = vweird.f32 %v3120
    %vm3127 = vmor %vm3125, %vm3126
    %v3128 = vsel %vm3127, %v3120, %v3124
    %v3129 = vand.u32 2147483647, %v2166
    %vm3130 = vcmp.eq.f32.partialorder %v3129, 8.507059e+37
    %v3131 = vand.u32 %v2166, 2147483648
    %v3132 = vor.u32 1.1754944e-38, %v3131
    %v3133 = vsel %vm3130, %v3132, %v3128
    %v3134 = vmul.f32 1.0, %v3133
    %v3135 = vrcp.pop %v2167
    %v3136 = vmul.f32 %v2167, %v3135
    %v3137 = vsub.f32 1.0, %v3136
    %v3138 = vmul.f32 %v3135, %v3137
    %v3139 = vadd.f32 %v3135, %v3138
    %vm3140 = vweird.f32 %v2167
    %vm3141 = vweird.f32 %v3135
    %vm3142 = vmor %vm3140, %vm3141
    %v3143 = vsel %vm3142, %v3135, %v3139
    %v3144 = vand.u32 2147483647, %v2167
    %vm3145 = vcmp.eq.f32.partialorder %v3144, 8.507059e+37
    %v3146 = vand.u32 %v2167, 2147483648
    %v3147 = vor.u32 1.1754944e-38, %v3146
    %v3148 = vsel %vm3145, %v3147, %v3143
    %v3149 = vmul.f32 1.0, %v3148
    %v3150 = vrcp.pop %v2168
    %v3151 = vmul.f32 %v2168, %v3150
    %v3152 = vsub.f32 1.0, %v3151
    %v3153 = vmul.f32 %v3150, %v3152
    %v3154 = vadd.f32 %v3150, %v3153
    %vm3155 = vweird.f32 %v2168
    %vm3156 = vweird.f32 %v3150
    %vm3157 = vmor %vm3155, %vm3156
    %v3158 = vsel %vm3157, %v3150, %v3154
    %v3159 = vand.u32 2147483647, %v2168
    %vm3160 = vcmp.eq.f32.partialorder %v3159, 8.507059e+37
    %v3161 = vand.u32 %v2168, 2147483648
    %v3162 = vor.u32 1.1754944e-38, %v3161
    %v3163 = vsel %vm3160, %v3162, %v3158
    %v3164 = vmul.f32 1.0, %v3163
    %v3165 = vrcp.pop %v2169
    %v3166 = vmul.f32 %v2169, %v3165
    %v3167 = vsub.f32 1.0, %v3166
    %v3168 = vmul.f32 %v3165, %v3167
    %v3169 = vadd.f32 %v3165, %v3168
    %vm3170 = vweird.f32 %v2169
    %vm3171 = vweird.f32 %v3165
    %vm3172 = vmor %vm3170, %vm3171
    %v3173 = vsel %vm3172, %v3165, %v3169
    %v3174 = vand.u32 2147483647, %v2169
    %vm3175 = vcmp.eq.f32.partialorder %v3174, 8.507059e+37
    %v3176 = vand.u32 %v2169, 2147483648
    %v3177 = vor.u32 1.1754944e-38, %v3176
    %v3178 = vsel %vm3175, %v3177, %v3173
    %v3179 = vmul.f32 1.0, %v3178
    %v3180 = vrcp.pop %v2170
    %v3181 = vmul.f32 %v2170, %v3180
    %v3182 = vsub.f32 1.0, %v3181
    %v3183 = vmul.f32 %v3180, %v3182
    %v3184 = vadd.f32 %v3180, %v3183
    %vm3185 = vweird.f32 %v2170
    %vm3186 = vweird.f32 %v3180
    %vm3187 = vmor %vm3185, %vm3186
    %v3188 = vsel %vm3187, %v3180, %v3184
    %v3189 = vand.u32 2147483647, %v2170
    %vm3190 = vcmp.eq.f32.partialorder %v3189, 8.507059e+37
    %v3191 = vand.u32 %v2170, 2147483648
    %v3192 = vor.u32 1.1754944e-38, %v3191
    %v3193 = vsel %vm3190, %v3192, %v3188
    %v3194 = vmul.f32 1.0, %v3193
    %v3195 = vrcp.pop %v2171
    %v3196 = vmul.f32 %v2171, %v3195
    %v3197 = vsub.f32 1.0, %v3196
    %v3198 = vmul.f32 %v3195, %v3197
    %v3199 = vadd.f32 %v3195, %v3198
    %vm3200 = vweird.f32 %v2171
    %vm3201 = vweird.f32 %v3195
    %vm3202 = vmor %vm3200, %vm3201
    %v3203 = vsel %vm3202, %v3195, %v3199
    %v3204 = vand.u32 2147483647, %v2171
    %vm3205 = vcmp.eq.f32.partialorder %v3204, 8.507059e+37
    %v3206 = vand.u32 %v2171, 2147483648
    %v3207 = vor.u32 1.1754944e-38, %v3206
    %v3208 = vsel %vm3205, %v3207, %v3203
    %v3209 = vmul.f32 1.0, %v3208
    %v3210 = vrcp.pop %v2172
    %v3211 = vmul.f32 %v2172, %v3210
    %v3212 = vsub.f32 1.0, %v3211
    %v3213 = vmul.f32 %v3210, %v3212
    %v3214 = vadd.f32 %v3210, %v3213
    %vm3215 = vweird.f32 %v2172
    %vm3216 = vweird.f32 %v3210
    %vm3217 = vmor %vm3215, %vm3216
    %v3218 = vsel %vm3217, %v3210, %v3214
    %v3219 = vand.u32 2147483647, %v2172
    %vm3220 = vcmp.eq.f32.partialorder %v3219, 8.507059e+37
    %v3221 = vand.u32 %v2172, 2147483648
    %v3222 = vor.u32 1.1754944e-38, %v3221
    %v3223 = vsel %vm3220, %v3222, %v3218
    %v3224 = vmul.f32 1.0, %v3223
    %v3225 = vrcp.pop %v2173
    %v3226 = vmul.f32 %v2173, %v3225
    %v3227 = vsub.f32 1.0, %v3226
    %v3228 = vmul.f32 %v3225, %v3227
    %v3229 = vadd.f32 %v3225, %v3228
    %vm3230 = vweird.f32 %v2173
    %vm3231 = vweird.f32 %v3225
    %vm3232 = vmor %vm3230, %vm3231
    %v3233 = vsel %vm3232, %v3225, %v3229
    %v3234 = vand.u32 2147483647, %v2173
    %vm3235 = vcmp.eq.f32.partialorder %v3234, 8.507059e+37
    %v3236 = vand.u32 %v2173, 2147483648
    %v3237 = vor.u32 1.1754944e-38, %v3236
    %v3238 = vsel %vm3235, %v3237, %v3233
    %v3239 = vmul.f32 1.0, %v3238
    %v3240 = vrcp.pop %v2174
    %v3241 = vmul.f32 %v2174, %v3240
    %v3242 = vsub.f32 1.0, %v3241
    %v3243 = vmul.f32 %v3240, %v3242
    %v3244 = vadd.f32 %v3240, %v3243
    %vm3245 = vweird.f32 %v2174
    %vm3246 = vweird.f32 %v3240
    %vm3247 = vmor %vm3245, %vm3246
    %v3248 = vsel %vm3247, %v3240, %v3244
    %v3249 = vand.u32 2147483647, %v2174
    %vm3250 = vcmp.eq.f32.partialorder %v3249, 8.507059e+37
    %v3251 = vand.u32 %v2174, 2147483648
    %v3252 = vor.u32 1.1754944e-38, %v3251
    %v3253 = vsel %vm3250, %v3252, %v3248
    %v3254 = vmul.f32 1.0, %v3253
    %v3255 = vrcp.pop %v2175
    %v3256 = vmul.f32 %v2175, %v3255
    %v3257 = vsub.f32 1.0, %v3256
    %v3258 = vmul.f32 %v3255, %v3257
    %v3259 = vadd.f32 %v3255, %v3258
    %vm3260 = vweird.f32 %v2175
    %vm3261 = vweird.f32 %v3255
    %vm3262 = vmor %vm3260, %vm3261
    %v3263 = vsel %vm3262, %v3255, %v3259
    %v3264 = vand.u32 2147483647, %v2175
    %vm3265 = vcmp.eq.f32.partialorder %v3264, 8.507059e+37
    %v3266 = vand.u32 %v2175, 2147483648
    %v3267 = vor.u32 1.1754944e-38, %v3266
    %v3268 = vsel %vm3265, %v3267, %v3263
    %v3269 = vmul.f32 1.0, %v3268
    %v3270 = vrcp.pop %v2176
    %v3271 = vmul.f32 %v2176, %v3270
    %v3272 = vsub.f32 1.0, %v3271
    %v3273 = vmul.f32 %v3270, %v3272
    %v3274 = vadd.f32 %v3270, %v3273
    %vm3275 = vweird.f32 %v2176
    %vm3276 = vweird.f32 %v3270
    %vm3277 = vmor %vm3275, %vm3276
    %v3278 = vsel %vm3277, %v3270, %v3274
    %v3279 = vand.u32 2147483647, %v2176
    %vm3280 = vcmp.eq.f32.partialorder %v3279, 8.507059e+37
    %v3281 = vand.u32 %v2176, 2147483648
    %v3282 = vor.u32 1.1754944e-38, %v3281
    %v3283 = vsel %vm3280, %v3282, %v3278
    %v3284 = vmul.f32 1.0, %v3283
    %v3285 = vrcp.pop %v2177
    %v3286 = vmul.f32 %v2177, %v3285
    %v3287 = vsub.f32 1.0, %v3286
    %v3288 = vmul.f32 %v3285, %v3287
    %v3289 = vadd.f32 %v3285, %v3288
    %vm3290 = vweird.f32 %v2177
    %vm3291 = vweird.f32 %v3285
    %vm3292 = vmor %vm3290, %vm3291
    %v3293 = vsel %vm3292, %v3285, %v3289
    %v3294 = vand.u32 2147483647, %v2177
    %vm3295 = vcmp.eq.f32.partialorder %v3294, 8.507059e+37
    %v3296 = vand.u32 %v2177, 2147483648
    %v3297 = vor.u32 1.1754944e-38, %v3296
    %v3298 = vsel %vm3295, %v3297, %v3293
    %v3299 = vmul.f32 1.0, %v3298
    %v3300 = vrcp.pop %v2178
    %v3301 = vmul.f32 %v2178, %v3300
    %v3302 = vsub.f32 1.0, %v3301
    %v3303 = vmul.f32 %v3300, %v3302
    %v3304 = vadd.f32 %v3300, %v3303
    %vm3305 = vweird.f32 %v2178
    %vm3306 = vweird.f32 %v3300
    %vm3307 = vmor %vm3305, %vm3306
    %v3308 = vsel %vm3307, %v3300, %v3304
    %v3309 = vand.u32 2147483647, %v2178
    %vm3310 = vcmp.eq.f32.partialorder %v3309, 8.507059e+37
    %v3311 = vand.u32 %v2178, 2147483648
    %v3312 = vor.u32 1.1754944e-38, %v3311
    %v3313 = vsel %vm3310, %v3312, %v3308
    %v3314 = vmul.f32 1.0, %v3313
    %v3315 = vrcp.pop %v2179
    %v3316 = vmul.f32 %v2179, %v3315
    %v3317 = vsub.f32 1.0, %v3316
    %v3318 = vmul.f32 %v3315, %v3317
    %v3319 = vadd.f32 %v3315, %v3318
    %vm3320 = vweird.f32 %v2179
    %vm3321 = vweird.f32 %v3315
    %vm3322 = vmor %vm3320, %vm3321
    %v3323 = vsel %vm3322, %v3315, %v3319
    %v3324 = vand.u32 2147483647, %v2179
    %vm3325 = vcmp.eq.f32.partialorder %v3324, 8.507059e+37
    %v3326 = vand.u32 %v2179, 2147483648
    %v3327 = vor.u32 1.1754944e-38, %v3326
    %v3328 = vsel %vm3325, %v3327, %v3323
    %v3329 = vmul.f32 1.0, %v3328
    %v3330 = vrcp.pop %v2180
    %v3331 = vmul.f32 %v2180, %v3330
    %v3332 = vsub.f32 1.0, %v3331
    %v3333 = vmul.f32 %v3330, %v3332
    %v3334 = vadd.f32 %v3330, %v3333
    %vm3335 = vweird.f32 %v2180
    %vm3336 = vweird.f32 %v3330
    %vm3337 = vmor %vm3335, %vm3336
    %v3338 = vsel %vm3337, %v3330, %v3334
    %v3339 = vand.u32 2147483647, %v2180
    %vm3340 = vcmp.eq.f32.partialorder %v3339, 8.507059e+37
    %v3341 = vand.u32 %v2180, 2147483648
    %v3342 = vor.u32 1.1754944e-38, %v3341
    %v3343 = vsel %vm3340, %v3342, %v3338
    %v3344 = vmul.f32 1.0, %v3343
    %v3345 = vrcp.pop %v2181
    %v3346 = vmul.f32 %v2181, %v3345
    %v3347 = vsub.f32 1.0, %v3346
    %v3348 = vmul.f32 %v3345, %v3347
    %v3349 = vadd.f32 %v3345, %v3348
    %vm3350 = vweird.f32 %v2181
    %vm3351 = vweird.f32 %v3345
    %vm3352 = vmor %vm3350, %vm3351
    %v3353 = vsel %vm3352, %v3345, %v3349
    %v3354 = vand.u32 2147483647, %v2181
    %vm3355 = vcmp.eq.f32.partialorder %v3354, 8.507059e+37
    %v3356 = vand.u32 %v2181, 2147483648
    %v3357 = vor.u32 1.1754944e-38, %v3356
    %v3358 = vsel %vm3355, %v3357, %v3353
    %v3359 = vmul.f32 1.0, %v3358
    %v3360 = vrcp.pop %v2182
    %v3361 = vmul.f32 %v2182, %v3360
    %v3362 = vsub.f32 1.0, %v3361
    %v3363 = vmul.f32 %v3360, %v3362
    %v3364 = vadd.f32 %v3360, %v3363
    %vm3365 = vweird.f32 %v2182
    %vm3366 = vweird.f32 %v3360
    %vm3367 = vmor %vm3365, %vm3366
    %v3368 = vsel %vm3367, %v3360, %v3364
    %v3369 = vand.u32 2147483647, %v2182
    %vm3370 = vcmp.eq.f32.partialorder %v3369, 8.507059e+37
    %v3371 = vand.u32 %v2182, 2147483648
    %v3372 = vor.u32 1.1754944e-38, %v3371
    %v3373 = vsel %vm3370, %v3372, %v3368
    %v3374 = vmul.f32 1.0, %v3373
    %v3375 = vrcp.pop %v2183
    %v3376 = vmul.f32 %v2183, %v3375
    %v3377 = vsub.f32 1.0, %v3376
    %v3378 = vmul.f32 %v3375, %v3377
    %v3379 = vadd.f32 %v3375, %v3378
    %vm3380 = vweird.f32 %v2183
    %vm3381 = vweird.f32 %v3375
    %vm3382 = vmor %vm3380, %vm3381
    %v3383 = vsel %vm3382, %v3375, %v3379
    %v3384 = vand.u32 2147483647, %v2183
    %vm3385 = vcmp.eq.f32.partialorder %v3384, 8.507059e+37
    %v3386 = vand.u32 %v2183, 2147483648
    %v3387 = vor.u32 1.1754944e-38, %v3386
    %v3388 = vsel %vm3385, %v3387, %v3383
    %v3389 = vmul.f32 1.0, %v3388
    %v3390 = vrcp.pop %v2184
    %v3391 = vmul.f32 %v2184, %v3390
    %v3392 = vsub.f32 1.0, %v3391
    %v3393 = vmul.f32 %v3390, %v3392
    %v3394 = vadd.f32 %v3390, %v3393
    %vm3395 = vweird.f32 %v2184
    %vm3396 = vweird.f32 %v3390
    %vm3397 = vmor %vm3395, %vm3396
    %v3398 = vsel %vm3397, %v3390, %v3394
    %v3399 = vand.u32 2147483647, %v2184
    %vm3400 = vcmp.eq.f32.partialorder %v3399, 8.507059e+37
    %v3401 = vand.u32 %v2184, 2147483648
    %v3402 = vor.u32 1.1754944e-38, %v3401
    %v3403 = vsel %vm3400, %v3402, %v3398
    %v3404 = vmul.f32 1.0, %v3403
    %v3405 = vrcp.pop %v2185
    %v3406 = vmul.f32 %v2185, %v3405
    %v3407 = vsub.f32 1.0, %v3406
    %v3408 = vmul.f32 %v3405, %v3407
    %v3409 = vadd.f32 %v3405, %v3408
    %vm3410 = vweird.f32 %v2185
    %vm3411 = vweird.f32 %v3405
    %vm3412 = vmor %vm3410, %vm3411
    %v3413 = vsel %vm3412, %v3405, %v3409
    %v3414 = vand.u32 2147483647, %v2185
    %vm3415 = vcmp.eq.f32.partialorder %v3414, 8.507059e+37
    %v3416 = vand.u32 %v2185, 2147483648
    %v3417 = vor.u32 1.1754944e-38, %v3416
    %v3418 = vsel %vm3415, %v3417, %v3413
    %v3419 = vmul.f32 1.0, %v3418
    %v3420 = vrcp.pop %v2186
    %v3421 = vmul.f32 %v2186, %v3420
    %v3422 = vsub.f32 1.0, %v3421
    %v3423 = vmul.f32 %v3420, %v3422
    %v3424 = vadd.f32 %v3420, %v3423
    %vm3425 = vweird.f32 %v2186
    %vm3426 = vweird.f32 %v3420
    %vm3427 = vmor %vm3425, %vm3426
    %v3428 = vsel %vm3427, %v3420, %v3424
    %v3429 = vand.u32 2147483647, %v2186
    %vm3430 = vcmp.eq.f32.partialorder %v3429, 8.507059e+37
    %v3431 = vand.u32 %v2186, 2147483648
    %v3432 = vor.u32 1.1754944e-38, %v3431
    %v3433 = vsel %vm3430, %v3432, %v3428
    %v3434 = vmul.f32 1.0, %v3433
    %v3435 = vrcp.pop %v2187
    %v3436 = vmul.f32 %v2187, %v3435
    %v3437 = vsub.f32 1.0, %v3436
    %v3438 = vmul.f32 %v3435, %v3437
    %v3439 = vadd.f32 %v3435, %v3438
    %vm3440 = vweird.f32 %v2187
    %vm3441 = vweird.f32 %v3435
    %vm3442 = vmor %vm3440, %vm3441
    %v3443 = vsel %vm3442, %v3435, %v3439
    %v3444 = vand.u32 2147483647, %v2187
    %vm3445 = vcmp.eq.f32.partialorder %v3444, 8.507059e+37
    %v3446 = vand.u32 %v2187, 2147483648
    %v3447 = vor.u32 1.1754944e-38, %v3446
    %v3448 = vsel %vm3445, %v3447, %v3443
    %v3449 = vmul.f32 1.0, %v3448
    %v3450 = vrcp.pop %v2188
    %v3451 = vmul.f32 %v2188, %v3450
    %v3452 = vsub.f32 1.0, %v3451
    %v3453 = vmul.f32 %v3450, %v3452
    %v3454 = vadd.f32 %v3450, %v3453
    %vm3455 = vweird.f32 %v2188
    %vm3456 = vweird.f32 %v3450
    %vm3457 = vmor %vm3455, %vm3456
    %v3458 = vsel %vm3457, %v3450, %v3454
    %v3459 = vand.u32 2147483647, %v2188
    %vm3460 = vcmp.eq.f32.partialorder %v3459, 8.507059e+37
    %v3461 = vand.u32 %v2188, 2147483648
    %v3462 = vor.u32 1.1754944e-38, %v3461
    %v3463 = vsel %vm3460, %v3462, %v3458
    %v3464 = vmul.f32 1.0, %v3463
    %v3465 = vrcp.pop %v2189
    %v3466 = vmul.f32 %v2189, %v3465
    %v3467 = vsub.f32 1.0, %v3466
    %v3468 = vmul.f32 %v3465, %v3467
    %v3469 = vadd.f32 %v3465, %v3468
    %vm3470 = vweird.f32 %v2189
    %vm3471 = vweird.f32 %v3465
    %vm3472 = vmor %vm3470, %vm3471
    %v3473 = vsel %vm3472, %v3465, %v3469
    %v3474 = vand.u32 2147483647, %v2189
    %vm3475 = vcmp.eq.f32.partialorder %v3474, 8.507059e+37
    %v3476 = vand.u32 %v2189, 2147483648
    %v3477 = vor.u32 1.1754944e-38, %v3476
    %v3478 = vsel %vm3475, %v3477, %v3473
    %v3479 = vmul.f32 1.0, %v3478
    %v3480 = vrcp.pop %v2190
    %v3481 = vmul.f32 %v2190, %v3480
    %v3482 = vsub.f32 1.0, %v3481
    %v3483 = vmul.f32 %v3480, %v3482
    %v3484 = vadd.f32 %v3480, %v3483
    %vm3485 = vweird.f32 %v2190
    %vm3486 = vweird.f32 %v3480
    %vm3487 = vmor %vm3485, %vm3486
    %v3488 = vsel %vm3487, %v3480, %v3484
    %v3489 = vand.u32 2147483647, %v2190
    %vm3490 = vcmp.eq.f32.partialorder %v3489, 8.507059e+37
    %v3491 = vand.u32 %v2190, 2147483648
    %v3492 = vor.u32 1.1754944e-38, %v3491
    %v3493 = vsel %vm3490, %v3492, %v3488
    %v3494 = vmul.f32 1.0, %v3493
    %v3495 = vrcp.pop %v2191
    %v3496 = vmul.f32 %v2191, %v3495
    %v3497 = vsub.f32 1.0, %v3496
    %v3498 = vmul.f32 %v3495, %v3497
    %v3499 = vadd.f32 %v3495, %v3498
    %vm3500 = vweird.f32 %v2191
    %vm3501 = vweird.f32 %v3495
    %vm3502 = vmor %vm3500, %vm3501
    %v3503 = vsel %vm3502, %v3495, %v3499
    %v3504 = vand.u32 2147483647, %v2191
    %vm3505 = vcmp.eq.f32.partialorder %v3504, 8.507059e+37
    %v3506 = vand.u32 %v2191, 2147483648
    %v3507 = vor.u32 1.1754944e-38, %v3506
    %v3508 = vsel %vm3505, %v3507, %v3503
    %v3509 = vmul.f32 1.0, %v3508
    %v3510 = vrcp.pop %v2192
    %v3511 = vmul.f32 %v2192, %v3510
    %v3512 = vsub.f32 1.0, %v3511
    %v3513 = vmul.f32 %v3510, %v3512
    %v3514 = vadd.f32 %v3510, %v3513
    %vm3515 = vweird.f32 %v2192
    %vm3516 = vweird.f32 %v3510
    %vm3517 = vmor %vm3515, %vm3516
    %v3518 = vsel %vm3517, %v3510, %v3514
    %v3519 = vand.u32 2147483647, %v2192
    %vm3520 = vcmp.eq.f32.partialorder %v3519, 8.507059e+37
    %v3521 = vand.u32 %v2192, 2147483648
    %v3522 = vor.u32 1.1754944e-38, %v3521
    %v3523 = vsel %vm3520, %v3522, %v3518
    %v3524 = vmul.f32 1.0, %v3523
    %v3525 = vrcp.pop %v2193
    %v3526 = vmul.f32 %v2193, %v3525
    %v3527 = vsub.f32 1.0, %v3526
    %v3528 = vmul.f32 %v3525, %v3527
    %v3529 = vadd.f32 %v3525, %v3528
    %vm3530 = vweird.f32 %v2193
    %vm3531 = vweird.f32 %v3525
    %vm3532 = vmor %vm3530, %vm3531
    %v3533 = vsel %vm3532, %v3525, %v3529
    %v3534 = vand.u32 2147483647, %v2193
    %vm3535 = vcmp.eq.f32.partialorder %v3534, 8.507059e+37
    %v3536 = vand.u32 %v2193, 2147483648
    %v3537 = vor.u32 1.1754944e-38, %v3536
    %v3538 = vsel %vm3535, %v3537, %v3533
    %v3539 = vmul.f32 1.0, %v3538
    %v3540 = vrcp.pop %v2194
    %v3541 = vmul.f32 %v2194, %v3540
    %v3542 = vsub.f32 1.0, %v3541
    %v3543 = vmul.f32 %v3540, %v3542
    %v3544 = vadd.f32 %v3540, %v3543
    %vm3545 = vweird.f32 %v2194
    %vm3546 = vweird.f32 %v3540
    %vm3547 = vmor %vm3545, %vm3546
    %v3548 = vsel %vm3547, %v3540, %v3544
    %v3549 = vand.u32 2147483647, %v2194
    %vm3550 = vcmp.eq.f32.partialorder %v3549, 8.507059e+37
    %v3551 = vand.u32 %v2194, 2147483648
    %v3552 = vor.u32 1.1754944e-38, %v3551
    %v3553 = vsel %vm3550, %v3552, %v3548
    %v3554 = vmul.f32 1.0, %v3553
    %v3555 = vrcp.pop %v2195
    %v3556 = vmul.f32 %v2195, %v3555
    %v3557 = vsub.f32 1.0, %v3556
    %v3558 = vmul.f32 %v3555, %v3557
    %v3559 = vadd.f32 %v3555, %v3558
    %vm3560 = vweird.f32 %v2195
    %vm3561 = vweird.f32 %v3555
    %vm3562 = vmor %vm3560, %vm3561
    %v3563 = vsel %vm3562, %v3555, %v3559
    %v3564 = vand.u32 2147483647, %v2195
    %vm3565 = vcmp.eq.f32.partialorder %v3564, 8.507059e+37
    %v3566 = vand.u32 %v2195, 2147483648
    %v3567 = vor.u32 1.1754944e-38, %v3566
    %v3568 = vsel %vm3565, %v3567, %v3563
    %v3569 = vmul.f32 1.0, %v3568
    %v3570 = vrcp.pop %v2196
    %v3571 = vmul.f32 %v2196, %v3570
    %v3572 = vsub.f32 1.0, %v3571
    %v3573 = vmul.f32 %v3570, %v3572
    %v3574 = vadd.f32 %v3570, %v3573
    %vm3575 = vweird.f32 %v2196
    %vm3576 = vweird.f32 %v3570
    %vm3577 = vmor %vm3575, %vm3576
    %v3578 = vsel %vm3577, %v3570, %v3574
    %v3579 = vand.u32 2147483647, %v2196
    %vm3580 = vcmp.eq.f32.partialorder %v3579, 8.507059e+37
    %v3581 = vand.u32 %v2196, 2147483648
    %v3582 = vor.u32 1.1754944e-38, %v3581
    %v3583 = vsel %vm3580, %v3582, %v3578
    %v3584 = vmul.f32 1.0, %v3583
    %v3585 = vrcp.pop %v2197
    %v3586 = vmul.f32 %v2197, %v3585
    %v3587 = vsub.f32 1.0, %v3586
    %v3588 = vmul.f32 %v3585, %v3587
    %v3589 = vadd.f32 %v3585, %v3588
    %vm3590 = vweird.f32 %v2197
    %vm3591 = vweird.f32 %v3585
    %vm3592 = vmor %vm3590, %vm3591
    %v3593 = vsel %vm3592, %v3585, %v3589
    %v3594 = vand.u32 2147483647, %v2197
    %vm3595 = vcmp.eq.f32.partialorder %v3594, 8.507059e+37
    %v3596 = vand.u32 %v2197, 2147483648
    %v3597 = vor.u32 1.1754944e-38, %v3596
    %v3598 = vsel %vm3595, %v3597, %v3593
    %v3599 = vmul.f32 1.0, %v3598
    %v3600 = vrcp.pop %v2198
    %v3601 = vmul.f32 %v2198, %v3600
    %v3602 = vsub.f32 1.0, %v3601
    %v3603 = vmul.f32 %v3600, %v3602
    %v3604 = vadd.f32 %v3600, %v3603
    %vm3605 = vweird.f32 %v2198
    %vm3606 = vweird.f32 %v3600
    %vm3607 = vmor %vm3605, %vm3606
    %v3608 = vsel %vm3607, %v3600, %v3604
    %v3609 = vand.u32 2147483647, %v2198
    %vm3610 = vcmp.eq.f32.partialorder %v3609, 8.507059e+37
    %v3611 = vand.u32 %v2198, 2147483648
    %v3612 = vor.u32 1.1754944e-38, %v3611
    %v3613 = vsel %vm3610, %v3612, %v3608
    %v3614 = vmul.f32 1.0, %v3613
    %v3615 = vrcp.pop %v2199
    %v3616 = vmul.f32 %v2199, %v3615
    %v3617 = vsub.f32 1.0, %v3616
    %v3618 = vmul.f32 %v3615, %v3617
    %v3619 = vadd.f32 %v3615, %v3618
    %vm3620 = vweird.f32 %v2199
    %vm3621 = vweird.f32 %v3615
    %vm3622 = vmor %vm3620, %vm3621
    %v3623 = vsel %vm3622, %v3615, %v3619
    %v3624 = vand.u32 2147483647, %v2199
    %vm3625 = vcmp.eq.f32.partialorder %v3624, 8.507059e+37
    %v3626 = vand.u32 %v2199, 2147483648
    %v3627 = vor.u32 1.1754944e-38, %v3626
    %v3628 = vsel %vm3625, %v3627, %v3623
    %v3629 = vmul.f32 1.0, %v3628
    %v3630 = vrcp.pop %v2200
    %v3631 = vmul.f32 %v2200, %v3630
    %v3632 = vsub.f32 1.0, %v3631
    %v3633 = vmul.f32 %v3630, %v3632
    %v3634 = vadd.f32 %v3630, %v3633
    %vm3635 = vweird.f32 %v2200
    %vm3636 = vweird.f32 %v3630
    %vm3637 = vmor %vm3635, %vm3636
    %v3638 = vsel %vm3637, %v3630, %v3634
    %v3639 = vand.u32 2147483647, %v2200
    %vm3640 = vcmp.eq.f32.partialorder %v3639, 8.507059e+37
    %v3641 = vand.u32 %v2200, 2147483648
    %v3642 = vor.u32 1.1754944e-38, %v3641
    %v3643 = vsel %vm3640, %v3642, %v3638
    %v3644 = vmul.f32 1.0, %v3643
    %v3645 = vrcp.pop %v2201
    %v3646 = vmul.f32 %v2201, %v3645
    %v3647 = vsub.f32 1.0, %v3646
    %v3648 = vmul.f32 %v3645, %v3647
    %v3649 = vadd.f32 %v3645, %v3648
    %vm3650 = vweird.f32 %v2201
    %vm3651 = vweird.f32 %v3645
    %vm3652 = vmor %vm3650, %vm3651
    %v3653 = vsel %vm3652, %v3645, %v3649
    %v3654 = vand.u32 2147483647, %v2201
    %vm3655 = vcmp.eq.f32.partialorder %v3654, 8.507059e+37
    %v3656 = vand.u32 %v2201, 2147483648
    %v3657 = vor.u32 1.1754944e-38, %v3656
    %v3658 = vsel %vm3655, %v3657, %v3653
    %v3659 = vmul.f32 1.0, %v3658
    %v3660 = vrcp.pop %v2202
    %v3661 = vmul.f32 %v2202, %v3660
    %v3662 = vsub.f32 1.0, %v3661
    %v3663 = vmul.f32 %v3660, %v3662
    %v3664 = vadd.f32 %v3660, %v3663
    %vm3665 = vweird.f32 %v2202
    %vm3666 = vweird.f32 %v3660
    %vm3667 = vmor %vm3665, %vm3666
    %v3668 = vsel %vm3667, %v3660, %v3664
    %v3669 = vand.u32 2147483647, %v2202
    %vm3670 = vcmp.eq.f32.partialorder %v3669, 8.507059e+37
    %v3671 = vand.u32 %v2202, 2147483648
    %v3672 = vor.u32 1.1754944e-38, %v3671
    %v3673 = vsel %vm3670, %v3672, %v3668
    %v3674 = vmul.f32 1.0, %v3673
    %v3675 = vrcp.pop %v2203
    %v3676 = vmul.f32 %v2203, %v3675
    %v3677 = vsub.f32 1.0, %v3676
    %v3678 = vmul.f32 %v3675, %v3677
    %v3679 = vadd.f32 %v3675, %v3678
    %vm3680 = vweird.f32 %v2203
    %vm3681 = vweird.f32 %v3675
    %vm3682 = vmor %vm3680, %vm3681
    %v3683 = vsel %vm3682, %v3675, %v3679
    %v3684 = vand.u32 2147483647, %v2203
    %vm3685 = vcmp.eq.f32.partialorder %v3684, 8.507059e+37
    %v3686 = vand.u32 %v2203, 2147483648
    %v3687 = vor.u32 1.1754944e-38, %v3686
    %v3688 = vsel %vm3685, %v3687, %v3683
    %v3689 = vmul.f32 1.0, %v3688
    %v3690 = vrcp.pop %v2204
    %v3691 = vmul.f32 %v2204, %v3690
    %v3692 = vsub.f32 1.0, %v3691
    %v3693 = vmul.f32 %v3690, %v3692
    %v3694 = vadd.f32 %v3690, %v3693
    %vm3695 = vweird.f32 %v2204
    %vm3696 = vweird.f32 %v3690
    %vm3697 = vmor %vm3695, %vm3696
    %v3698 = vsel %vm3697, %v3690, %v3694
    %v3699 = vand.u32 2147483647, %v2204
    %vm3700 = vcmp.eq.f32.partialorder %v3699, 8.507059e+37
    %v3701 = vand.u32 %v2204, 2147483648
    %v3702 = vor.u32 1.1754944e-38, %v3701
    %v3703 = vsel %vm3700, %v3702, %v3698
    %v3704 = vmul.f32 1.0, %v3703
    %v3705 = vrcp.pop %v2205
    %v3706 = vmul.f32 %v2205, %v3705
    %v3707 = vsub.f32 1.0, %v3706
    %v3708 = vmul.f32 %v3705, %v3707
    %v3709 = vadd.f32 %v3705, %v3708
    %vm3710 = vweird.f32 %v2205
    %vm3711 = vweird.f32 %v3705
    %vm3712 = vmor %vm3710, %vm3711
    %v3713 = vsel %vm3712, %v3705, %v3709
    %v3714 = vand.u32 2147483647, %v2205
    %vm3715 = vcmp.eq.f32.partialorder %v3714, 8.507059e+37
    %v3716 = vand.u32 %v2205, 2147483648
    %v3717 = vor.u32 1.1754944e-38, %v3716
    %v3718 = vsel %vm3715, %v3717, %v3713
    %v3719 = vmul.f32 1.0, %v3718
    %v3720 = vrcp.pop %v2206
    %v3721 = vmul.f32 %v2206, %v3720
    %v3722 = vsub.f32 1.0, %v3721
    %v3723 = vmul.f32 %v3720, %v3722
    %v3724 = vadd.f32 %v3720, %v3723
    %vm3725 = vweird.f32 %v2206
    %vm3726 = vweird.f32 %v3720
    %vm3727 = vmor %vm3725, %vm3726
    %v3728 = vsel %vm3727, %v3720, %v3724
    %v3729 = vand.u32 2147483647, %v2206
    %vm3730 = vcmp.eq.f32.partialorder %v3729, 8.507059e+37
    %v3731 = vand.u32 %v2206, 2147483648
    %v3732 = vor.u32 1.1754944e-38, %v3731
    %v3733 = vsel %vm3730, %v3732, %v3728
    %v3734 = vmul.f32 1.0, %v3733
    %v3735 = vrcp.pop %v2207
    %v3736 = vmul.f32 %v2207, %v3735
    %v3737 = vsub.f32 1.0, %v3736
    %v3738 = vmul.f32 %v3735, %v3737
    %v3739 = vadd.f32 %v3735, %v3738
    %vm3740 = vweird.f32 %v2207
    %vm3741 = vweird.f32 %v3735
    %vm3742 = vmor %vm3740, %vm3741
    %v3743 = vsel %vm3742, %v3735, %v3739
    %v3744 = vand.u32 2147483647, %v2207
    %vm3745 = vcmp.eq.f32.partialorder %v3744, 8.507059e+37
    %v3746 = vand.u32 %v2207, 2147483648
    %v3747 = vor.u32 1.1754944e-38, %v3746
    %v3748 = vsel %vm3745, %v3747, %v3743
    %v3749 = vmul.f32 1.0, %v3748
    %v3750 = vrcp.pop %v2208
    %v3751 = vmul.f32 %v2208, %v3750
    %v3752 = vsub.f32 1.0, %v3751
    %v3753 = vmul.f32 %v3750, %v3752
    %v3754 = vadd.f32 %v3750, %v3753
    %vm3755 = vweird.f32 %v2208
    %vm3756 = vweird.f32 %v3750
    %vm3757 = vmor %vm3755, %vm3756
    %v3758 = vsel %vm3757, %v3750, %v3754
    %v3759 = vand.u32 2147483647, %v2208
    %vm3760 = vcmp.eq.f32.partialorder %v3759, 8.507059e+37
    %v3761 = vand.u32 %v2208, 2147483648
    %v3762 = vor.u32 1.1754944e-38, %v3761
    %v3763 = vsel %vm3760, %v3762, %v3758
    %v3764 = vmul.f32 1.0, %v3763
    %v3765 = vrcp.pop %v2209
    %v3766 = vmul.f32 %v2209, %v3765
    %v3767 = vsub.f32 1.0, %v3766
    %v3768 = vmul.f32 %v3765, %v3767
    %v3769 = vadd.f32 %v3765, %v3768
    %vm3770 = vweird.f32 %v2209
    %vm3771 = vweird.f32 %v3765
    %vm3772 = vmor %vm3770, %vm3771
    %v3773 = vsel %vm3772, %v3765, %v3769
    %v3774 = vand.u32 2147483647, %v2209
    %vm3775 = vcmp.eq.f32.partialorder %v3774, 8.507059e+37
    %v3776 = vand.u32 %v2209, 2147483648
    %v3777 = vor.u32 1.1754944e-38, %v3776
    %v3778 = vsel %vm3775, %v3777, %v3773
    %v3779 = vmul.f32 1.0, %v3778
    %v3780 = vrcp.pop %v2210
    %v3781 = vmul.f32 %v2210, %v3780
    %v3782 = vsub.f32 1.0, %v3781
    %v3783 = vmul.f32 %v3780, %v3782
    %v3784 = vadd.f32 %v3780, %v3783
    %vm3785 = vweird.f32 %v2210
    %vm3786 = vweird.f32 %v3780
    %vm3787 = vmor %vm3785, %vm3786
    %v3788 = vsel %vm3787, %v3780, %v3784
    %v3789 = vand.u32 2147483647, %v2210
    %vm3790 = vcmp.eq.f32.partialorder %v3789, 8.507059e+37
    %v3791 = vand.u32 %v2210, 2147483648
    %v3792 = vor.u32 1.1754944e-38, %v3791
    %v3793 = vsel %vm3790, %v3792, %v3788
    %v3794 = vmul.f32 1.0, %v3793
    %v3795 = vrcp.pop %v2211
    %v3796 = vmul.f32 %v2211, %v3795
    %v3797 = vsub.f32 1.0, %v3796
    %v3798 = vmul.f32 %v3795, %v3797
    %v3799 = vadd.f32 %v3795, %v3798
    %vm3800 = vweird.f32 %v2211
    %vm3801 = vweird.f32 %v3795
    %vm3802 = vmor %vm3800, %vm3801
    %v3803 = vsel %vm3802, %v3795, %v3799
    %v3804 = vand.u32 2147483647, %v2211
    %vm3805 = vcmp.eq.f32.partialorder %v3804, 8.507059e+37
    %v3806 = vand.u32 %v2211, 2147483648
    %v3807 = vor.u32 1.1754944e-38, %v3806
    %v3808 = vsel %vm3805, %v3807, %v3803
    %v3809 = vmul.f32 1.0, %v3808
    %v3810 = vrcp.pop %v2212
    %v3811 = vmul.f32 %v2212, %v3810
    %v3812 = vsub.f32 1.0, %v3811
    %v3813 = vmul.f32 %v3810, %v3812
    %v3814 = vadd.f32 %v3810, %v3813
    %vm3815 = vweird.f32 %v2212
    %vm3816 = vweird.f32 %v3810
    %vm3817 = vmor %vm3815, %vm3816
    %v3818 = vsel %vm3817, %v3810, %v3814
    %v3819 = vand.u32 2147483647, %v2212
    %vm3820 = vcmp.eq.f32.partialorder %v3819, 8.507059e+37
    %v3821 = vand.u32 %v2212, 2147483648
    %v3822 = vor.u32 1.1754944e-38, %v3821
    %v3823 = vsel %vm3820, %v3822, %v3818
    %v3824 = vmul.f32 1.0, %v3823
    %v3825 = vrcp.pop %v2213
    %v3826 = vmul.f32 %v2213, %v3825
    %v3827 = vsub.f32 1.0, %v3826
    %v3828 = vmul.f32 %v3825, %v3827
    %v3829 = vadd.f32 %v3825, %v3828
    %vm3830 = vweird.f32 %v2213
    %vm3831 = vweird.f32 %v3825
    %vm3832 = vmor %vm3830, %vm3831
    %v3833 = vsel %vm3832, %v3825, %v3829
    %v3834 = vand.u32 2147483647, %v2213
    %vm3835 = vcmp.eq.f32.partialorder %v3834, 8.507059e+37
    %v3836 = vand.u32 %v2213, 2147483648
    %v3837 = vor.u32 1.1754944e-38, %v3836
    %v3838 = vsel %vm3835, %v3837, %v3833
    %v3839 = vmul.f32 1.0, %v3838
    %v3840 = vrcp.pop %v2214
    %v3841 = vmul.f32 %v2214, %v3840
    %v3842 = vsub.f32 1.0, %v3841
    %v3843 = vmul.f32 %v3840, %v3842
    %v3844 = vadd.f32 %v3840, %v3843
    %vm3845 = vweird.f32 %v2214
    %vm3846 = vweird.f32 %v3840
    %vm3847 = vmor %vm3845, %vm3846
    %v3848 = vsel %vm3847, %v3840, %v3844
    %v3849 = vand.u32 2147483647, %v2214
    %vm3850 = vcmp.eq.f32.partialorder %v3849, 8.507059e+37
    %v3851 = vand.u32 %v2214, 2147483648
    %v3852 = vor.u32 1.1754944e-38, %v3851
    %v3853 = vsel %vm3850, %v3852, %v3848
    %v3854 = vmul.f32 1.0, %v3853
    %v3855 = vrcp.pop %v2215
    %v3856 = vmul.f32 %v2215, %v3855
    %v3857 = vsub.f32 1.0, %v3856
    %v3858 = vmul.f32 %v3855, %v3857
    %v3859 = vadd.f32 %v3855, %v3858
    %vm3860 = vweird.f32 %v2215
    %vm3861 = vweird.f32 %v3855
    %vm3862 = vmor %vm3860, %vm3861
    %v3863 = vsel %vm3862, %v3855, %v3859
    %v3864 = vand.u32 2147483647, %v2215
    %vm3865 = vcmp.eq.f32.partialorder %v3864, 8.507059e+37
    %v3866 = vand.u32 %v2215, 2147483648
    %v3867 = vor.u32 1.1754944e-38, %v3866
    %v3868 = vsel %vm3865, %v3867, %v3863
    %v3869 = vmul.f32 1.0, %v3868
    %v3870 = vrcp.pop %v2216
    %v3871 = vmul.f32 %v2216, %v3870
    %v3872 = vsub.f32 1.0, %v3871
    %v3873 = vmul.f32 %v3870, %v3872
    %v3874 = vadd.f32 %v3870, %v3873
    %vm3875 = vweird.f32 %v2216
    %vm3876 = vweird.f32 %v3870
    %vm3877 = vmor %vm3875, %vm3876
    %v3878 = vsel %vm3877, %v3870, %v3874
    %v3879 = vand.u32 2147483647, %v2216
    %vm3880 = vcmp.eq.f32.partialorder %v3879, 8.507059e+37
    %v3881 = vand.u32 %v2216, 2147483648
    %v3882 = vor.u32 1.1754944e-38, %v3881
    %v3883 = vsel %vm3880, %v3882, %v3878
    %v3884 = vmul.f32 1.0, %v3883
    %v3885 = vrcp.pop %v2217
    %v3886 = vmul.f32 %v2217, %v3885
    %v3887 = vsub.f32 1.0, %v3886
    %v3888 = vmul.f32 %v3885, %v3887
    %v3889 = vadd.f32 %v3885, %v3888
    %vm3890 = vweird.f32 %v2217
    %vm3891 = vweird.f32 %v3885
    %vm3892 = vmor %vm3890, %vm3891
    %v3893 = vsel %vm3892, %v3885, %v3889
    %v3894 = vand.u32 2147483647, %v2217
    %vm3895 = vcmp.eq.f32.partialorder %v3894, 8.507059e+37
    %v3896 = vand.u32 %v2217, 2147483648
    %v3897 = vor.u32 1.1754944e-38, %v3896
    %v3898 = vsel %vm3895, %v3897, %v3893
    %v3899 = vmul.f32 1.0, %v3898
    %v3900 = vrcp.pop %v2218
    %v3901 = vmul.f32 %v2218, %v3900
    %v3902 = vsub.f32 1.0, %v3901
    %v3903 = vmul.f32 %v3900, %v3902
    %v3904 = vadd.f32 %v3900, %v3903
    %vm3905 = vweird.f32 %v2218
    %vm3906 = vweird.f32 %v3900
    %vm3907 = vmor %vm3905, %vm3906
    %v3908 = vsel %vm3907, %v3900, %v3904
    %v3909 = vand.u32 2147483647, %v2218
    %vm3910 = vcmp.eq.f32.partialorder %v3909, 8.507059e+37
    %v3911 = vand.u32 %v2218, 2147483648
    %v3912 = vor.u32 1.1754944e-38, %v3911
    %v3913 = vsel %vm3910, %v3912, %v3908
    %v3914 = vmul.f32 1.0, %v3913
    %v3915 = vrcp.pop %v2219
    %v3916 = vmul.f32 %v2219, %v3915
    %v3917 = vsub.f32 1.0, %v3916
    %v3918 = vmul.f32 %v3915, %v3917
    %v3919 = vadd.f32 %v3915, %v3918
    %vm3920 = vweird.f32 %v2219
    %vm3921 = vweird.f32 %v3915
    %vm3922 = vmor %vm3920, %vm3921
    %v3923 = vsel %vm3922, %v3915, %v3919
    %v3924 = vand.u32 2147483647, %v2219
    %vm3925 = vcmp.eq.f32.partialorder %v3924, 8.507059e+37
    %v3926 = vand.u32 %v2219, 2147483648
    %v3927 = vor.u32 1.1754944e-38, %v3926
    %v3928 = vsel %vm3925, %v3927, %v3923
    %v3929 = vmul.f32 1.0, %v3928
    %v3930 = vrcp.pop %v2220
    %v3931 = vmul.f32 %v2220, %v3930
    %v3932 = vsub.f32 1.0, %v3931
    %v3933 = vmul.f32 %v3930, %v3932
    %v3934 = vadd.f32 %v3930, %v3933
    %vm3935 = vweird.f32 %v2220
    %vm3936 = vweird.f32 %v3930
    %vm3937 = vmor %vm3935, %vm3936
    %v3938 = vsel %vm3937, %v3930, %v3934
    %v3939 = vand.u32 2147483647, %v2220
    %vm3940 = vcmp.eq.f32.partialorder %v3939, 8.507059e+37
    %v3941 = vand.u32 %v2220, 2147483648
    %v3942 = vor.u32 1.1754944e-38, %v3941
    %v3943 = vsel %vm3940, %v3942, %v3938
    %v3944 = vmul.f32 1.0, %v3943
    %v3945 = vrcp.pop %v2221
    %v3946 = vmul.f32 %v2221, %v3945
    %v3947 = vsub.f32 1.0, %v3946
    %v3948 = vmul.f32 %v3945, %v3947
    %v3949 = vadd.f32 %v3945, %v3948
    %vm3950 = vweird.f32 %v2221
    %vm3951 = vweird.f32 %v3945
    %vm3952 = vmor %vm3950, %vm3951
    %v3953 = vsel %vm3952, %v3945, %v3949
    %v3954 = vand.u32 2147483647, %v2221
    %vm3955 = vcmp.eq.f32.partialorder %v3954, 8.507059e+37
    %v3956 = vand.u32 %v2221, 2147483648
    %v3957 = vor.u32 1.1754944e-38, %v3956
    %v3958 = vsel %vm3955, %v3957, %v3953
    %v3959 = vmul.f32 1.0, %v3958
    %v3960 = vrcp.pop %v2222
    %v3961 = vmul.f32 %v2222, %v3960
    %v3962 = vsub.f32 1.0, %v3961
    %v3963 = vmul.f32 %v3960, %v3962
    %v3964 = vadd.f32 %v3960, %v3963
    %vm3965 = vweird.f32 %v2222
    %vm3966 = vweird.f32 %v3960
    %vm3967 = vmor %vm3965, %vm3966
    %v3968 = vsel %vm3967, %v3960, %v3964
    %v3969 = vand.u32 2147483647, %v2222
    %vm3970 = vcmp.eq.f32.partialorder %v3969, 8.507059e+37
    %v3971 = vand.u32 %v2222, 2147483648
    %v3972 = vor.u32 1.1754944e-38, %v3971
    %v3973 = vsel %vm3970, %v3972, %v3968
    %v3974 = vmul.f32 1.0, %v3973
    %v3975 = vrcp.pop %v2223
    %v3976 = vmul.f32 %v2223, %v3975
    %v3977 = vsub.f32 1.0, %v3976
    %v3978 = vmul.f32 %v3975, %v3977
    %v3979 = vadd.f32 %v3975, %v3978
    %vm3980 = vweird.f32 %v2223
    %vm3981 = vweird.f32 %v3975
    %vm3982 = vmor %vm3980, %vm3981
    %v3983 = vsel %vm3982, %v3975, %v3979
    %v3984 = vand.u32 2147483647, %v2223
    %vm3985 = vcmp.eq.f32.partialorder %v3984, 8.507059e+37
    %v3986 = vand.u32 %v2223, 2147483648
    %v3987 = vor.u32 1.1754944e-38, %v3986
    %v3988 = vsel %vm3985, %v3987, %v3983
    %v3989 = vmul.f32 1.0, %v3988
    %v3990 = vrcp.pop %v2224
    %v3991 = vmul.f32 %v2224, %v3990
    %v3992 = vsub.f32 1.0, %v3991
    %v3993 = vmul.f32 %v3990, %v3992
    %v3994 = vadd.f32 %v3990, %v3993
    %vm3995 = vweird.f32 %v2224
    %vm3996 = vweird.f32 %v3990
    %vm3997 = vmor %vm3995, %vm3996
    %v3998 = vsel %vm3997, %v3990, %v3994
    %v3999 = vand.u32 2147483647, %v2224
    %vm4000 = vcmp.eq.f32.partialorder %v3999, 8.507059e+37
    %v4001 = vand.u32 %v2224, 2147483648
    %v4002 = vor.u32 1.1754944e-38, %v4001
    %v4003 = vsel %vm4000, %v4002, %v3998
    %v4004 = vmul.f32 1.0, %v4003
    %v4005 = vrcp.pop %v2225
    %v4006 = vmul.f32 %v2225, %v4005
    %v4007 = vsub.f32 1.0, %v4006
    %v4008 = vmul.f32 %v4005, %v4007
    %v4009 = vadd.f32 %v4005, %v4008
    %vm4010 = vweird.f32 %v2225
    %vm4011 = vweird.f32 %v4005
    %vm4012 = vmor %vm4010, %vm4011
    %v4013 = vsel %vm4012, %v4005, %v4009
    %v4014 = vand.u32 2147483647, %v2225
    %vm4015 = vcmp.eq.f32.partialorder %v4014, 8.507059e+37
    %v4016 = vand.u32 %v2225, 2147483648
    %v4017 = vor.u32 1.1754944e-38, %v4016
    %v4018 = vsel %vm4015, %v4017, %v4013
    %v4019 = vmul.f32 1.0, %v4018
    %v4020 = vrcp.pop %v2226
    %v4021 = vmul.f32 %v2226, %v4020
    %v4022 = vsub.f32 1.0, %v4021
    %v4023 = vmul.f32 %v4020, %v4022
    %v4024 = vadd.f32 %v4020, %v4023
    %vm4025 = vweird.f32 %v2226
    %vm4026 = vweird.f32 %v4020
    %vm4027 = vmor %vm4025, %vm4026
    %v4028 = vsel %vm4027, %v4020, %v4024
    %v4029 = vand.u32 2147483647, %v2226
    %vm4030 = vcmp.eq.f32.partialorder %v4029, 8.507059e+37
    %v4031 = vand.u32 %v2226, 2147483648
    %v4032 = vor.u32 1.1754944e-38, %v4031
    %v4033 = vsel %vm4030, %v4032, %v4028
    %v4034 = vmul.f32 1.0, %v4033
    %v4035 = vrcp.pop %v2227
    %v4036 = vmul.f32 %v2227, %v4035
    %v4037 = vsub.f32 1.0, %v4036
    %v4038 = vmul.f32 %v4035, %v4037
    %v4039 = vadd.f32 %v4035, %v4038
    %vm4040 = vweird.f32 %v2227
    %vm4041 = vweird.f32 %v4035
    %vm4042 = vmor %vm4040, %vm4041
    %v4043 = vsel %vm4042, %v4035, %v4039
    %v4044 = vand.u32 2147483647, %v2227
    %vm4045 = vcmp.eq.f32.partialorder %v4044, 8.507059e+37
    %v4046 = vand.u32 %v2227, 2147483648
    %v4047 = vor.u32 1.1754944e-38, %v4046
    %v4048 = vsel %vm4045, %v4047, %v4043
    %v4049 = vmul.f32 1.0, %v4048
    %v4050 = vrcp.pop %v2228
    %v4051 = vmul.f32 %v2228, %v4050
    %v4052 = vsub.f32 1.0, %v4051
    %v4053 = vmul.f32 %v4050, %v4052
    %v4054 = vadd.f32 %v4050, %v4053
    %vm4055 = vweird.f32 %v2228
    %vm4056 = vweird.f32 %v4050
    %vm4057 = vmor %vm4055, %vm4056
    %v4058 = vsel %vm4057, %v4050, %v4054
    %v4059 = vand.u32 2147483647, %v2228
    %vm4060 = vcmp.eq.f32.partialorder %v4059, 8.507059e+37
    %v4061 = vand.u32 %v2228, 2147483648
    %v4062 = vor.u32 1.1754944e-38, %v4061
    %v4063 = vsel %vm4060, %v4062, %v4058
    %v4064 = vmul.f32 1.0, %v4063
    %v4065 = vrcp.pop %v2229
    %v4066 = vmul.f32 %v2229, %v4065
    %v4067 = vsub.f32 1.0, %v4066
    %v4068 = vmul.f32 %v4065, %v4067
    %v4069 = vadd.f32 %v4065, %v4068
    %vm4070 = vweird.f32 %v2229
    %vm4071 = vweird.f32 %v4065
    %vm4072 = vmor %vm4070, %vm4071
    %v4073 = vsel %vm4072, %v4065, %v4069
    %v4074 = vand.u32 2147483647, %v2229
    %vm4075 = vcmp.eq.f32.partialorder %v4074, 8.507059e+37
    %v4076 = vand.u32 %v2229, 2147483648
    %v4077 = vor.u32 1.1754944e-38, %v4076
    %v4078 = vsel %vm4075, %v4077, %v4073
    %v4079 = vmul.f32 1.0, %v4078
    %v4080 = vrcp.pop %v2230
    %v4081 = vmul.f32 %v2230, %v4080
    %v4082 = vsub.f32 1.0, %v4081
    %v4083 = vmul.f32 %v4080, %v4082
    %v4084 = vadd.f32 %v4080, %v4083
    %vm4085 = vweird.f32 %v2230
    %vm4086 = vweird.f32 %v4080
    %vm4087 = vmor %vm4085, %vm4086
    %v4088 = vsel %vm4087, %v4080, %v4084
    %v4089 = vand.u32 2147483647, %v2230
    %vm4090 = vcmp.eq.f32.partialorder %v4089, 8.507059e+37
    %v4091 = vand.u32 %v2230, 2147483648
    %v4092 = vor.u32 1.1754944e-38, %v4091
    %v4093 = vsel %vm4090, %v4092, %v4088
    %v4094 = vmul.f32 1.0, %v4093
    %v4095 = vrcp.pop %v2231
    %v4096 = vmul.f32 %v2231, %v4095
    %v4097 = vsub.f32 1.0, %v4096
    %v4098 = vmul.f32 %v4095, %v4097
    %v4099 = vadd.f32 %v4095, %v4098
    %vm4100 = vweird.f32 %v2231
    %vm4101 = vweird.f32 %v4095
    %vm4102 = vmor %vm4100, %vm4101
    %v4103 = vsel %vm4102, %v4095, %v4099
    %v4104 = vand.u32 2147483647, %v2231
    %vm4105 = vcmp.eq.f32.partialorder %v4104, 8.507059e+37
    %v4106 = vand.u32 %v2231, 2147483648
    %v4107 = vor.u32 1.1754944e-38, %v4106
    %v4108 = vsel %vm4105, %v4107, %v4103
    %v4109 = vmul.f32 1.0, %v4108
    %v4110 = vrcp.pop %v2232
    %v4111 = vmul.f32 %v2232, %v4110
    %v4112 = vsub.f32 1.0, %v4111
    %v4113 = vmul.f32 %v4110, %v4112
    %v4114 = vadd.f32 %v4110, %v4113
    %vm4115 = vweird.f32 %v2232
    %vm4116 = vweird.f32 %v4110
    %vm4117 = vmor %vm4115, %vm4116
    %v4118 = vsel %vm4117, %v4110, %v4114
    %v4119 = vand.u32 2147483647, %v2232
    %vm4120 = vcmp.eq.f32.partialorder %v4119, 8.507059e+37
    %v4121 = vand.u32 %v2232, 2147483648
    %v4122 = vor.u32 1.1754944e-38, %v4121
    %v4123 = vsel %vm4120, %v4122, %v4118
    %v4124 = vmul.f32 1.0, %v4123
    %v4125 = vrcp.pop %v2233
    %v4126 = vmul.f32 %v2233, %v4125
    %v4127 = vsub.f32 1.0, %v4126
    %v4128 = vmul.f32 %v4125, %v4127
    %v4129 = vadd.f32 %v4125, %v4128
    %vm4130 = vweird.f32 %v2233
    %vm4131 = vweird.f32 %v4125
    %vm4132 = vmor %vm4130, %vm4131
    %v4133 = vsel %vm4132, %v4125, %v4129
    %v4134 = vand.u32 2147483647, %v2233
    %vm4135 = vcmp.eq.f32.partialorder %v4134, 8.507059e+37
    %v4136 = vand.u32 %v2233, 2147483648
    %v4137 = vor.u32 1.1754944e-38, %v4136
    %v4138 = vsel %vm4135, %v4137, %v4133
    %v4139 = vmul.f32 1.0, %v4138
    %v4140 = vrcp.pop %v2234
    %v4141 = vmul.f32 %v2234, %v4140
    %v4142 = vsub.f32 1.0, %v4141
    %v4143 = vmul.f32 %v4140, %v4142
    %v4144 = vadd.f32 %v4140, %v4143
    %vm4145 = vweird.f32 %v2234
    %vm4146 = vweird.f32 %v4140
    %vm4147 = vmor %vm4145, %vm4146
    %v4148 = vsel %vm4147, %v4140, %v4144
    %v4149 = vand.u32 2147483647, %v2234
    %vm4150 = vcmp.eq.f32.partialorder %v4149, 8.507059e+37
    %v4151 = vand.u32 %v2234, 2147483648
    %v4152 = vor.u32 1.1754944e-38, %v4151
    %v4153 = vsel %vm4150, %v4152, %v4148
    %v4154 = vmul.f32 1.0, %v4153
    %v4283 = vlaneseq
    %v4284 = vand.u32 %v4283, 127
    %v4285 = vperm.slane %v2249, %v4284
    %v4286 = vadd.s32 %v4284, 4294967288
    %v4287 = vperm.slane %v2264, %v4286
    %vm4288 = vcmask 130112
    %v4289 = vsel %vm4288, %v4287, %v4285
    %v4290 = vadd.s32 %v4284, 4294967280
    %v4291 = vperm.slane %v2279, %v4290
    %vm4292 = vcmask 195712
    %v4293 = vsel %vm4292, %v4291, %v4289
    %v4294 = vadd.s32 %v4284, 4294967272
    %v4295 = vperm.slane %v2294, %v4294
    %vm4296 = vcmask 261312
    %v4297 = vsel %vm4296, %v4295, %v4293
    %v4298 = vadd.s32 %v4284, 4294967264
    %v4299 = vperm.slane %v2309, %v4298
    %vm4300 = vcmask 326912
    %v4301 = vsel %vm4300, %v4299, %v4297
    %v4302 = vadd.s32 %v4284, 4294967256
    %v4303 = vperm.slane %v2324, %v4302
    %vm4304 = vcmask 392512
    %v4305 = vsel %vm4304, %v4303, %v4301
    %v4306 = vadd.s32 %v4284, 4294967248
    %v4307 = vperm.slane %v2339, %v4306
    %vm4308 = vcmask 458112
    %v4309 = vsel %vm4308, %v4307, %v4305
    %v4310 = vadd.s32 %v4284, 4294967240
    %v4311 = vperm.slane %v2354, %v4310
    %vm4312 = vcmask 523712
    %v4313 = vsel %vm4312, %v4311, %v4309
    %v4314 = vadd.s32 %v4284, 4294967232
    %v4315 = vperm.slane %v2369, %v4314
    %vm4316 = vcmask 589312
    %v4317 = vsel %vm4316, %v4315, %v4313
    %v4318 = vadd.s32 %v4284, 4294967224
    %v4319 = vperm.slane %v2384, %v4318
    %vm4320 = vcmask 654912
    %v4321 = vsel %vm4320, %v4319, %v4317
    %v4322 = vadd.s32 %v4284, 4294967216
    %v4323 = vperm.slane %v2399, %v4322
    %vm4324 = vcmask 720512
    %v4325 = vsel %vm4324, %v4323, %v4321
    %v4326 = vadd.s32 %v4284, 4294967208
    %v4327 = vperm.slane %v2414, %v4326
    %vm4328 = vcmask 786112
    %v4329 = vsel %vm4328, %v4327, %v4325
    %v4330 = vadd.s32 %v4284, 4294967200
    %v4331 = vperm.slane %v2429, %v4330
    %vm4332 = vcmask 851712
    %v4333 = vsel %vm4332, %v4331, %v4329
    %v4334 = vadd.s32 %v4284, 4294967192
    %v4335 = vperm.slane %v2444, %v4334
    %vm4336 = vcmask 917312
    %v4337 = vsel %vm4336, %v4335, %v4333
    %v4338 = vadd.s32 %v4284, 4294967184
    %v4339 = vperm.slane %v2459, %v4338
    %vm4340 = vcmask 982912
    %v4341 = vsel %vm4340, %v4339, %v4337
    %v4342 = vadd.s32 %v4284, 4294967176
    %v4343 = vperm.slane %v2474, %v4342
    %vm4344 = vcmask 1048512
    %v4345 = vsel %vm4344, %v4343, %v4341
    %v4346 = vperm.slane %v2489, %v4284
    %v4347 = vperm.slane %v2504, %v4286
    %v4348 = vsel %vm4288, %v4347, %v4346
    %v4349 = vperm.slane %v2519, %v4290
    %v4350 = vsel %vm4292, %v4349, %v4348
    %v4351 = vperm.slane %v2534, %v4294
    %v4352 = vsel %vm4296, %v4351, %v4350
    %v4353 = vperm.slane %v2549, %v4298
    %v4354 = vsel %vm4300, %v4353, %v4352
    %v4355 = vperm.slane %v2564, %v4302
    %v4356 = vsel %vm4304, %v4355, %v4354
    %v4357 = vperm.slane %v2579, %v4306
    %v4358 = vsel %vm4308, %v4357, %v4356
    %v4359 = vperm.slane %v2594, %v4310
    %v4360 = vsel %vm4312, %v4359, %v4358
    %v4361 = vperm.slane %v2609, %v4314
    %v4362 = vsel %vm4316, %v4361, %v4360
    %v4363 = vperm.slane %v2624, %v4318
    %v4364 = vsel %vm4320, %v4363, %v4362
    %v4365 = vperm.slane %v2639, %v4322
    %v4366 = vsel %vm4324, %v4365, %v4364
    %v4367 = vperm.slane %v2654, %v4326
    %v4368 = vsel %vm4328, %v4367, %v4366
    %v4369 = vperm.slane %v2669, %v4330
    %v4370 = vsel %vm4332, %v4369, %v4368
    %v4371 = vperm.slane %v2684, %v4334
    %v4372 = vsel %vm4336, %v4371, %v4370
    %v4373 = vperm.slane %v2699, %v4338
    %v4374 = vsel %vm4340, %v4373, %v4372
    %v4375 = vperm.slane %v2714, %v4342
    %v4376 = vsel %vm4344, %v4375, %v4374
    %v4377 = vperm.slane %v2729, %v4284
    %v4378 = vperm.slane %v2744, %v4286
    %v4379 = vsel %vm4288, %v4378, %v4377
    %v4380 = vperm.slane %v2759, %v4290
    %v4381 = vsel %vm4292, %v4380, %v4379
    %v4382 = vperm.slane %v2774, %v4294
    %v4383 = vsel %vm4296, %v4382, %v4381
    %v4384 = vperm.slane %v2789, %v4298
    %v4385 = vsel %vm4300, %v4384, %v4383
    %v4386 = vperm.slane %v2804, %v4302
    %v4387 = vsel %vm4304, %v4386, %v4385
    %v4388 = vperm.slane %v2819, %v4306
    %v4389 = vsel %vm4308, %v4388, %v4387
    %v4390 = vperm.slane %v2834, %v4310
    %v4391 = vsel %vm4312, %v4390, %v4389
    %v4392 = vperm.slane %v2849, %v4314
    %v4393 = vsel %vm4316, %v4392, %v4391
    %v4394 = vperm.slane %v2864, %v4318
    %v4395 = vsel %vm4320, %v4394, %v4393
    %v4396 = vperm.slane %v2879, %v4322
    %v4397 = vsel %vm4324, %v4396, %v4395
    %v4398 = vperm.slane %v2894, %v4326
    %v4399 = vsel %vm4328, %v4398, %v4397
    %v4400 = vperm.slane %v2909, %v4330
    %v4401 = vsel %vm4332, %v4400, %v4399
    %v4402 = vperm.slane %v2924, %v4334
    %v4403 = vsel %vm4336, %v4402, %v4401
    %v4404 = vperm.slane %v2939, %v4338
    %v4405 = vsel %vm4340, %v4404, %v4403
    %v4406 = vperm.slane %v2954, %v4342
    %v4407 = vsel %vm4344, %v4406, %v4405
    %v4408 = vperm.slane %v2969, %v4284
    %v4409 = vperm.slane %v2984, %v4286
    %v4410 = vsel %vm4288, %v4409, %v4408
    %v4411 = vperm.slane %v2999, %v4290
    %v4412 = vsel %vm4292, %v4411, %v4410
    %v4413 = vperm.slane %v3014, %v4294
    %v4414 = vsel %vm4296, %v4413, %v4412
    %v4415 = vperm.slane %v3029, %v4298
    %v4416 = vsel %vm4300, %v4415, %v4414
    %v4417 = vperm.slane %v3044, %v4302
    %v4418 = vsel %vm4304, %v4417, %v4416
    %v4419 = vperm.slane %v3059, %v4306
    %v4420 = vsel %vm4308, %v4419, %v4418
    %v4421 = vperm.slane %v3074, %v4310
    %v4422 = vsel %vm4312, %v4421, %v4420
    %v4423 = vperm.slane %v3089, %v4314
    %v4424 = vsel %vm4316, %v4423, %v4422
    %v4425 = vperm.slane %v3104, %v4318
    %v4426 = vsel %vm4320, %v4425, %v4424
    %v4427 = vperm.slane %v3119, %v4322
    %v4428 = vsel %vm4324, %v4427, %v4426
    %v4429 = vperm.slane %v3134, %v4326
    %v4430 = vsel %vm4328, %v4429, %v4428
    %v4431 = vperm.slane %v3149, %v4330
    %v4432 = vsel %vm4332, %v4431, %v4430
    %v4433 = vperm.slane %v3164, %v4334
    %v4434 = vsel %vm4336, %v4433, %v4432
    %v4435 = vperm.slane %v3179, %v4338
    %v4436 = vsel %vm4340, %v4435, %v4434
    %v4437 = vperm.slane %v3194, %v4342
    %v4438 = vsel %vm4344, %v4437, %v4436
    %v4439 = vperm.slane %v3209, %v4284
    %v4440 = vperm.slane %v3224, %v4286
    %v4441 = vsel %vm4288, %v4440, %v4439
    %v4442 = vperm.slane %v3239, %v4290
    %v4443 = vsel %vm4292, %v4442, %v4441
    %v4444 = vperm.slane %v3254, %v4294
    %v4445 = vsel %vm4296, %v4444, %v4443
    %v4446 = vperm.slane %v3269, %v4298
    %v4447 = vsel %vm4300, %v4446, %v4445
    %v4448 = vperm.slane %v3284, %v4302
    %v4449 = vsel %vm4304, %v4448, %v4447
    %v4450 = vperm.slane %v3299, %v4306
    %v4451 = vsel %vm4308, %v4450, %v4449
    %v4452 = vperm.slane %v3314, %v4310
    %v4453 = vsel %vm4312, %v4452, %v4451
    %v4454 = vperm.slane %v3329, %v4314
    %v4455 = vsel %vm4316, %v4454, %v4453
    %v4456 = vperm.slane %v3344, %v4318
    %v4457 = vsel %vm4320, %v4456, %v4455
    %v4458 = vperm.slane %v3359, %v4322
    %v4459 = vsel %vm4324, %v4458, %v4457
    %v4460 = vperm.slane %v3374, %v4326
    %v4461 = vsel %vm4328, %v4460, %v4459
    %v4462 = vperm.slane %v3389, %v4330
    %v4463 = vsel %vm4332, %v4462, %v4461
    %v4464 = vperm.slane %v3404, %v4334
    %v4465 = vsel %vm4336, %v4464, %v4463
    %v4466 = vperm.slane %v3419, %v4338
    %v4467 = vsel %vm4340, %v4466, %v4465
    %v4468 = vperm.slane %v3434, %v4342
    %v4469 = vsel %vm4344, %v4468, %v4467
    %v4470 = vperm.slane %v3449, %v4284
    %v4471 = vperm.slane %v3464, %v4286
    %v4472 = vsel %vm4288, %v4471, %v4470
    %v4473 = vperm.slane %v3479, %v4290
    %v4474 = vsel %vm4292, %v4473, %v4472
    %v4475 = vperm.slane %v3494, %v4294
    %v4476 = vsel %vm4296, %v4475, %v4474
    %v4477 = vperm.slane %v3509, %v4298
    %v4478 = vsel %vm4300, %v4477, %v4476
    %v4479 = vperm.slane %v3524, %v4302
    %v4480 = vsel %vm4304, %v4479, %v4478
    %v4481 = vperm.slane %v3539, %v4306
    %v4482 = vsel %vm4308, %v4481, %v4480
    %v4483 = vperm.slane %v3554, %v4310
    %v4484 = vsel %vm4312, %v4483, %v4482
    %v4485 = vperm.slane %v3569, %v4314
    %v4486 = vsel %vm4316, %v4485, %v4484
    %v4487 = vperm.slane %v3584, %v4318
    %v4488 = vsel %vm4320, %v4487, %v4486
    %v4489 = vperm.slane %v3599, %v4322
    %v4490 = vsel %vm4324, %v4489, %v4488
    %v4491 = vperm.slane %v3614, %v4326
    %v4492 = vsel %vm4328, %v4491, %v4490
    %v4493 = vperm.slane %v3629, %v4330
    %v4494 = vsel %vm4332, %v4493, %v4492
    %v4495 = vperm.slane %v3644, %v4334
    %v4496 = vsel %vm4336, %v4495, %v4494
    %v4497 = vperm.slane %v3659, %v4338
    %v4498 = vsel %vm4340, %v4497, %v4496
    %v4499 = vperm.slane %v3674, %v4342
    %v4500 = vsel %vm4344, %v4499, %v4498
    %v4501 = vperm.slane %v3689, %v4284
    %v4502 = vperm.slane %v3704, %v4286
    %v4503 = vsel %vm4288, %v4502, %v4501
    %v4504 = vperm.slane %v3719, %v4290
    %v4505 = vsel %vm4292, %v4504, %v4503
    %v4506 = vperm.slane %v3734, %v4294
    %v4507 = vsel %vm4296, %v4506, %v4505
    %v4508 = vperm.slane %v3749, %v4298
    %v4509 = vsel %vm4300, %v4508, %v4507
    %v4510 = vperm.slane %v3764, %v4302
    %v4511 = vsel %vm4304, %v4510, %v4509
    %v4512 = vperm.slane %v3779, %v4306
    %v4513 = vsel %vm4308, %v4512, %v4511
    %v4514 = vperm.slane %v3794, %v4310
    %v4515 = vsel %vm4312, %v4514, %v4513
    %v4516 = vperm.slane %v3809, %v4314
    %v4517 = vsel %vm4316, %v4516, %v4515
    %v4518 = vperm.slane %v3824, %v4318
    %v4519 = vsel %vm4320, %v4518, %v4517
    %v4520 = vperm.slane %v3839, %v4322
    %v4521 = vsel %vm4324, %v4520, %v4519
    %v4522 = vperm.slane %v3854, %v4326
    %v4523 = vsel %vm4328, %v4522, %v4521
    %v4524 = vperm.slane %v3869, %v4330
    %v4525 = vsel %vm4332, %v4524, %v4523
    %v4526 = vperm.slane %v3884, %v4334
    %v4527 = vsel %vm4336, %v4526, %v4525
    %v4528 = vperm.slane %v3899, %v4338
    %v4529 = vsel %vm4340, %v4528, %v4527
    %v4530 = vperm.slane %v3914, %v4342
    %v4531 = vsel %vm4344, %v4530, %v4529
    %v4532 = vperm.slane %v3929, %v4284
    %v4533 = vperm.slane %v3944, %v4286
    %v4534 = vsel %vm4288, %v4533, %v4532
    %v4535 = vperm.slane %v3959, %v4290
    %v4536 = vsel %vm4292, %v4535, %v4534
    %v4537 = vperm.slane %v3974, %v4294
    %v4538 = vsel %vm4296, %v4537, %v4536
    %v4539 = vperm.slane %v3989, %v4298
    %v4540 = vsel %vm4300, %v4539, %v4538
    %v4541 = vperm.slane %v4004, %v4302
    %v4542 = vsel %vm4304, %v4541, %v4540
    %v4543 = vperm.slane %v4019, %v4306
    %v4544 = vsel %vm4308, %v4543, %v4542
    %v4545 = vperm.slane %v4034, %v4310
    %v4546 = vsel %vm4312, %v4545, %v4544
    %v4547 = vperm.slane %v4049, %v4314
    %v4548 = vsel %vm4316, %v4547, %v4546
    %v4549 = vperm.slane %v4064, %v4318
    %v4550 = vsel %vm4320, %v4549, %v4548
    %v4551 = vperm.slane %v4079, %v4322
    %v4552 = vsel %vm4324, %v4551, %v4550
    %v4553 = vperm.slane %v4094, %v4326
    %v4554 = vsel %vm4328, %v4553, %v4552
    %v4555 = vperm.slane %v4109, %v4330
    %v4556 = vsel %vm4332, %v4555, %v4554
    %v4557 = vperm.slane %v4124, %v4334
    %v4558 = vsel %vm4336, %v4557, %v4556
    %v4559 = vperm.slane %v4139, %v4338
    %v4560 = vsel %vm4340, %v4559, %v4558
    %v4561 = vperm.slane %v4154, %v4342
    %v4562 = vsel %vm4344, %v4561, %v4560
    %vm4563 = vcmask 1041409
    %v4564 = vsel %vm4563, %v4376, %v4345
    %vm4565 = vcmask 1042434
    %v4566 = vsel %vm4565, %v4407, %v4564
    %vm4567 = vcmask 1043459
    %v4568 = vsel %vm4567, %v4438, %v4566
    %vm4569 = vcmask 1044484
    %v4570 = vsel %vm4569, %v4469, %v4568
    %vm4571 = vcmask 1045509
    %v4572 = vsel %vm4571, %v4500, %v4570
    %vm4573 = vcmask 1046534
    %v4574 = vsel %vm4573, %v4531, %v4572
    %vm4575 = vcmask 1047559
    %v4576 = vsel %vm4575, %v4562, %v4574
    %4578 = vst [vmem:[#allocation3] sm:$0xff] %v4576
    // Predicated region
    $region22: #{tpu_custom_call.1} parent=1 // pred_check
      _
    $region23: #{tpu_custom_call.1} parent=1 // pred_check_branch
      %4580 = sbr.rel (0) target = $region25
    $region24: #{tpu_custom_call.1} parent=1 // pred_region
      %4582 = vsyncadd [#allocation4], 0
      %s4584 = sshll.u32 [#allocation3], 4
      %s4585 = int_to_ptr.vmem [resolvable:$true] %s4584
      %s4586 = sshll.u32 %s5, 4
      %s4587 = int_to_ptr.hbm [resolvable:$true] %s4586
      %4589 = dma.vmem_to_hbm [thread:$0]  %s4585, 128, %s4587, [#allocation4]
    $region25: #{tpu_custom_call.1} parent=1 // pred_fallthru
      _
    // Predicated region
    $region26: #{tpu_custom_call.1} parent=1 // pred_check
      _
    $region27: #{tpu_custom_call.1} parent=1 // pred_check_branch
      %4591 = sbr.rel (0) target = $region29
    $region28: #{tpu_custom_call.1} parent=1 // pred_region
      %4593 = dma.done [#allocation4], 128
    $region29: #{tpu_custom_call.1} parent=1 // pred_fallthru
      _
    %4594 = vsyncpa [#allocation4], 1

</llo_original>
